<compile_context>
chip_gen: v6e
topology: v6e:2x2x1
jax: 0.10.0
libtpu: 0.0.40
codegen_flags: <defaults>
</compile_context>

<pallas_src>
import functools

import jax
import jax.numpy as jnp
from jax.experimental import pallas as pl
from jax.experimental.pallas import tpu as pltpu


# ------------------------------ Fused kernel ---------------------------------

def make_lstm_kernel(num_layers, seq_len, batch, hidden):
    """Builds a kernel: (x, [wih,whh,b]*L, wfc, bfc) -> (B, O)."""
    S, B, H = seq_len, batch, hidden
    G = 4 * H

    def kernel(*refs):
        x_ref = refs[0]                               # (B, S, D) batch-major
        layer_refs = refs[1:1 + 3 * num_layers]       # [wih_t, whh_t, bias] * L
        wfc_ref = refs[1 + 3 * num_layers]            # (H, O)
        bfc_ref = refs[2 + 3 * num_layers]            # (1, O)
        out_ref = refs[3 + 3 * num_layers]            # (B, O)
        gx_ref = refs[4 + 3 * num_layers]             # (S, B, 4H) scratch
        seq_ref = refs[5 + 3 * num_layers]            # (S, B, H)  scratch

        h = None
        for l in range(num_layers):
            wih = layer_refs[3 * l + 0][...]          # (D_in, 4H)
            whh = layer_refs[3 * l + 1][...]          # (H,    4H)
            b = layer_refs[3 * l + 2][...]            # (1,    4H)

            # ---- Setup phase (off the serial critical path) ----------------
            # ONE batched input projection per layer, staged time-major in
            # VMEM so the recurrence reads a single aligned (B, 4H) tile/step.
            if l == 0:
                xin = x_ref[...]                      # (B, S, D)
                d_in = xin.shape[-1]
                gx_flat = jnp.dot(xin.reshape(B * S, d_in), wih,
                                  preferred_element_type=jnp.float32) + b
                gx_b = gx_flat.reshape(B, S, G)       # batch-major result
                for t in range(S):                    # reorder -> time-major
                    gx_ref[t] = gx_b[:, t, :]
            else:
                xin = seq_ref[...].reshape(S * B, H)  # already time-major
                gx_flat = jnp.dot(xin, wih,
                                  preferred_element_type=jnp.float32) + b
                gx_ref[...] = gx_flat.reshape(S, B, G)

            # ---- Recurrence (serial path): h @ W_hh + gates ----------------
            h = jnp.zeros((B, H), jnp.float32)
            c = jnp.zeros((B, H), jnp.float32)
            for t in range(S):
                gates = gx_ref[t] + jnp.dot(
                    h, whh, preferred_element_type=jnp.float32)   # (B, 4H)
                # 2 full-vreg tanh pushes cover all 4 gates
                # (sigmoid(x) = 0.5*tanh(0.5x) + 0.5, exact).
                t_half = jnp.tanh(0.5 * gates)
                t_full = jnp.tanh(gates)
                i_g = 0.5 * t_half[:, 0 * H:1 * H] + 0.5
                f_g = 0.5 * t_half[:, 1 * H:2 * H] + 0.5
                o_g = 0.5 * t_half[:, 3 * H:4 * H] + 0.5
                g_g = t_full[:, 2 * H:3 * H]
                c = f_g * c + i_g * g_g
                h = o_g * jnp.tanh(c)
                seq_ref[t] = h                        # stage for next layer
            # TODO(synk): inter-layer dropout (p=0.2) omitted (inference).

        # Fused FC head on the last layer's final hidden state.
        out_ref[...] = (jnp.dot(h, wfc_ref[...],
                                preferred_element_type=jnp.float32)
                        + bfc_ref[...])

    return kernel


def _full_spec(shape):
    """Whole-array block (no tiling) for grid=(1,)."""
    if len(shape) == 2:
        return pl.BlockSpec(shape, lambda i: (0, 0))
    if len(shape) == 3:
        return pl.BlockSpec(shape, lambda i: (0, 0, 0))
    raise ValueError(f"unexpected rank for {shape}")


@functools.partial(jax.jit)
def lstm_model_forward(x, params):
    """x: (batch, seq, input_size) -> (batch, output_size). Matches LSTM.forward."""
    x = x.astype(jnp.float32)                                   # (B, S, D)
    B, S, _ = x.shape
    layers = params["layers"]
    num_layers = len(layers)
    H = layers[0]["whh_t"].shape[0]
    O = params["fc_w_t"].shape[1]

    # Pad batch up to a multiple of 8 (f32 sublane count) for full occupancy.
    B_pad = max(8, ((B + 7) // 8) * 8)
    x_p = jnp.pad(x, ((0, B_pad - B), (0, 0), (0, 0)))

    inputs = [x_p]
    for layer in layers:
        inputs += [layer["wih_t"], layer["whh_t"], layer["bias"]]
    inputs += [params["fc_w_t"], params["fc_b"]]

    kernel = make_lstm_kernel(num_layers, S, B_pad, H)
    out = pl.pallas_call(
        kernel,
        out_shape=jax.ShapeDtypeStruct((B_pad, O), jnp.float32),
        grid_spec=pltpu.PrefetchScalarGridSpec(
            num_scalar_prefetch=0,
            grid=(1,),
            in_specs=[_full_spec(a.shape) for a in inputs],
            out_specs=_full_spec((B_pad, O)),
            scratch_shapes=[
                pltpu.VMEM((S, B_pad, 4 * H), jnp.float32),   # gx staging
                pltpu.VMEM((S, B_pad, H), jnp.float32),       # layer outputs
            ],
        ),
        compiler_params=pltpu.CompilerParams(
            dimension_semantics=("arbitrary",)),
    )(*inputs)
    return out[:B]


# ------------------------------ Parameter init --------------------------------

def init_params(key, input_size, hidden_size, num_layers, output_size):
    """PyTorch-style init: U(-1/sqrt(H), 1/sqrt(H)); fc.bias = 12."""
    params = {"layers": []}
    bound = 1.0 / jnp.sqrt(jnp.float32(hidden_size))
    for l in range(num_layers):
        d_in = input_size if l == 0 else hidden_size
        key, k1, k2, k3, k4 = jax.random.split(key, 5)
        w_ih = jax.random.uniform(k1, (4 * hidden_size, d_in), jnp.float32, -bound, bound)
        w_hh = jax.random.uniform(k2, (4 * hidden_size, hidden_size), jnp.float32, -bound, bound)
        b_ih = jax.random.uniform(k3, (4 * hidden_size,), jnp.float32, -bound, bound)
        b_hh = jax.random.uniform(k4, (4 * hidden_size,), jnp.float32, -bound, bound)
        params["layers"].append(
            dict(wih_t=w_ih.T,                                   # (D_in, 4H)
                 whh_t=w_hh.T,                                   # (H,    4H)
                 bias=(b_ih + b_hh).reshape(1, 4 * hidden_size)))
    key, k5 = jax.random.split(key)
    w_fc = jax.random.uniform(k5, (output_size, hidden_size), jnp.float32, -bound, bound)
    params["fc_w_t"] = w_fc.T                                    # (H, O)
    params["fc_b"] = jnp.full((1, output_size), 12.0, jnp.float32)
    return params


# ---------------------------- Pure-JAX reference ------------------------------

def lstm_model_reference(x, params):
    xt = jnp.transpose(x, (1, 0, 2)).astype(jnp.float32)
    seq = xt
    for layer in params["layers"]:
        H = layer["whh_t"].shape[0]
        B = seq.shape[1]

        def step(carry, x_t, layer=layer, H=H):
            h, c = carry
            gates = x_t @ layer["wih_t"] + h @ layer["whh_t"] + layer["bias"]
            i = jax.nn.sigmoid(gates[:, 0 * H:1 * H])
            f = jax.nn.sigmoid(gates[:, 1 * H:2 * H])
            g = jnp.tanh(gates[:, 2 * H:3 * H])
            o = jax.nn.sigmoid(gates[:, 3 * H:4 * H])
            c = f * c + i * g
            h = o * jnp.tanh(c)
            return (h, c), h

        init = (jnp.zeros((B, H), jnp.float32), jnp.zeros((B, H), jnp.float32))
        _, seq = jax.lax.scan(step, init, seq)
    h_last = seq[-1]
    return h_last @ params["fc_w_t"] + params["fc_b"]


# ----------------------------------- Main --------------------------------------

if __name__ == "__main__":
    batch, seq_len = 4, 8
    input_size, hidden_size, num_layers, output_size = 16, 32, 2, 8

    key = jax.random.PRNGKey(0)
    kx, kp = jax.random.split(key)
    x = jax.random.normal(kx, (batch, seq_len, input_size), jnp.float32)
    params = init_params(kp, input_size, hidden_size, num_layers, output_size)

    out = lstm_model_forward(x, params)
    out = jax.block_until_ready(out)

    ref = lstm_model_reference(x, params)
    assert out.shape == (batch, output_size), out.shape
    assert jnp.allclose(out, ref, rtol=1e-5, atol=1e-4), (
        float(jnp.max(jnp.abs(out - ref))))

    print("KERNEL_OK")
</pallas_src>

<mosaic_0001>
module attributes {stable_mosaic.version = 11 : i64} {
  func.func @kernel(%arg0: i32, %arg1: memref<8x8x16xf32, #tpu.memory_space<vmem>>, %arg2: memref<16x128xf32, #tpu.memory_space<vmem>>, %arg3: memref<32x128xf32, #tpu.memory_space<vmem>>, %arg4: memref<1x128xf32, #tpu.memory_space<vmem>>, %arg5: memref<32x128xf32, #tpu.memory_space<vmem>>, %arg6: memref<32x128xf32, #tpu.memory_space<vmem>>, %arg7: memref<1x128xf32, #tpu.memory_space<vmem>>, %arg8: memref<32x8xf32, #tpu.memory_space<vmem>>, %arg9: memref<1x8xf32, #tpu.memory_space<vmem>>, %arg10: memref<8x8xf32, #tpu.memory_space<vmem>>, %arg11: memref<8x8x128xf32, #tpu.memory_space<vmem>>, %arg12: memref<8x8x32xf32, #tpu.memory_space<vmem>>) attributes {dimension_semantics = [#tpu.dimension_semantics<arbitrary>], iteration_bounds = array<i64: 1>, scalar_prefetch = 0 : i64, scratch_operands = 2 : i64, tpu.core_type = #tpu.core_type<tc>, window_params = [{pipeline_mode = #tpu.pipeline_mode<synchronous>, transform_indices = @transform_0, window_bounds = array<i64: 8, 8, 16>}, {pipeline_mode = #tpu.pipeline_mode<synchronous>, transform_indices = @transform_1, window_bounds = array<i64: 16, 128>}, {pipeline_mode = #tpu.pipeline_mode<synchronous>, transform_indices = @transform_2, window_bounds = array<i64: 32, 128>}, {pipeline_mode = #tpu.pipeline_mode<synchronous>, transform_indices = @transform_3, window_bounds = array<i64: 1, 128>}, {pipeline_mode = #tpu.pipeline_mode<synchronous>, transform_indices = @transform_4, window_bounds = array<i64: 32, 128>}, {pipeline_mode = #tpu.pipeline_mode<synchronous>, transform_indices = @transform_5, window_bounds = array<i64: 32, 128>}, {pipeline_mode = #tpu.pipeline_mode<synchronous>, transform_indices = @transform_6, window_bounds = array<i64: 1, 128>}, {pipeline_mode = #tpu.pipeline_mode<synchronous>, transform_indices = @transform_7, window_bounds = array<i64: 32, 8>}, {pipeline_mode = #tpu.pipeline_mode<synchronous>, transform_indices = @transform_8, window_bounds = array<i64: 1, 8>}, {pipeline_mode = #tpu.pipeline_mode<synchronous>, transform_indices = @transform_9, window_bounds = array<i64: 8, 8>}]} {
    %c0 = arith.constant 0 : index
    %c0_0 = arith.constant 0 : index
    %0 = vector.load %arg2[%c0, %c0_0] : memref<16x128xf32, #tpu.memory_space<vmem>>, vector<16x128xf32>
    %c0_1 = arith.constant 0 : index
    %c0_2 = arith.constant 0 : index
    %1 = vector.load %arg3[%c0_1, %c0_2] : memref<32x128xf32, #tpu.memory_space<vmem>>, vector<32x128xf32>
    %c0_3 = arith.constant 0 : index
    %c0_4 = arith.constant 0 : index
    %2 = vector.load %arg4[%c0_3, %c0_4] : memref<1x128xf32, #tpu.memory_space<vmem>>, vector<1x128xf32>
    %c0_5 = arith.constant 0 : index
    %c0_6 = arith.constant 0 : index
    %c0_7 = arith.constant 0 : index
    %3 = vector.load %arg1[%c0_5, %c0_6, %c0_7] : memref<8x8x16xf32, #tpu.memory_space<vmem>>, vector<8x8x16xf32>
    %4 = vector.shape_cast %3 : vector<8x8x16xf32> to vector<64x16xf32>
    %cst = arith.constant dense<0.000000e+00> : vector<64x128xf32>
    %5 = tpu.matmul %4, %0, %cst {dimension_numbers = #tpu.dot_dimension_numbers<[1], [0], [0], [1], [0, 0, 1, 1], [], []>} : vector<64x16xf32>, vector<16x128xf32>, vector<64x128xf32> -> vector<64x128xf32>
    %6 = vector.broadcast %2 : vector<1x128xf32> to vector<64x128xf32>
    %7 = arith.addf %5, %6 : vector<64x128xf32>
    %8 = vector.shape_cast %7 : vector<64x128xf32> to vector<8x8x128xf32>
    %9 = vector.extract_strided_slice %8 {offsets = [0, 0, 0], sizes = [8, 1, 128], strides = [1, 1, 1]} : vector<8x8x128xf32> to vector<8x1x128xf32>
    %10 = vector.shape_cast %9 : vector<8x1x128xf32> to vector<8x128xf32>
    %c0_8 = arith.constant 0 : index
    %c0_9 = arith.constant 0 : index
    %c0_10 = arith.constant 0 : index
    %11 = vector.load %arg11[%c0_8, %c0_9, %c0_10] : memref<8x8x128xf32, #tpu.memory_space<vmem>>, vector<1x8x128xf32>
    %12 = vector.shape_cast %11 : vector<1x8x128xf32> to vector<8x128xf32>
    %13 = vector.shape_cast %10 : vector<8x128xf32> to vector<1x8x128xf32>
    tpu.vector_store %arg11[%c0_8, %c0_9, %c0_10], %13 {strides = array<i32>} : memref<8x8x128xf32, #tpu.memory_space<vmem>>, vector<1x8x128xf32>,
    %14 = vector.extract_strided_slice %8 {offsets = [0, 1, 0], sizes = [8, 1, 128], strides = [1, 1, 1]} : vector<8x8x128xf32> to vector<8x1x128xf32>
    %15 = vector.shape_cast %14 : vector<8x1x128xf32> to vector<8x128xf32>
    %c1 = arith.constant 1 : index
    %c0_11 = arith.constant 0 : index
    %c0_12 = arith.constant 0 : index
    %16 = vector.load %arg11[%c1, %c0_11, %c0_12] : memref<8x8x128xf32, #tpu.memory_space<vmem>>, vector<1x8x128xf32>
    %17 = vector.shape_cast %16 : vector<1x8x128xf32> to vector<8x128xf32>
    %18 = vector.shape_cast %15 : vector<8x128xf32> to vector<1x8x128xf32>
    tpu.vector_store %arg11[%c1, %c0_11, %c0_12], %18 {strides = array<i32>} : memref<8x8x128xf32, #tpu.memory_space<vmem>>, vector<1x8x128xf32>,
    %19 = vector.extract_strided_slice %8 {offsets = [0, 2, 0], sizes = [8, 1, 128], strides = [1, 1, 1]} : vector<8x8x128xf32> to vector<8x1x128xf32>
    %20 = vector.shape_cast %19 : vector<8x1x128xf32> to vector<8x128xf32>
    %c2 = arith.constant 2 : index
    %c0_13 = arith.constant 0 : index
    %c0_14 = arith.constant 0 : index
    %21 = vector.load %arg11[%c2, %c0_13, %c0_14] : memref<8x8x128xf32, #tpu.memory_space<vmem>>, vector<1x8x128xf32>
    %22 = vector.shape_cast %21 : vector<1x8x128xf32> to vector<8x128xf32>
    %23 = vector.shape_cast %20 : vector<8x128xf32> to vector<1x8x128xf32>
    tpu.vector_store %arg11[%c2, %c0_13, %c0_14], %23 {strides = array<i32>} : memref<8x8x128xf32, #tpu.memory_space<vmem>>, vector<1x8x128xf32>,
    %24 = vector.extract_strided_slice %8 {offsets = [0, 3, 0], sizes = [8, 1, 128], strides = [1, 1, 1]} : vector<8x8x128xf32> to vector<8x1x128xf32>
    %25 = vector.shape_cast %24 : vector<8x1x128xf32> to vector<8x128xf32>
    %c3 = arith.constant 3 : index
    %c0_15 = arith.constant 0 : index
    %c0_16 = arith.constant 0 : index
    %26 = vector.load %arg11[%c3, %c0_15, %c0_16] : memref<8x8x128xf32, #tpu.memory_space<vmem>>, vector<1x8x128xf32>
    %27 = vector.shape_cast %26 : vector<1x8x128xf32> to vector<8x128xf32>
    %28 = vector.shape_cast %25 : vector<8x128xf32> to vector<1x8x128xf32>
    tpu.vector_store %arg11[%c3, %c0_15, %c0_16], %28 {strides = array<i32>} : memref<8x8x128xf32, #tpu.memory_space<vmem>>, vector<1x8x128xf32>,
    %29 = vector.extract_strided_slice %8 {offsets = [0, 4, 0], sizes = [8, 1, 128], strides = [1, 1, 1]} : vector<8x8x128xf32> to vector<8x1x128xf32>
    %30 = vector.shape_cast %29 : vector<8x1x128xf32> to vector<8x128xf32>
    %c4 = arith.constant 4 : index
    %c0_17 = arith.constant 0 : index
    %c0_18 = arith.constant 0 : index
    %31 = vector.load %arg11[%c4, %c0_17, %c0_18] : memref<8x8x128xf32, #tpu.memory_space<vmem>>, vector<1x8x128xf32>
    %32 = vector.shape_cast %31 : vector<1x8x128xf32> to vector<8x128xf32>
    %33 = vector.shape_cast %30 : vector<8x128xf32> to vector<1x8x128xf32>
    tpu.vector_store %arg11[%c4, %c0_17, %c0_18], %33 {strides = array<i32>} : memref<8x8x128xf32, #tpu.memory_space<vmem>>, vector<1x8x128xf32>,
    %34 = vector.extract_strided_slice %8 {offsets = [0, 5, 0], sizes = [8, 1, 128], strides = [1, 1, 1]} : vector<8x8x128xf32> to vector<8x1x128xf32>
    %35 = vector.shape_cast %34 : vector<8x1x128xf32> to vector<8x128xf32>
    %c5 = arith.constant 5 : index
    %c0_19 = arith.constant 0 : index
    %c0_20 = arith.constant 0 : index
    %36 = vector.load %arg11[%c5, %c0_19, %c0_20] : memref<8x8x128xf32, #tpu.memory_space<vmem>>, vector<1x8x128xf32>
    %37 = vector.shape_cast %36 : vector<1x8x128xf32> to vector<8x128xf32>
    %38 = vector.shape_cast %35 : vector<8x128xf32> to vector<1x8x128xf32>
    tpu.vector_store %arg11[%c5, %c0_19, %c0_20], %38 {strides = array<i32>} : memref<8x8x128xf32, #tpu.memory_space<vmem>>, vector<1x8x128xf32>,
    %39 = vector.extract_strided_slice %8 {offsets = [0, 6, 0], sizes = [8, 1, 128], strides = [1, 1, 1]} : vector<8x8x128xf32> to vector<8x1x128xf32>
    %40 = vector.shape_cast %39 : vector<8x1x128xf32> to vector<8x128xf32>
    %c6 = arith.constant 6 : index
    %c0_21 = arith.constant 0 : index
    %c0_22 = arith.constant 0 : index
    %41 = vector.load %arg11[%c6, %c0_21, %c0_22] : memref<8x8x128xf32, #tpu.memory_space<vmem>>, vector<1x8x128xf32>
    %42 = vector.shape_cast %41 : vector<1x8x128xf32> to vector<8x128xf32>
    %43 = vector.shape_cast %40 : vector<8x128xf32> to vector<1x8x128xf32>
    tpu.vector_store %arg11[%c6, %c0_21, %c0_22], %43 {strides = array<i32>} : memref<8x8x128xf32, #tpu.memory_space<vmem>>, vector<1x8x128xf32>,
    %44 = vector.extract_strided_slice %8 {offsets = [0, 7, 0], sizes = [8, 1, 128], strides = [1, 1, 1]} : vector<8x8x128xf32> to vector<8x1x128xf32>
    %45 = vector.shape_cast %44 : vector<8x1x128xf32> to vector<8x128xf32>
    %c7 = arith.constant 7 : index
    %c0_23 = arith.constant 0 : index
    %c0_24 = arith.constant 0 : index
    %46 = vector.load %arg11[%c7, %c0_23, %c0_24] : memref<8x8x128xf32, #tpu.memory_space<vmem>>, vector<1x8x128xf32>
    %47 = vector.shape_cast %46 : vector<1x8x128xf32> to vector<8x128xf32>
    %48 = vector.shape_cast %45 : vector<8x128xf32> to vector<1x8x128xf32>
    tpu.vector_store %arg11[%c7, %c0_23, %c0_24], %48 {strides = array<i32>} : memref<8x8x128xf32, #tpu.memory_space<vmem>>, vector<1x8x128xf32>,
    %cst_25 = arith.constant 0.000000e+00 : f32
    %49 = vector.broadcast %cst_25 : f32 to vector<8x32xf32>
    %cst_26 = arith.constant 0.000000e+00 : f32
    %50 = vector.broadcast %cst_26 : f32 to vector<8x32xf32>
    %c0_27 = arith.constant 0 : index
    %c0_28 = arith.constant 0 : index
    %c0_29 = arith.constant 0 : index
    %51 = vector.load %arg11[%c0_27, %c0_28, %c0_29] : memref<8x8x128xf32, #tpu.memory_space<vmem>>, vector<1x8x128xf32>
    %52 = vector.shape_cast %51 : vector<1x8x128xf32> to vector<8x128xf32>
    %cst_30 = arith.constant dense<0.000000e+00> : vector<8x128xf32>
    %53 = tpu.matmul %49, %1, %cst_30 {dimension_numbers = #tpu.dot_dimension_numbers<[1], [0], [0], [1], [0, 0, 1, 1], [], []>} : vector<8x32xf32>, vector<32x128xf32>, vector<8x128xf32> -> vector<8x128xf32>
    %54 = arith.addf %52, %53 : vector<8x128xf32>
    %cst_31 = arith.constant 5.000000e-01 : f32
    %55 = vector.broadcast %cst_31 : f32 to vector<8x128xf32>
    %56 = arith.mulf %55, %54 : vector<8x128xf32>
    %57 = math.tanh %56 : vector<8x128xf32>
    %58 = math.tanh %54 : vector<8x128xf32>
    %59 = vector.extract_strided_slice %57 {offsets = [0, 0], sizes = [8, 32], strides = [1, 1]} : vector<8x128xf32> to vector<8x32xf32>
    %cst_32 = arith.constant 5.000000e-01 : f32
    %60 = vector.broadcast %cst_32 : f32 to vector<8x32xf32>
    %61 = arith.mulf %60, %59 : vector<8x32xf32>
    %cst_33 = arith.constant 5.000000e-01 : f32
    %62 = vector.broadcast %cst_33 : f32 to vector<8x32xf32>
    %63 = arith.addf %61, %62 : vector<8x32xf32>
    %64 = vector.extract_strided_slice %57 {offsets = [0, 32], sizes = [8, 32], strides = [1, 1]} : vector<8x128xf32> to vector<8x32xf32>
    %cst_34 = arith.constant 5.000000e-01 : f32
    %65 = vector.broadcast %cst_34 : f32 to vector<8x32xf32>
    %66 = arith.mulf %65, %64 : vector<8x32xf32>
    %cst_35 = arith.constant 5.000000e-01 : f32
    %67 = vector.broadcast %cst_35 : f32 to vector<8x32xf32>
    %68 = arith.addf %66, %67 : vector<8x32xf32>
    %69 = vector.extract_strided_slice %57 {offsets = [0, 96], sizes = [8, 32], strides = [1, 1]} : vector<8x128xf32> to vector<8x32xf32>
    %cst_36 = arith.constant 5.000000e-01 : f32
    %70 = vector.broadcast %cst_36 : f32 to vector<8x32xf32>
    %71 = arith.mulf %70, %69 : vector<8x32xf32>
    %cst_37 = arith.constant 5.000000e-01 : f32
    %72 = vector.broadcast %cst_37 : f32 to vector<8x32xf32>
    %73 = arith.addf %71, %72 : vector<8x32xf32>
    %74 = vector.extract_strided_slice %58 {offsets = [0, 64], sizes = [8, 32], strides = [1, 1]} : vector<8x128xf32> to vector<8x32xf32>
    %75 = arith.mulf %68, %50 : vector<8x32xf32>
    %76 = arith.mulf %63, %74 : vector<8x32xf32>
    %77 = arith.addf %75, %76 : vector<8x32xf32>
    %78 = math.tanh %77 : vector<8x32xf32>
    %79 = arith.mulf %73, %78 : vector<8x32xf32>
    %c0_38 = arith.constant 0 : index
    %c0_39 = arith.constant 0 : index
    %c0_40 = arith.constant 0 : index
    %80 = vector.load %arg12[%c0_38, %c0_39, %c0_40] : memref<8x8x32xf32, #tpu.memory_space<vmem>>, vector<1x8x32xf32>
    %81 = vector.shape_cast %80 : vector<1x8x32xf32> to vector<8x32xf32>
    %82 = vector.shape_cast %79 : vector<8x32xf32> to vector<1x8x32xf32>
    tpu.vector_store %arg12[%c0_38, %c0_39, %c0_40], %82 {strides = array<i32>} : memref<8x8x32xf32, #tpu.memory_space<vmem>>, vector<1x8x32xf32>,
    %c1_41 = arith.constant 1 : index
    %c0_42 = arith.constant 0 : index
    %c0_43 = arith.constant 0 : index
    %83 = vector.load %arg11[%c1_41, %c0_42, %c0_43] : memref<8x8x128xf32, #tpu.memory_space<vmem>>, vector<1x8x128xf32>
    %84 = vector.shape_cast %83 : vector<1x8x128xf32> to vector<8x128xf32>
    %cst_44 = arith.constant dense<0.000000e+00> : vector<8x128xf32>
    %85 = tpu.matmul %79, %1, %cst_44 {dimension_numbers = #tpu.dot_dimension_numbers<[1], [0], [0], [1], [0, 0, 1, 1], [], []>} : vector<8x32xf32>, vector<32x128xf32>, vector<8x128xf32> -> vector<8x128xf32>
    %86 = arith.addf %84, %85 : vector<8x128xf32>
    %cst_45 = arith.constant 5.000000e-01 : f32
    %87 = vector.broadcast %cst_45 : f32 to vector<8x128xf32>
    %88 = arith.mulf %87, %86 : vector<8x128xf32>
    %89 = math.tanh %88 : vector<8x128xf32>
    %90 = math.tanh %86 : vector<8x128xf32>
    %91 = vector.extract_strided_slice %89 {offsets = [0, 0], sizes = [8, 32], strides = [1, 1]} : vector<8x128xf32> to vector<8x32xf32>
    %cst_46 = arith.constant 5.000000e-01 : f32
    %92 = vector.broadcast %cst_46 : f32 to vector<8x32xf32>
    %93 = arith.mulf %92, %91 : vector<8x32xf32>
    %cst_47 = arith.constant 5.000000e-01 : f32
    %94 = vector.broadcast %cst_47 : f32 to vector<8x32xf32>
    %95 = arith.addf %93, %94 : vector<8x32xf32>
    %96 = vector.extract_strided_slice %89 {offsets = [0, 32], sizes = [8, 32], strides = [1, 1]} : vector<8x128xf32> to vector<8x32xf32>
    %cst_48 = arith.constant 5.000000e-01 : f32
    %97 = vector.broadcast %cst_48 : f32 to vector<8x32xf32>
    %98 = arith.mulf %97, %96 : vector<8x32xf32>
    %cst_49 = arith.constant 5.000000e-01 : f32
    %99 = vector.broadcast %cst_49 : f32 to vector<8x32xf32>
    %100 = arith.addf %98, %99 : vector<8x32xf32>
    %101 = vector.extract_strided_slice %89 {offsets = [0, 96], sizes = [8, 32], strides = [1, 1]} : vector<8x128xf32> to vector<8x32xf32>
    %cst_50 = arith.constant 5.000000e-01 : f32
    %102 = vector.broadcast %cst_50 : f32 to vector<8x32xf32>
    %103 = arith.mulf %102, %101 : vector<8x32xf32>
    %cst_51 = arith.constant 5.000000e-01 : f32
    %104 = vector.broadcast %cst_51 : f32 to vector<8x32xf32>
    %105 = arith.addf %103, %104 : vector<8x32xf32>
    %106 = vector.extract_strided_slice %90 {offsets = [0, 64], sizes = [8, 32], strides = [1, 1]} : vector<8x128xf32> to vector<8x32xf32>
    %107 = arith.mulf %100, %77 : vector<8x32xf32>
    %108 = arith.mulf %95, %106 : vector<8x32xf32>
    %109 = arith.addf %107, %108 : vector<8x32xf32>
    %110 = math.tanh %109 : vector<8x32xf32>
    %111 = arith.mulf %105, %110 : vector<8x32xf32>
    %c1_52 = arith.constant 1 : index
    %c0_53 = arith.constant 0 : index
    %c0_54 = arith.constant 0 : index
    %112 = vector.load %arg12[%c1_52, %c0_53, %c0_54] : memref<8x8x32xf32, #tpu.memory_space<vmem>>, vector<1x8x32xf32>
    %113 = vector.shape_cast %112 : vector<1x8x32xf32> to vector<8x32xf32>
    %114 = vector.shape_cast %111 : vector<8x32xf32> to vector<1x8x32xf32>
    tpu.vector_store %arg12[%c1_52, %c0_53, %c0_54], %114 {strides = array<i32>} : memref<8x8x32xf32, #tpu.memory_space<vmem>>, vector<1x8x32xf32>,
    %c2_55 = arith.constant 2 : index
    %c0_56 = arith.constant 0 : index
    %c0_57 = arith.constant 0 : index
    %115 = vector.load %arg11[%c2_55, %c0_56, %c0_57] : memref<8x8x128xf32, #tpu.memory_space<vmem>>, vector<1x8x128xf32>
    %116 = vector.shape_cast %115 : vector<1x8x128xf32> to vector<8x128xf32>
    %cst_58 = arith.constant dense<0.000000e+00> : vector<8x128xf32>
    %117 = tpu.matmul %111, %1, %cst_58 {dimension_numbers = #tpu.dot_dimension_numbers<[1], [0], [0], [1], [0, 0, 1, 1], [], []>} : vector<8x32xf32>, vector<32x128xf32>, vector<8x128xf32> -> vector<8x128xf32>
    %118 = arith.addf %116, %117 : vector<8x128xf32>
    %cst_59 = arith.constant 5.000000e-01 : f32
    %119 = vector.broadcast %cst_59 : f32 to vector<8x128xf32>
    %120 = arith.mulf %119, %118 : vector<8x128xf32>
    %121 = math.tanh %120 : vector<8x128xf32>
    %122 = math.tanh %118 : vector<8x128xf32>
    %123 = vector.extract_strided_slice %121 {offsets = [0, 0], sizes = [8, 32], strides = [1, 1]} : vector<8x128xf32> to vector<8x32xf32>
    %cst_60 = arith.constant 5.000000e-01 : f32
    %124 = vector.broadcast %cst_60 : f32 to vector<8x32xf32>
    %125 = arith.mulf %124, %123 : vector<8x32xf32>
    %cst_61 = arith.constant 5.000000e-01 : f32
    %126 = vector.broadcast %cst_61 : f32 to vector<8x32xf32>
    %127 = arith.addf %125, %126 : vector<8x32xf32>
    %128 = vector.extract_strided_slice %121 {offsets = [0, 32], sizes = [8, 32], strides = [1, 1]} : vector<8x128xf32> to vector<8x32xf32>
    %cst_62 = arith.constant 5.000000e-01 : f32
    %129 = vector.broadcast %cst_62 : f32 to vector<8x32xf32>
    %130 = arith.mulf %129, %128 : vector<8x32xf32>
    %cst_63 = arith.constant 5.000000e-01 : f32
    %131 = vector.broadcast %cst_63 : f32 to vector<8x32xf32>
    %132 = arith.addf %130, %131 : vector<8x32xf32>
    %133 = vector.extract_strided_slice %121 {offsets = [0, 96], sizes = [8, 32], strides = [1, 1]} : vector<8x128xf32> to vector<8x32xf32>
    %cst_64 = arith.constant 5.000000e-01 : f32
    %134 = vector.broadcast %cst_64 : f32 to vector<8x32xf32>
    %135 = arith.mulf %134, %133 : vector<8x32xf32>
    %cst_65 = arith.constant 5.000000e-01 : f32
    %136 = vector.broadcast %cst_65 : f32 to vector<8x32xf32>
    %137 = arith.addf %135, %136 : vector<8x32xf32>
    %138 = vector.extract_strided_slice %122 {offsets = [0, 64], sizes = [8, 32], strides = [1, 1]} : vector<8x128xf32> to vector<8x32xf32>
    %139 = arith.mulf %132, %109 : vector<8x32xf32>
    %140 = arith.mulf %127, %138 : vector<8x32xf32>
    %141 = arith.addf %139, %140 : vector<8x32xf32>
    %142 = math.tanh %141 : vector<8x32xf32>
    %143 = arith.mulf %137, %142 : vector<8x32xf32>
    %c2_66 = arith.constant 2 : index
    %c0_67 = arith.constant 0 : index
    %c0_68 = arith.constant 0 : index
    %144 = vector.load %arg12[%c2_66, %c0_67, %c0_68] : memref<8x8x32xf32, #tpu.memory_space<vmem>>, vector<1x8x32xf32>
    %145 = vector.shape_cast %144 : vector<1x8x32xf32> to vector<8x32xf32>
    %146 = vector.shape_cast %143 : vector<8x32xf32> to vector<1x8x32xf32>
    tpu.vector_store %arg12[%c2_66, %c0_67, %c0_68], %146 {strides = array<i32>} : memref<8x8x32xf32, #tpu.memory_space<vmem>>, vector<1x8x32xf32>,
    %c3_69 = arith.constant 3 : index
    %c0_70 = arith.constant 0 : index
    %c0_71 = arith.constant 0 : index
    %147 = vector.load %arg11[%c3_69, %c0_70, %c0_71] : memref<8x8x128xf32, #tpu.memory_space<vmem>>, vector<1x8x128xf32>
    %148 = vector.shape_cast %147 : vector<1x8x128xf32> to vector<8x128xf32>
    %cst_72 = arith.constant dense<0.000000e+00> : vector<8x128xf32>
    %149 = tpu.matmul %143, %1, %cst_72 {dimension_numbers = #tpu.dot_dimension_numbers<[1], [0], [0], [1], [0, 0, 1, 1], [], []>} : vector<8x32xf32>, vector<32x128xf32>, vector<8x128xf32> -> vector<8x128xf32>
    %150 = arith.addf %148, %149 : vector<8x128xf32>
    %cst_73 = arith.constant 5.000000e-01 : f32
    %151 = vector.broadcast %cst_73 : f32 to vector<8x128xf32>
    %152 = arith.mulf %151, %150 : vector<8x128xf32>
    %153 = math.tanh %152 : vector<8x128xf32>
    %154 = math.tanh %150 : vector<8x128xf32>
    %155 = vector.extract_strided_slice %153 {offsets = [0, 0], sizes = [8, 32], strides = [1, 1]} : vector<8x128xf32> to vector<8x32xf32>
    %cst_74 = arith.constant 5.000000e-01 : f32
    %156 = vector.broadcast %cst_74 : f32 to vector<8x32xf32>
    %157 = arith.mulf %156, %155 : vector<8x32xf32>
    %cst_75 = arith.constant 5.000000e-01 : f32
    %158 = vector.broadcast %cst_75 : f32 to vector<8x32xf32>
    %159 = arith.addf %157, %158 : vector<8x32xf32>
    %160 = vector.extract_strided_slice %153 {offsets = [0, 32], sizes = [8, 32], strides = [1, 1]} : vector<8x128xf32> to vector<8x32xf32>
    %cst_76 = arith.constant 5.000000e-01 : f32
    %161 = vector.broadcast %cst_76 : f32 to vector<8x32xf32>
    %162 = arith.mulf %161, %160 : vector<8x32xf32>
    %cst_77 = arith.constant 5.000000e-01 : f32
    %163 = vector.broadcast %cst_77 : f32 to vector<8x32xf32>
    %164 = arith.addf %162, %163 : vector<8x32xf32>
    %165 = vector.extract_strided_slice %153 {offsets = [0, 96], sizes = [8, 32], strides = [1, 1]} : vector<8x128xf32> to vector<8x32xf32>
    %cst_78 = arith.constant 5.000000e-01 : f32
    %166 = vector.broadcast %cst_78 : f32 to vector<8x32xf32>
    %167 = arith.mulf %166, %165 : vector<8x32xf32>
    %cst_79 = arith.constant 5.000000e-01 : f32
    %168 = vector.broadcast %cst_79 : f32 to vector<8x32xf32>
    %169 = arith.addf %167, %168 : vector<8x32xf32>
    %170 = vector.extract_strided_slice %154 {offsets = [0, 64], sizes = [8, 32], strides = [1, 1]} : vector<8x128xf32> to vector<8x32xf32>
    %171 = arith.mulf %164, %141 : vector<8x32xf32>
    %172 = arith.mulf %159, %170 : vector<8x32xf32>
    %173 = arith.addf %171, %172 : vector<8x32xf32>
    %174 = math.tanh %173 : vector<8x32xf32>
    %175 = arith.mulf %169, %174 : vector<8x32xf32>
    %c3_80 = arith.constant 3 : index
    %c0_81 = arith.constant 0 : index
    %c0_82 = arith.constant 0 : index
    %176 = vector.load %arg12[%c3_80, %c0_81, %c0_82] : memref<8x8x32xf32, #tpu.memory_space<vmem>>, vector<1x8x32xf32>
    %177 = vector.shape_cast %176 : vector<1x8x32xf32> to vector<8x32xf32>
    %178 = vector.shape_cast %175 : vector<8x32xf32> to vector<1x8x32xf32>
    tpu.vector_store %arg12[%c3_80, %c0_81, %c0_82], %178 {strides = array<i32>} : memref<8x8x32xf32, #tpu.memory_space<vmem>>, vector<1x8x32xf32>,
    %c4_83 = arith.constant 4 : index
    %c0_84 = arith.constant 0 : index
    %c0_85 = arith.constant 0 : index
    %179 = vector.load %arg11[%c4_83, %c0_84, %c0_85] : memref<8x8x128xf32, #tpu.memory_space<vmem>>, vector<1x8x128xf32>
    %180 = vector.shape_cast %179 : vector<1x8x128xf32> to vector<8x128xf32>
    %cst_86 = arith.constant dense<0.000000e+00> : vector<8x128xf32>
    %181 = tpu.matmul %175, %1, %cst_86 {dimension_numbers = #tpu.dot_dimension_numbers<[1], [0], [0], [1], [0, 0, 1, 1], [], []>} : vector<8x32xf32>, vector<32x128xf32>, vector<8x128xf32> -> vector<8x128xf32>
    %182 = arith.addf %180, %181 : vector<8x128xf32>
    %cst_87 = arith.constant 5.000000e-01 : f32
    %183 = vector.broadcast %cst_87 : f32 to vector<8x128xf32>
    %184 = arith.mulf %183, %182 : vector<8x128xf32>
    %185 = math.tanh %184 : vector<8x128xf32>
    %186 = math.tanh %182 : vector<8x128xf32>
    %187 = vector.extract_strided_slice %185 {offsets = [0, 0], sizes = [8, 32], strides = [1, 1]} : vector<8x128xf32> to vector<8x32xf32>
    %cst_88 = arith.constant 5.000000e-01 : f32
    %188 = vector.broadcast %cst_88 : f32 to vector<8x32xf32>
    %189 = arith.mulf %188, %187 : vector<8x32xf32>
    %cst_89 = arith.constant 5.000000e-01 : f32
    %190 = vector.broadcast %cst_89 : f32 to vector<8x32xf32>
    %191 = arith.addf %189, %190 : vector<8x32xf32>
    %192 = vector.extract_strided_slice %185 {offsets = [0, 32], sizes = [8, 32], strides = [1, 1]} : vector<8x128xf32> to vector<8x32xf32>
    %cst_90 = arith.constant 5.000000e-01 : f32
    %193 = vector.broadcast %cst_90 : f32 to vector<8x32xf32>
    %194 = arith.mulf %193, %192 : vector<8x32xf32>
    %cst_91 = arith.constant 5.000000e-01 : f32
    %195 = vector.broadcast %cst_91 : f32 to vector<8x32xf32>
    %196 = arith.addf %194, %195 : vector<8x32xf32>
    %197 = vector.extract_strided_slice %185 {offsets = [0, 96], sizes = [8, 32], strides = [1, 1]} : vector<8x128xf32> to vector<8x32xf32>
    %cst_92 = arith.constant 5.000000e-01 : f32
    %198 = vector.broadcast %cst_92 : f32 to vector<8x32xf32>
    %199 = arith.mulf %198, %197 : vector<8x32xf32>
    %cst_93 = arith.constant 5.000000e-01 : f32
    %200 = vector.broadcast %cst_93 : f32 to vector<8x32xf32>
    %201 = arith.addf %199, %200 : vector<8x32xf32>
    %202 = vector.extract_strided_slice %186 {offsets = [0, 64], sizes = [8, 32], strides = [1, 1]} : vector<8x128xf32> to vector<8x32xf32>
    %203 = arith.mulf %196, %173 : vector<8x32xf32>
    %204 = arith.mulf %191, %202 : vector<8x32xf32>
    %205 = arith.addf %203, %204 : vector<8x32xf32>
    %206 = math.tanh %205 : vector<8x32xf32>
    %207 = arith.mulf %201, %206 : vector<8x32xf32>
    %c4_94 = arith.constant 4 : index
    %c0_95 = arith.constant 0 : index
    %c0_96 = arith.constant 0 : index
    %208 = vector.load %arg12[%c4_94, %c0_95, %c0_96] : memref<8x8x32xf32, #tpu.memory_space<vmem>>, vector<1x8x32xf32>
    %209 = vector.shape_cast %208 : vector<1x8x32xf32> to vector<8x32xf32>
    %210 = vector.shape_cast %207 : vector<8x32xf32> to vector<1x8x32xf32>
    tpu.vector_store %arg12[%c4_94, %c0_95, %c0_96], %210 {strides = array<i32>} : memref<8x8x32xf32, #tpu.memory_space<vmem>>, vector<1x8x32xf32>,
    %c5_97 = arith.constant 5 : index
    %c0_98 = arith.constant 0 : index
    %c0_99 = arith.constant 0 : index
    %211 = vector.load %arg11[%c5_97, %c0_98, %c0_99] : memref<8x8x128xf32, #tpu.memory_space<vmem>>, vector<1x8x128xf32>
    %212 = vector.shape_cast %211 : vector<1x8x128xf32> to vector<8x128xf32>
    %cst_100 = arith.constant dense<0.000000e+00> : vector<8x128xf32>
    %213 = tpu.matmul %207, %1, %cst_100 {dimension_numbers = #tpu.dot_dimension_numbers<[1], [0], [0], [1], [0, 0, 1, 1], [], []>} : vector<8x32xf32>, vector<32x128xf32>, vector<8x128xf32> -> vector<8x128xf32>
    %214 = arith.addf %212, %213 : vector<8x128xf32>
    %cst_101 = arith.constant 5.000000e-01 : f32
    %215 = vector.broadcast %cst_101 : f32 to vector<8x128xf32>
    %216 = arith.mulf %215, %214 : vector<8x128xf32>
    %217 = math.tanh %216 : vector<8x128xf32>
    %218 = math.tanh %214 : vector<8x128xf32>
    %219 = vector.extract_strided_slice %217 {offsets = [0, 0], sizes = [8, 32], strides = [1, 1]} : vector<8x128xf32> to vector<8x32xf32>
    %cst_102 = arith.constant 5.000000e-01 : f32
    %220 = vector.broadcast %cst_102 : f32 to vector<8x32xf32>
    %221 = arith.mulf %220, %219 : vector<8x32xf32>
    %cst_103 = arith.constant 5.000000e-01 : f32
    %222 = vector.broadcast %cst_103 : f32 to vector<8x32xf32>
    %223 = arith.addf %221, %222 : vector<8x32xf32>
    %224 = vector.extract_strided_slice %217 {offsets = [0, 32], sizes = [8, 32], strides = [1, 1]} : vector<8x128xf32> to vector<8x32xf32>
    %cst_104 = arith.constant 5.000000e-01 : f32
    %225 = vector.broadcast %cst_104 : f32 to vector<8x32xf32>
    %226 = arith.mulf %225, %224 : vector<8x32xf32>
    %cst_105 = arith.constant 5.000000e-01 : f32
    %227 = vector.broadcast %cst_105 : f32 to vector<8x32xf32>
    %228 = arith.addf %226, %227 : vector<8x32xf32>
    %229 = vector.extract_strided_slice %217 {offsets = [0, 96], sizes = [8, 32], strides = [1, 1]} : vector<8x128xf32> to vector<8x32xf32>
    %cst_106 = arith.constant 5.000000e-01 : f32
    %230 = vector.broadcast %cst_106 : f32 to vector<8x32xf32>
    %231 = arith.mulf %230, %229 : vector<8x32xf32>
    %cst_107 = arith.constant 5.000000e-01 : f32
    %232 = vector.broadcast %cst_107 : f32 to vector<8x32xf32>
    %233 = arith.addf %231, %232 : vector<8x32xf32>
    %234 = vector.extract_strided_slice %218 {offsets = [0, 64], sizes = [8, 32], strides = [1, 1]} : vector<8x128xf32> to vector<8x32xf32>
    %235 = arith.mulf %228, %205 : vector<8x32xf32>
    %236 = arith.mulf %223, %234 : vector<8x32xf32>
    %237 = arith.addf %235, %236 : vector<8x32xf32>
    %238 = math.tanh %237 : vector<8x32xf32>
    %239 = arith.mulf %233, %238 : vector<8x32xf32>
    %c5_108 = arith.constant 5 : index
    %c0_109 = arith.constant 0 : index
    %c0_110 = arith.constant 0 : index
    %240 = vector.load %arg12[%c5_108, %c0_109, %c0_110] : memref<8x8x32xf32, #tpu.memory_space<vmem>>, vector<1x8x32xf32>
    %241 = vector.shape_cast %240 : vector<1x8x32xf32> to vector<8x32xf32>
    %242 = vector.shape_cast %239 : vector<8x32xf32> to vector<1x8x32xf32>
    tpu.vector_store %arg12[%c5_108, %c0_109, %c0_110], %242 {strides = array<i32>} : memref<8x8x32xf32, #tpu.memory_space<vmem>>, vector<1x8x32xf32>,
    %c6_111 = arith.constant 6 : index
    %c0_112 = arith.constant 0 : index
    %c0_113 = arith.constant 0 : index
    %243 = vector.load %arg11[%c6_111, %c0_112, %c0_113] : memref<8x8x128xf32, #tpu.memory_space<vmem>>, vector<1x8x128xf32>
    %244 = vector.shape_cast %243 : vector<1x8x128xf32> to vector<8x128xf32>
    %cst_114 = arith.constant dense<0.000000e+00> : vector<8x128xf32>
    %245 = tpu.matmul %239, %1, %cst_114 {dimension_numbers = #tpu.dot_dimension_numbers<[1], [0], [0], [1], [0, 0, 1, 1], [], []>} : vector<8x32xf32>, vector<32x128xf32>, vector<8x128xf32> -> vector<8x128xf32>
    %246 = arith.addf %244, %245 : vector<8x128xf32>
    %cst_115 = arith.constant 5.000000e-01 : f32
    %247 = vector.broadcast %cst_115 : f32 to vector<8x128xf32>
    %248 = arith.mulf %247, %246 : vector<8x128xf32>
    %249 = math.tanh %248 : vector<8x128xf32>
    %250 = math.tanh %246 : vector<8x128xf32>
    %251 = vector.extract_strided_slice %249 {offsets = [0, 0], sizes = [8, 32], strides = [1, 1]} : vector<8x128xf32> to vector<8x32xf32>
    %cst_116 = arith.constant 5.000000e-01 : f32
    %252 = vector.broadcast %cst_116 : f32 to vector<8x32xf32>
    %253 = arith.mulf %252, %251 : vector<8x32xf32>
    %cst_117 = arith.constant 5.000000e-01 : f32
    %254 = vector.broadcast %cst_117 : f32 to vector<8x32xf32>
    %255 = arith.addf %253, %254 : vector<8x32xf32>
    %256 = vector.extract_strided_slice %249 {offsets = [0, 32], sizes = [8, 32], strides = [1, 1]} : vector<8x128xf32> to vector<8x32xf32>
    %cst_118 = arith.constant 5.000000e-01 : f32
    %257 = vector.broadcast %cst_118 : f32 to vector<8x32xf32>
    %258 = arith.mulf %257, %256 : vector<8x32xf32>
    %cst_119 = arith.constant 5.000000e-01 : f32
    %259 = vector.broadcast %cst_119 : f32 to vector<8x32xf32>
    %260 = arith.addf %258, %259 : vector<8x32xf32>
    %261 = vector.extract_strided_slice %249 {offsets = [0, 96], sizes = [8, 32], strides = [1, 1]} : vector<8x128xf32> to vector<8x32xf32>
    %cst_120 = arith.constant 5.000000e-01 : f32
    %262 = vector.broadcast %cst_120 : f32 to vector<8x32xf32>
    %263 = arith.mulf %262, %261 : vector<8x32xf32>
    %cst_121 = arith.constant 5.000000e-01 : f32
    %264 = vector.broadcast %cst_121 : f32 to vector<8x32xf32>
    %265 = arith.addf %263, %264 : vector<8x32xf32>
    %266 = vector.extract_strided_slice %250 {offsets = [0, 64], sizes = [8, 32], strides = [1, 1]} : vector<8x128xf32> to vector<8x32xf32>
    %267 = arith.mulf %260, %237 : vector<8x32xf32>
    %268 = arith.mulf %255, %266 : vector<8x32xf32>
    %269 = arith.addf %267, %268 : vector<8x32xf32>
    %270 = math.tanh %269 : vector<8x32xf32>
    %271 = arith.mulf %265, %270 : vector<8x32xf32>
    %c6_122 = arith.constant 6 : index
    %c0_123 = arith.constant 0 : index
    %c0_124 = arith.constant 0 : index
    %272 = vector.load %arg12[%c6_122, %c0_123, %c0_124] : memref<8x8x32xf32, #tpu.memory_space<vmem>>, vector<1x8x32xf32>
    %273 = vector.shape_cast %272 : vector<1x8x32xf32> to vector<8x32xf32>
    %274 = vector.shape_cast %271 : vector<8x32xf32> to vector<1x8x32xf32>
    tpu.vector_store %arg12[%c6_122, %c0_123, %c0_124], %274 {strides = array<i32>} : memref<8x8x32xf32, #tpu.memory_space<vmem>>, vector<1x8x32xf32>,
    %c7_125 = arith.constant 7 : index
    %c0_126 = arith.constant 0 : index
    %c0_127 = arith.constant 0 : index
    %275 = vector.load %arg11[%c7_125, %c0_126, %c0_127] : memref<8x8x128xf32, #tpu.memory_space<vmem>>, vector<1x8x128xf32>
    %276 = vector.shape_cast %275 : vector<1x8x128xf32> to vector<8x128xf32>
    %cst_128 = arith.constant dense<0.000000e+00> : vector<8x128xf32>
    %277 = tpu.matmul %271, %1, %cst_128 {dimension_numbers = #tpu.dot_dimension_numbers<[1], [0], [0], [1], [0, 0, 1, 1], [], []>} : vector<8x32xf32>, vector<32x128xf32>, vector<8x128xf32> -> vector<8x128xf32>
    %278 = arith.addf %276, %277 : vector<8x128xf32>
    %cst_129 = arith.constant 5.000000e-01 : f32
    %279 = vector.broadcast %cst_129 : f32 to vector<8x128xf32>
    %280 = arith.mulf %279, %278 : vector<8x128xf32>
    %281 = math.tanh %280 : vector<8x128xf32>
    %282 = math.tanh %278 : vector<8x128xf32>
    %283 = vector.extract_strided_slice %281 {offsets = [0, 0], sizes = [8, 32], strides = [1, 1]} : vector<8x128xf32> to vector<8x32xf32>
    %cst_130 = arith.constant 5.000000e-01 : f32
    %284 = vector.broadcast %cst_130 : f32 to vector<8x32xf32>
    %285 = arith.mulf %284, %283 : vector<8x32xf32>
    %cst_131 = arith.constant 5.000000e-01 : f32
    %286 = vector.broadcast %cst_131 : f32 to vector<8x32xf32>
    %287 = arith.addf %285, %286 : vector<8x32xf32>
    %288 = vector.extract_strided_slice %281 {offsets = [0, 32], sizes = [8, 32], strides = [1, 1]} : vector<8x128xf32> to vector<8x32xf32>
    %cst_132 = arith.constant 5.000000e-01 : f32
    %289 = vector.broadcast %cst_132 : f32 to vector<8x32xf32>
    %290 = arith.mulf %289, %288 : vector<8x32xf32>
    %cst_133 = arith.constant 5.000000e-01 : f32
    %291 = vector.broadcast %cst_133 : f32 to vector<8x32xf32>
    %292 = arith.addf %290, %291 : vector<8x32xf32>
    %293 = vector.extract_strided_slice %281 {offsets = [0, 96], sizes = [8, 32], strides = [1, 1]} : vector<8x128xf32> to vector<8x32xf32>
    %cst_134 = arith.constant 5.000000e-01 : f32
    %294 = vector.broadcast %cst_134 : f32 to vector<8x32xf32>
    %295 = arith.mulf %294, %293 : vector<8x32xf32>
    %cst_135 = arith.constant 5.000000e-01 : f32
    %296 = vector.broadcast %cst_135 : f32 to vector<8x32xf32>
    %297 = arith.addf %295, %296 : vector<8x32xf32>
    %298 = vector.extract_strided_slice %282 {offsets = [0, 64], sizes = [8, 32], strides = [1, 1]} : vector<8x128xf32> to vector<8x32xf32>
    %299 = arith.mulf %292, %269 : vector<8x32xf32>
    %300 = arith.mulf %287, %298 : vector<8x32xf32>
    %301 = arith.addf %299, %300 : vector<8x32xf32>
    %302 = math.tanh %301 : vector<8x32xf32>
    %303 = arith.mulf %297, %302 : vector<8x32xf32>
    %c7_136 = arith.constant 7 : index
    %c0_137 = arith.constant 0 : index
    %c0_138 = arith.constant 0 : index
    %304 = vector.load %arg12[%c7_136, %c0_137, %c0_138] : memref<8x8x32xf32, #tpu.memory_space<vmem>>, vector<1x8x32xf32>
    %305 = vector.shape_cast %304 : vector<1x8x32xf32> to vector<8x32xf32>
    %306 = vector.shape_cast %303 : vector<8x32xf32> to vector<1x8x32xf32>
    tpu.vector_store %arg12[%c7_136, %c0_137, %c0_138], %306 {strides = array<i32>} : memref<8x8x32xf32, #tpu.memory_space<vmem>>, vector<1x8x32xf32>,
    %c0_139 = arith.constant 0 : index
    %c0_140 = arith.constant 0 : index
    %307 = vector.load %arg5[%c0_139, %c0_140] : memref<32x128xf32, #tpu.memory_space<vmem>>, vector<32x128xf32>
    %c0_141 = arith.constant 0 : index
    %c0_142 = arith.constant 0 : index
    %308 = vector.load %arg6[%c0_141, %c0_142] : memref<32x128xf32, #tpu.memory_space<vmem>>, vector<32x128xf32>
    %c0_143 = arith.constant 0 : index
    %c0_144 = arith.constant 0 : index
    %309 = vector.load %arg7[%c0_143, %c0_144] : memref<1x128xf32, #tpu.memory_space<vmem>>, vector<1x128xf32>
    %c0_145 = arith.constant 0 : index
    %c0_146 = arith.constant 0 : index
    %c0_147 = arith.constant 0 : index
    %310 = vector.load %arg12[%c0_145, %c0_146, %c0_147] : memref<8x8x32xf32, #tpu.memory_space<vmem>>, vector<8x8x32xf32>
    %311 = vector.shape_cast %310 : vector<8x8x32xf32> to vector<64x32xf32>
    %cst_148 = arith.constant dense<0.000000e+00> : vector<64x128xf32>
    %312 = tpu.matmul %311, %307, %cst_148 {dimension_numbers = #tpu.dot_dimension_numbers<[1], [0], [0], [1], [0, 0, 1, 1], [], []>} : vector<64x32xf32>, vector<32x128xf32>, vector<64x128xf32> -> vector<64x128xf32>
    %313 = vector.broadcast %309 : vector<1x128xf32> to vector<64x128xf32>
    %314 = arith.addf %312, %313 : vector<64x128xf32>
    %315 = vector.shape_cast %314 : vector<64x128xf32> to vector<8x8x128xf32>
    %c0_149 = arith.constant 0 : index
    %c0_150 = arith.constant 0 : index
    %c0_151 = arith.constant 0 : index
    %316 = vector.load %arg11[%c0_149, %c0_150, %c0_151] : memref<8x8x128xf32, #tpu.memory_space<vmem>>, vector<8x8x128xf32>
    tpu.vector_store %arg11[%c0_149, %c0_150, %c0_151], %315 {strides = array<i32>} : memref<8x8x128xf32, #tpu.memory_space<vmem>>, vector<8x8x128xf32>,
    %cst_152 = arith.constant 0.000000e+00 : f32
    %317 = vector.broadcast %cst_152 : f32 to vector<8x32xf32>
    %cst_153 = arith.constant 0.000000e+00 : f32
    %318 = vector.broadcast %cst_153 : f32 to vector<8x32xf32>
    %c0_154 = arith.constant 0 : index
    %c0_155 = arith.constant 0 : index
    %c0_156 = arith.constant 0 : index
    %319 = vector.load %arg11[%c0_154, %c0_155, %c0_156] : memref<8x8x128xf32, #tpu.memory_space<vmem>>, vector<1x8x128xf32>
    %320 = vector.shape_cast %319 : vector<1x8x128xf32> to vector<8x128xf32>
    %cst_157 = arith.constant dense<0.000000e+00> : vector<8x128xf32>
    %321 = tpu.matmul %317, %308, %cst_157 {dimension_numbers = #tpu.dot_dimension_numbers<[1], [0], [0], [1], [0, 0, 1, 1], [], []>} : vector<8x32xf32>, vector<32x128xf32>, vector<8x128xf32> -> vector<8x128xf32>
    %322 = arith.addf %320, %321 : vector<8x128xf32>
    %cst_158 = arith.constant 5.000000e-01 : f32
    %323 = vector.broadcast %cst_158 : f32 to vector<8x128xf32>
    %324 = arith.mulf %323, %322 : vector<8x128xf32>
    %325 = math.tanh %324 : vector<8x128xf32>
    %326 = math.tanh %322 : vector<8x128xf32>
    %327 = vector.extract_strided_slice %325 {offsets = [0, 0], sizes = [8, 32], strides = [1, 1]} : vector<8x128xf32> to vector<8x32xf32>
    %cst_159 = arith.constant 5.000000e-01 : f32
    %328 = vector.broadcast %cst_159 : f32 to vector<8x32xf32>
    %329 = arith.mulf %328, %327 : vector<8x32xf32>
    %cst_160 = arith.constant 5.000000e-01 : f32
    %330 = vector.broadcast %cst_160 : f32 to vector<8x32xf32>
    %331 = arith.addf %329, %330 : vector<8x32xf32>
    %332 = vector.extract_strided_slice %325 {offsets = [0, 32], sizes = [8, 32], strides = [1, 1]} : vector<8x128xf32> to vector<8x32xf32>
    %cst_161 = arith.constant 5.000000e-01 : f32
    %333 = vector.broadcast %cst_161 : f32 to vector<8x32xf32>
    %334 = arith.mulf %333, %332 : vector<8x32xf32>
    %cst_162 = arith.constant 5.000000e-01 : f32
    %335 = vector.broadcast %cst_162 : f32 to vector<8x32xf32>
    %336 = arith.addf %334, %335 : vector<8x32xf32>
    %337 = vector.extract_strided_slice %325 {offsets = [0, 96], sizes = [8, 32], strides = [1, 1]} : vector<8x128xf32> to vector<8x32xf32>
    %cst_163 = arith.constant 5.000000e-01 : f32
    %338 = vector.broadcast %cst_163 : f32 to vector<8x32xf32>
    %339 = arith.mulf %338, %337 : vector<8x32xf32>
    %cst_164 = arith.constant 5.000000e-01 : f32
    %340 = vector.broadcast %cst_164 : f32 to vector<8x32xf32>
    %341 = arith.addf %339, %340 : vector<8x32xf32>
    %342 = vector.extract_strided_slice %326 {offsets = [0, 64], sizes = [8, 32], strides = [1, 1]} : vector<8x128xf32> to vector<8x32xf32>
    %343 = arith.mulf %336, %318 : vector<8x32xf32>
    %344 = arith.mulf %331, %342 : vector<8x32xf32>
    %345 = arith.addf %343, %344 : vector<8x32xf32>
    %346 = math.tanh %345 : vector<8x32xf32>
    %347 = arith.mulf %341, %346 : vector<8x32xf32>
    %c0_165 = arith.constant 0 : index
    %c0_166 = arith.constant 0 : index
    %c0_167 = arith.constant 0 : index
    %348 = vector.load %arg12[%c0_165, %c0_166, %c0_167] : memref<8x8x32xf32, #tpu.memory_space<vmem>>, vector<1x8x32xf32>
    %349 = vector.shape_cast %348 : vector<1x8x32xf32> to vector<8x32xf32>
    %350 = vector.shape_cast %347 : vector<8x32xf32> to vector<1x8x32xf32>
    tpu.vector_store %arg12[%c0_165, %c0_166, %c0_167], %350 {strides = array<i32>} : memref<8x8x32xf32, #tpu.memory_space<vmem>>, vector<1x8x32xf32>,
    %c1_168 = arith.constant 1 : index
    %c0_169 = arith.constant 0 : index
    %c0_170 = arith.constant 0 : index
    %351 = vector.load %arg11[%c1_168, %c0_169, %c0_170] : memref<8x8x128xf32, #tpu.memory_space<vmem>>, vector<1x8x128xf32>
    %352 = vector.shape_cast %351 : vector<1x8x128xf32> to vector<8x128xf32>
    %cst_171 = arith.constant dense<0.000000e+00> : vector<8x128xf32>
    %353 = tpu.matmul %347, %308, %cst_171 {dimension_numbers = #tpu.dot_dimension_numbers<[1], [0], [0], [1], [0, 0, 1, 1], [], []>} : vector<8x32xf32>, vector<32x128xf32>, vector<8x128xf32> -> vector<8x128xf32>
    %354 = arith.addf %352, %353 : vector<8x128xf32>
    %cst_172 = arith.constant 5.000000e-01 : f32
    %355 = vector.broadcast %cst_172 : f32 to vector<8x128xf32>
    %356 = arith.mulf %355, %354 : vector<8x128xf32>
    %357 = math.tanh %356 : vector<8x128xf32>
    %358 = math.tanh %354 : vector<8x128xf32>
    %359 = vector.extract_strided_slice %357 {offsets = [0, 0], sizes = [8, 32], strides = [1, 1]} : vector<8x128xf32> to vector<8x32xf32>
    %cst_173 = arith.constant 5.000000e-01 : f32
    %360 = vector.broadcast %cst_173 : f32 to vector<8x32xf32>
    %361 = arith.mulf %360, %359 : vector<8x32xf32>
    %cst_174 = arith.constant 5.000000e-01 : f32
    %362 = vector.broadcast %cst_174 : f32 to vector<8x32xf32>
    %363 = arith.addf %361, %362 : vector<8x32xf32>
    %364 = vector.extract_strided_slice %357 {offsets = [0, 32], sizes = [8, 32], strides = [1, 1]} : vector<8x128xf32> to vector<8x32xf32>
    %cst_175 = arith.constant 5.000000e-01 : f32
    %365 = vector.broadcast %cst_175 : f32 to vector<8x32xf32>
    %366 = arith.mulf %365, %364 : vector<8x32xf32>
    %cst_176 = arith.constant 5.000000e-01 : f32
    %367 = vector.broadcast %cst_176 : f32 to vector<8x32xf32>
    %368 = arith.addf %366, %367 : vector<8x32xf32>
    %369 = vector.extract_strided_slice %357 {offsets = [0, 96], sizes = [8, 32], strides = [1, 1]} : vector<8x128xf32> to vector<8x32xf32>
    %cst_177 = arith.constant 5.000000e-01 : f32
    %370 = vector.broadcast %cst_177 : f32 to vector<8x32xf32>
    %371 = arith.mulf %370, %369 : vector<8x32xf32>
    %cst_178 = arith.constant 5.000000e-01 : f32
    %372 = vector.broadcast %cst_178 : f32 to vector<8x32xf32>
    %373 = arith.addf %371, %372 : vector<8x32xf32>
    %374 = vector.extract_strided_slice %358 {offsets = [0, 64], sizes = [8, 32], strides = [1, 1]} : vector<8x128xf32> to vector<8x32xf32>
    %375 = arith.mulf %368, %345 : vector<8x32xf32>
    %376 = arith.mulf %363, %374 : vector<8x32xf32>
    %377 = arith.addf %375, %376 : vector<8x32xf32>
    %378 = math.tanh %377 : vector<8x32xf32>
    %379 = arith.mulf %373, %378 : vector<8x32xf32>
    %c1_179 = arith.constant 1 : index
    %c0_180 = arith.constant 0 : index
    %c0_181 = arith.constant 0 : index
    %380 = vector.load %arg12[%c1_179, %c0_180, %c0_181] : memref<8x8x32xf32, #tpu.memory_space<vmem>>, vector<1x8x32xf32>
    %381 = vector.shape_cast %380 : vector<1x8x32xf32> to vector<8x32xf32>
    %382 = vector.shape_cast %379 : vector<8x32xf32> to vector<1x8x32xf32>
    tpu.vector_store %arg12[%c1_179, %c0_180, %c0_181], %382 {strides = array<i32>} : memref<8x8x32xf32, #tpu.memory_space<vmem>>, vector<1x8x32xf32>,
    %c2_182 = arith.constant 2 : index
    %c0_183 = arith.constant 0 : index
    %c0_184 = arith.constant 0 : index
    %383 = vector.load %arg11[%c2_182, %c0_183, %c0_184] : memref<8x8x128xf32, #tpu.memory_space<vmem>>, vector<1x8x128xf32>
    %384 = vector.shape_cast %383 : vector<1x8x128xf32> to vector<8x128xf32>
    %cst_185 = arith.constant dense<0.000000e+00> : vector<8x128xf32>
    %385 = tpu.matmul %379, %308, %cst_185 {dimension_numbers = #tpu.dot_dimension_numbers<[1], [0], [0], [1], [0, 0, 1, 1], [], []>} : vector<8x32xf32>, vector<32x128xf32>, vector<8x128xf32> -> vector<8x128xf32>
    %386 = arith.addf %384, %385 : vector<8x128xf32>
    %cst_186 = arith.constant 5.000000e-01 : f32
    %387 = vector.broadcast %cst_186 : f32 to vector<8x128xf32>
    %388 = arith.mulf %387, %386 : vector<8x128xf32>
    %389 = math.tanh %388 : vector<8x128xf32>
    %390 = math.tanh %386 : vector<8x128xf32>
    %391 = vector.extract_strided_slice %389 {offsets = [0, 0], sizes = [8, 32], strides = [1, 1]} : vector<8x128xf32> to vector<8x32xf32>
    %cst_187 = arith.constant 5.000000e-01 : f32
    %392 = vector.broadcast %cst_187 : f32 to vector<8x32xf32>
    %393 = arith.mulf %392, %391 : vector<8x32xf32>
    %cst_188 = arith.constant 5.000000e-01 : f32
    %394 = vector.broadcast %cst_188 : f32 to vector<8x32xf32>
    %395 = arith.addf %393, %394 : vector<8x32xf32>
    %396 = vector.extract_strided_slice %389 {offsets = [0, 32], sizes = [8, 32], strides = [1, 1]} : vector<8x128xf32> to vector<8x32xf32>
    %cst_189 = arith.constant 5.000000e-01 : f32
    %397 = vector.broadcast %cst_189 : f32 to vector<8x32xf32>
    %398 = arith.mulf %397, %396 : vector<8x32xf32>
    %cst_190 = arith.constant 5.000000e-01 : f32
    %399 = vector.broadcast %cst_190 : f32 to vector<8x32xf32>
    %400 = arith.addf %398, %399 : vector<8x32xf32>
    %401 = vector.extract_strided_slice %389 {offsets = [0, 96], sizes = [8, 32], strides = [1, 1]} : vector<8x128xf32> to vector<8x32xf32>
    %cst_191 = arith.constant 5.000000e-01 : f32
    %402 = vector.broadcast %cst_191 : f32 to vector<8x32xf32>
    %403 = arith.mulf %402, %401 : vector<8x32xf32>
    %cst_192 = arith.constant 5.000000e-01 : f32
    %404 = vector.broadcast %cst_192 : f32 to vector<8x32xf32>
    %405 = arith.addf %403, %404 : vector<8x32xf32>
    %406 = vector.extract_strided_slice %390 {offsets = [0, 64], sizes = [8, 32], strides = [1, 1]} : vector<8x128xf32> to vector<8x32xf32>
    %407 = arith.mulf %400, %377 : vector<8x32xf32>
    %408 = arith.mulf %395, %406 : vector<8x32xf32>
    %409 = arith.addf %407, %408 : vector<8x32xf32>
    %410 = math.tanh %409 : vector<8x32xf32>
    %411 = arith.mulf %405, %410 : vector<8x32xf32>
    %c2_193 = arith.constant 2 : index
    %c0_194 = arith.constant 0 : index
    %c0_195 = arith.constant 0 : index
    %412 = vector.load %arg12[%c2_193, %c0_194, %c0_195] : memref<8x8x32xf32, #tpu.memory_space<vmem>>, vector<1x8x32xf32>
    %413 = vector.shape_cast %412 : vector<1x8x32xf32> to vector<8x32xf32>
    %414 = vector.shape_cast %411 : vector<8x32xf32> to vector<1x8x32xf32>
    tpu.vector_store %arg12[%c2_193, %c0_194, %c0_195], %414 {strides = array<i32>} : memref<8x8x32xf32, #tpu.memory_space<vmem>>, vector<1x8x32xf32>,
    %c3_196 = arith.constant 3 : index
    %c0_197 = arith.constant 0 : index
    %c0_198 = arith.constant 0 : index
    %415 = vector.load %arg11[%c3_196, %c0_197, %c0_198] : memref<8x8x128xf32, #tpu.memory_space<vmem>>, vector<1x8x128xf32>
    %416 = vector.shape_cast %415 : vector<1x8x128xf32> to vector<8x128xf32>
    %cst_199 = arith.constant dense<0.000000e+00> : vector<8x128xf32>
    %417 = tpu.matmul %411, %308, %cst_199 {dimension_numbers = #tpu.dot_dimension_numbers<[1], [0], [0], [1], [0, 0, 1, 1], [], []>} : vector<8x32xf32>, vector<32x128xf32>, vector<8x128xf32> -> vector<8x128xf32>
    %418 = arith.addf %416, %417 : vector<8x128xf32>
    %cst_200 = arith.constant 5.000000e-01 : f32
    %419 = vector.broadcast %cst_200 : f32 to vector<8x128xf32>
    %420 = arith.mulf %419, %418 : vector<8x128xf32>
    %421 = math.tanh %420 : vector<8x128xf32>
    %422 = math.tanh %418 : vector<8x128xf32>
    %423 = vector.extract_strided_slice %421 {offsets = [0, 0], sizes = [8, 32], strides = [1, 1]} : vector<8x128xf32> to vector<8x32xf32>
    %cst_201 = arith.constant 5.000000e-01 : f32
    %424 = vector.broadcast %cst_201 : f32 to vector<8x32xf32>
    %425 = arith.mulf %424, %423 : vector<8x32xf32>
    %cst_202 = arith.constant 5.000000e-01 : f32
    %426 = vector.broadcast %cst_202 : f32 to vector<8x32xf32>
    %427 = arith.addf %425, %426 : vector<8x32xf32>
    %428 = vector.extract_strided_slice %421 {offsets = [0, 32], sizes = [8, 32], strides = [1, 1]} : vector<8x128xf32> to vector<8x32xf32>
    %cst_203 = arith.constant 5.000000e-01 : f32
    %429 = vector.broadcast %cst_203 : f32 to vector<8x32xf32>
    %430 = arith.mulf %429, %428 : vector<8x32xf32>
    %cst_204 = arith.constant 5.000000e-01 : f32
    %431 = vector.broadcast %cst_204 : f32 to vector<8x32xf32>
    %432 = arith.addf %430, %431 : vector<8x32xf32>
    %433 = vector.extract_strided_slice %421 {offsets = [0, 96], sizes = [8, 32], strides = [1, 1]} : vector<8x128xf32> to vector<8x32xf32>
    %cst_205 = arith.constant 5.000000e-01 : f32
    %434 = vector.broadcast %cst_205 : f32 to vector<8x32xf32>
    %435 = arith.mulf %434, %433 : vector<8x32xf32>
    %cst_206 = arith.constant 5.000000e-01 : f32
    %436 = vector.broadcast %cst_206 : f32 to vector<8x32xf32>
    %437 = arith.addf %435, %436 : vector<8x32xf32>
    %438 = vector.extract_strided_slice %422 {offsets = [0, 64], sizes = [8, 32], strides = [1, 1]} : vector<8x128xf32> to vector<8x32xf32>
    %439 = arith.mulf %432, %409 : vector<8x32xf32>
    %440 = arith.mulf %427, %438 : vector<8x32xf32>
    %441 = arith.addf %439, %440 : vector<8x32xf32>
    %442 = math.tanh %441 : vector<8x32xf32>
    %443 = arith.mulf %437, %442 : vector<8x32xf32>
    %c3_207 = arith.constant 3 : index
    %c0_208 = arith.constant 0 : index
    %c0_209 = arith.constant 0 : index
    %444 = vector.load %arg12[%c3_207, %c0_208, %c0_209] : memref<8x8x32xf32, #tpu.memory_space<vmem>>, vector<1x8x32xf32>
    %445 = vector.shape_cast %444 : vector<1x8x32xf32> to vector<8x32xf32>
    %446 = vector.shape_cast %443 : vector<8x32xf32> to vector<1x8x32xf32>
    tpu.vector_store %arg12[%c3_207, %c0_208, %c0_209], %446 {strides = array<i32>} : memref<8x8x32xf32, #tpu.memory_space<vmem>>, vector<1x8x32xf32>,
    %c4_210 = arith.constant 4 : index
    %c0_211 = arith.constant 0 : index
    %c0_212 = arith.constant 0 : index
    %447 = vector.load %arg11[%c4_210, %c0_211, %c0_212] : memref<8x8x128xf32, #tpu.memory_space<vmem>>, vector<1x8x128xf32>
    %448 = vector.shape_cast %447 : vector<1x8x128xf32> to vector<8x128xf32>
    %cst_213 = arith.constant dense<0.000000e+00> : vector<8x128xf32>
    %449 = tpu.matmul %443, %308, %cst_213 {dimension_numbers = #tpu.dot_dimension_numbers<[1], [0], [0], [1], [0, 0, 1, 1], [], []>} : vector<8x32xf32>, vector<32x128xf32>, vector<8x128xf32> -> vector<8x128xf32>
    %450 = arith.addf %448, %449 : vector<8x128xf32>
    %cst_214 = arith.constant 5.000000e-01 : f32
    %451 = vector.broadcast %cst_214 : f32 to vector<8x128xf32>
    %452 = arith.mulf %451, %450 : vector<8x128xf32>
    %453 = math.tanh %452 : vector<8x128xf32>
    %454 = math.tanh %450 : vector<8x128xf32>
    %455 = vector.extract_strided_slice %453 {offsets = [0, 0], sizes = [8, 32], strides = [1, 1]} : vector<8x128xf32> to vector<8x32xf32>
    %cst_215 = arith.constant 5.000000e-01 : f32
    %456 = vector.broadcast %cst_215 : f32 to vector<8x32xf32>
    %457 = arith.mulf %456, %455 : vector<8x32xf32>
    %cst_216 = arith.constant 5.000000e-01 : f32
    %458 = vector.broadcast %cst_216 : f32 to vector<8x32xf32>
    %459 = arith.addf %457, %458 : vector<8x32xf32>
    %460 = vector.extract_strided_slice %453 {offsets = [0, 32], sizes = [8, 32], strides = [1, 1]} : vector<8x128xf32> to vector<8x32xf32>
    %cst_217 = arith.constant 5.000000e-01 : f32
    %461 = vector.broadcast %cst_217 : f32 to vector<8x32xf32>
    %462 = arith.mulf %461, %460 : vector<8x32xf32>
    %cst_218 = arith.constant 5.000000e-01 : f32
    %463 = vector.broadcast %cst_218 : f32 to vector<8x32xf32>
    %464 = arith.addf %462, %463 : vector<8x32xf32>
    %465 = vector.extract_strided_slice %453 {offsets = [0, 96], sizes = [8, 32], strides = [1, 1]} : vector<8x128xf32> to vector<8x32xf32>
    %cst_219 = arith.constant 5.000000e-01 : f32
    %466 = vector.broadcast %cst_219 : f32 to vector<8x32xf32>
    %467 = arith.mulf %466, %465 : vector<8x32xf32>
    %cst_220 = arith.constant 5.000000e-01 : f32
    %468 = vector.broadcast %cst_220 : f32 to vector<8x32xf32>
    %469 = arith.addf %467, %468 : vector<8x32xf32>
    %470 = vector.extract_strided_slice %454 {offsets = [0, 64], sizes = [8, 32], strides = [1, 1]} : vector<8x128xf32> to vector<8x32xf32>
    %471 = arith.mulf %464, %441 : vector<8x32xf32>
    %472 = arith.mulf %459, %470 : vector<8x32xf32>
    %473 = arith.addf %471, %472 : vector<8x32xf32>
    %474 = math.tanh %473 : vector<8x32xf32>
    %475 = arith.mulf %469, %474 : vector<8x32xf32>
    %c4_221 = arith.constant 4 : index
    %c0_222 = arith.constant 0 : index
    %c0_223 = arith.constant 0 : index
    %476 = vector.load %arg12[%c4_221, %c0_222, %c0_223] : memref<8x8x32xf32, #tpu.memory_space<vmem>>, vector<1x8x32xf32>
    %477 = vector.shape_cast %476 : vector<1x8x32xf32> to vector<8x32xf32>
    %478 = vector.shape_cast %475 : vector<8x32xf32> to vector<1x8x32xf32>
    tpu.vector_store %arg12[%c4_221, %c0_222, %c0_223], %478 {strides = array<i32>} : memref<8x8x32xf32, #tpu.memory_space<vmem>>, vector<1x8x32xf32>,
    %c5_224 = arith.constant 5 : index
    %c0_225 = arith.constant 0 : index
    %c0_226 = arith.constant 0 : index
    %479 = vector.load %arg11[%c5_224, %c0_225, %c0_226] : memref<8x8x128xf32, #tpu.memory_space<vmem>>, vector<1x8x128xf32>
    %480 = vector.shape_cast %479 : vector<1x8x128xf32> to vector<8x128xf32>
    %cst_227 = arith.constant dense<0.000000e+00> : vector<8x128xf32>
    %481 = tpu.matmul %475, %308, %cst_227 {dimension_numbers = #tpu.dot_dimension_numbers<[1], [0], [0], [1], [0, 0, 1, 1], [], []>} : vector<8x32xf32>, vector<32x128xf32>, vector<8x128xf32> -> vector<8x128xf32>
    %482 = arith.addf %480, %481 : vector<8x128xf32>
    %cst_228 = arith.constant 5.000000e-01 : f32
    %483 = vector.broadcast %cst_228 : f32 to vector<8x128xf32>
    %484 = arith.mulf %483, %482 : vector<8x128xf32>
    %485 = math.tanh %484 : vector<8x128xf32>
    %486 = math.tanh %482 : vector<8x128xf32>
    %487 = vector.extract_strided_slice %485 {offsets = [0, 0], sizes = [8, 32], strides = [1, 1]} : vector<8x128xf32> to vector<8x32xf32>
    %cst_229 = arith.constant 5.000000e-01 : f32
    %488 = vector.broadcast %cst_229 : f32 to vector<8x32xf32>
    %489 = arith.mulf %488, %487 : vector<8x32xf32>
    %cst_230 = arith.constant 5.000000e-01 : f32
    %490 = vector.broadcast %cst_230 : f32 to vector<8x32xf32>
    %491 = arith.addf %489, %490 : vector<8x32xf32>
    %492 = vector.extract_strided_slice %485 {offsets = [0, 32], sizes = [8, 32], strides = [1, 1]} : vector<8x128xf32> to vector<8x32xf32>
    %cst_231 = arith.constant 5.000000e-01 : f32
    %493 = vector.broadcast %cst_231 : f32 to vector<8x32xf32>
    %494 = arith.mulf %493, %492 : vector<8x32xf32>
    %cst_232 = arith.constant 5.000000e-01 : f32
    %495 = vector.broadcast %cst_232 : f32 to vector<8x32xf32>
    %496 = arith.addf %494, %495 : vector<8x32xf32>
    %497 = vector.extract_strided_slice %485 {offsets = [0, 96], sizes = [8, 32], strides = [1, 1]} : vector<8x128xf32> to vector<8x32xf32>
    %cst_233 = arith.constant 5.000000e-01 : f32
    %498 = vector.broadcast %cst_233 : f32 to vector<8x32xf32>
    %499 = arith.mulf %498, %497 : vector<8x32xf32>
    %cst_234 = arith.constant 5.000000e-01 : f32
    %500 = vector.broadcast %cst_234 : f32 to vector<8x32xf32>
    %501 = arith.addf %499, %500 : vector<8x32xf32>
    %502 = vector.extract_strided_slice %486 {offsets = [0, 64], sizes = [8, 32], strides = [1, 1]} : vector<8x128xf32> to vector<8x32xf32>
    %503 = arith.mulf %496, %473 : vector<8x32xf32>
    %504 = arith.mulf %491, %502 : vector<8x32xf32>
    %505 = arith.addf %503, %504 : vector<8x32xf32>
    %506 = math.tanh %505 : vector<8x32xf32>
    %507 = arith.mulf %501, %506 : vector<8x32xf32>
    %c5_235 = arith.constant 5 : index
    %c0_236 = arith.constant 0 : index
    %c0_237 = arith.constant 0 : index
    %508 = vector.load %arg12[%c5_235, %c0_236, %c0_237] : memref<8x8x32xf32, #tpu.memory_space<vmem>>, vector<1x8x32xf32>
    %509 = vector.shape_cast %508 : vector<1x8x32xf32> to vector<8x32xf32>
    %510 = vector.shape_cast %507 : vector<8x32xf32> to vector<1x8x32xf32>
    tpu.vector_store %arg12[%c5_235, %c0_236, %c0_237], %510 {strides = array<i32>} : memref<8x8x32xf32, #tpu.memory_space<vmem>>, vector<1x8x32xf32>,
    %c6_238 = arith.constant 6 : index
    %c0_239 = arith.constant 0 : index
    %c0_240 = arith.constant 0 : index
    %511 = vector.load %arg11[%c6_238, %c0_239, %c0_240] : memref<8x8x128xf32, #tpu.memory_space<vmem>>, vector<1x8x128xf32>
    %512 = vector.shape_cast %511 : vector<1x8x128xf32> to vector<8x128xf32>
    %cst_241 = arith.constant dense<0.000000e+00> : vector<8x128xf32>
    %513 = tpu.matmul %507, %308, %cst_241 {dimension_numbers = #tpu.dot_dimension_numbers<[1], [0], [0], [1], [0, 0, 1, 1], [], []>} : vector<8x32xf32>, vector<32x128xf32>, vector<8x128xf32> -> vector<8x128xf32>
    %514 = arith.addf %512, %513 : vector<8x128xf32>
    %cst_242 = arith.constant 5.000000e-01 : f32
    %515 = vector.broadcast %cst_242 : f32 to vector<8x128xf32>
    %516 = arith.mulf %515, %514 : vector<8x128xf32>
    %517 = math.tanh %516 : vector<8x128xf32>
    %518 = math.tanh %514 : vector<8x128xf32>
    %519 = vector.extract_strided_slice %517 {offsets = [0, 0], sizes = [8, 32], strides = [1, 1]} : vector<8x128xf32> to vector<8x32xf32>
    %cst_243 = arith.constant 5.000000e-01 : f32
    %520 = vector.broadcast %cst_243 : f32 to vector<8x32xf32>
    %521 = arith.mulf %520, %519 : vector<8x32xf32>
    %cst_244 = arith.constant 5.000000e-01 : f32
    %522 = vector.broadcast %cst_244 : f32 to vector<8x32xf32>
    %523 = arith.addf %521, %522 : vector<8x32xf32>
    %524 = vector.extract_strided_slice %517 {offsets = [0, 32], sizes = [8, 32], strides = [1, 1]} : vector<8x128xf32> to vector<8x32xf32>
    %cst_245 = arith.constant 5.000000e-01 : f32
    %525 = vector.broadcast %cst_245 : f32 to vector<8x32xf32>
    %526 = arith.mulf %525, %524 : vector<8x32xf32>
    %cst_246 = arith.constant 5.000000e-01 : f32
    %527 = vector.broadcast %cst_246 : f32 to vector<8x32xf32>
    %528 = arith.addf %526, %527 : vector<8x32xf32>
    %529 = vector.extract_strided_slice %517 {offsets = [0, 96], sizes = [8, 32], strides = [1, 1]} : vector<8x128xf32> to vector<8x32xf32>
    %cst_247 = arith.constant 5.000000e-01 : f32
    %530 = vector.broadcast %cst_247 : f32 to vector<8x32xf32>
    %531 = arith.mulf %530, %529 : vector<8x32xf32>
    %cst_248 = arith.constant 5.000000e-01 : f32
    %532 = vector.broadcast %cst_248 : f32 to vector<8x32xf32>
    %533 = arith.addf %531, %532 : vector<8x32xf32>
    %534 = vector.extract_strided_slice %518 {offsets = [0, 64], sizes = [8, 32], strides = [1, 1]} : vector<8x128xf32> to vector<8x32xf32>
    %535 = arith.mulf %528, %505 : vector<8x32xf32>
    %536 = arith.mulf %523, %534 : vector<8x32xf32>
    %537 = arith.addf %535, %536 : vector<8x32xf32>
    %538 = math.tanh %537 : vector<8x32xf32>
    %539 = arith.mulf %533, %538 : vector<8x32xf32>
    %c6_249 = arith.constant 6 : index
    %c0_250 = arith.constant 0 : index
    %c0_251 = arith.constant 0 : index
    %540 = vector.load %arg12[%c6_249, %c0_250, %c0_251] : memref<8x8x32xf32, #tpu.memory_space<vmem>>, vector<1x8x32xf32>
    %541 = vector.shape_cast %540 : vector<1x8x32xf32> to vector<8x32xf32>
    %542 = vector.shape_cast %539 : vector<8x32xf32> to vector<1x8x32xf32>
    tpu.vector_store %arg12[%c6_249, %c0_250, %c0_251], %542 {strides = array<i32>} : memref<8x8x32xf32, #tpu.memory_space<vmem>>, vector<1x8x32xf32>,
    %c7_252 = arith.constant 7 : index
    %c0_253 = arith.constant 0 : index
    %c0_254 = arith.constant 0 : index
    %543 = vector.load %arg11[%c7_252, %c0_253, %c0_254] : memref<8x8x128xf32, #tpu.memory_space<vmem>>, vector<1x8x128xf32>
    %544 = vector.shape_cast %543 : vector<1x8x128xf32> to vector<8x128xf32>
    %cst_255 = arith.constant dense<0.000000e+00> : vector<8x128xf32>
    %545 = tpu.matmul %539, %308, %cst_255 {dimension_numbers = #tpu.dot_dimension_numbers<[1], [0], [0], [1], [0, 0, 1, 1], [], []>} : vector<8x32xf32>, vector<32x128xf32>, vector<8x128xf32> -> vector<8x128xf32>
    %546 = arith.addf %544, %545 : vector<8x128xf32>
    %cst_256 = arith.constant 5.000000e-01 : f32
    %547 = vector.broadcast %cst_256 : f32 to vector<8x128xf32>
    %548 = arith.mulf %547, %546 : vector<8x128xf32>
    %549 = math.tanh %548 : vector<8x128xf32>
    %550 = math.tanh %546 : vector<8x128xf32>
    %551 = vector.extract_strided_slice %549 {offsets = [0, 0], sizes = [8, 32], strides = [1, 1]} : vector<8x128xf32> to vector<8x32xf32>
    %cst_257 = arith.constant 5.000000e-01 : f32
    %552 = vector.broadcast %cst_257 : f32 to vector<8x32xf32>
    %553 = arith.mulf %552, %551 : vector<8x32xf32>
    %cst_258 = arith.constant 5.000000e-01 : f32
    %554 = vector.broadcast %cst_258 : f32 to vector<8x32xf32>
    %555 = arith.addf %553, %554 : vector<8x32xf32>
    %556 = vector.extract_strided_slice %549 {offsets = [0, 32], sizes = [8, 32], strides = [1, 1]} : vector<8x128xf32> to vector<8x32xf32>
    %cst_259 = arith.constant 5.000000e-01 : f32
    %557 = vector.broadcast %cst_259 : f32 to vector<8x32xf32>
    %558 = arith.mulf %557, %556 : vector<8x32xf32>
    %cst_260 = arith.constant 5.000000e-01 : f32
    %559 = vector.broadcast %cst_260 : f32 to vector<8x32xf32>
    %560 = arith.addf %558, %559 : vector<8x32xf32>
    %561 = vector.extract_strided_slice %549 {offsets = [0, 96], sizes = [8, 32], strides = [1, 1]} : vector<8x128xf32> to vector<8x32xf32>
    %cst_261 = arith.constant 5.000000e-01 : f32
    %562 = vector.broadcast %cst_261 : f32 to vector<8x32xf32>
    %563 = arith.mulf %562, %561 : vector<8x32xf32>
    %cst_262 = arith.constant 5.000000e-01 : f32
    %564 = vector.broadcast %cst_262 : f32 to vector<8x32xf32>
    %565 = arith.addf %563, %564 : vector<8x32xf32>
    %566 = vector.extract_strided_slice %550 {offsets = [0, 64], sizes = [8, 32], strides = [1, 1]} : vector<8x128xf32> to vector<8x32xf32>
    %567 = arith.mulf %560, %537 : vector<8x32xf32>
    %568 = arith.mulf %555, %566 : vector<8x32xf32>
    %569 = arith.addf %567, %568 : vector<8x32xf32>
    %570 = math.tanh %569 : vector<8x32xf32>
    %571 = arith.mulf %565, %570 : vector<8x32xf32>
    %c7_263 = arith.constant 7 : index
    %c0_264 = arith.constant 0 : index
    %c0_265 = arith.constant 0 : index
    %572 = vector.load %arg12[%c7_263, %c0_264, %c0_265] : memref<8x8x32xf32, #tpu.memory_space<vmem>>, vector<1x8x32xf32>
    %573 = vector.shape_cast %572 : vector<1x8x32xf32> to vector<8x32xf32>
    %574 = vector.shape_cast %571 : vector<8x32xf32> to vector<1x8x32xf32>
    tpu.vector_store %arg12[%c7_263, %c0_264, %c0_265], %574 {strides = array<i32>} : memref<8x8x32xf32, #tpu.memory_space<vmem>>, vector<1x8x32xf32>,
    %c0_266 = arith.constant 0 : index
    %c0_267 = arith.constant 0 : index
    %575 = vector.load %arg8[%c0_266, %c0_267] : memref<32x8xf32, #tpu.memory_space<vmem>>, vector<32x8xf32>
    %cst_268 = arith.constant dense<0.000000e+00> : vector<8x8xf32>
    %576 = tpu.matmul %571, %575, %cst_268 {dimension_numbers = #tpu.dot_dimension_numbers<[1], [0], [0], [1], [0, 0, 1, 1], [], []>} : vector<8x32xf32>, vector<32x8xf32>, vector<8x8xf32> -> vector<8x8xf32>
    %c0_269 = arith.constant 0 : index
    %c0_270 = arith.constant 0 : index
    %577 = vector.load %arg9[%c0_269, %c0_270] : memref<1x8xf32, #tpu.memory_space<vmem>>, vector<1x8xf32>
    %578 = vector.broadcast %577 : vector<1x8xf32> to vector<8x8xf32>
    %579 = arith.addf %576, %578 : vector<8x8xf32>
    %c0_271 = arith.constant 0 : index
    %c0_272 = arith.constant 0 : index
    %580 = vector.load %arg10[%c0_271, %c0_272] : memref<8x8xf32, #tpu.memory_space<vmem>>, vector<8x8xf32>
    tpu.vector_store %arg10[%c0_271, %c0_272], %579 {strides = array<i32>} : memref<8x8xf32, #tpu.memory_space<vmem>>, vector<8x8xf32>,
    return
  }
  func.func @transform_0(%arg0: i32) -> (i32, i32, i32) {
    %c0_i32 = arith.constant 0 : i32
    %c0_i32_0 = arith.constant 0 : i32
    %c0_i32_1 = arith.constant 0 : i32
    %c0_i32_2 = arith.constant 0 : i32
    return %c0_i32, %c0_i32_0, %c0_i32_1 : i32, i32, i32
  }
  func.func @transform_1(%arg0: i32) -> (i32, i32) {
    %c0_i32 = arith.constant 0 : i32
    %c0_i32_0 = arith.constant 0 : i32
    %c0_i32_1 = arith.constant 0 : i32
    return %c0_i32, %c0_i32_0 : i32, i32
  }
  func.func @transform_2(%arg0: i32) -> (i32, i32) {
    %c0_i32 = arith.constant 0 : i32
    %c0_i32_0 = arith.constant 0 : i32
    %c0_i32_1 = arith.constant 0 : i32
    return %c0_i32, %c0_i32_0 : i32, i32
  }
  func.func @transform_3(%arg0: i32) -> (i32, i32) {
    %c0_i32 = arith.constant 0 : i32
    %c0_i32_0 = arith.constant 0 : i32
    %c0_i32_1 = arith.constant 0 : i32
    return %c0_i32, %c0_i32_0 : i32, i32
  }
  func.func @transform_4(%arg0: i32) -> (i32, i32) {
    %c0_i32 = arith.constant 0 : i32
    %c0_i32_0 = arith.constant 0 : i32
    %c0_i32_1 = arith.constant 0 : i32
    return %c0_i32, %c0_i32_0 : i32, i32
  }
  func.func @transform_5(%arg0: i32) -> (i32, i32) {
    %c0_i32 = arith.constant 0 : i32
    %c0_i32_0 = arith.constant 0 : i32
    %c0_i32_1 = arith.constant 0 : i32
    return %c0_i32, %c0_i32_0 : i32, i32
  }
  func.func @transform_6(%arg0: i32) -> (i32, i32) {
    %c0_i32 = arith.constant 0 : i32
    %c0_i32_0 = arith.constant 0 : i32
    %c0_i32_1 = arith.constant 0 : i32
    return %c0_i32, %c0_i32_0 : i32, i32
  }
  func.func @transform_7(%arg0: i32) -> (i32, i32) {
    %c0_i32 = arith.constant 0 : i32
    %c0_i32_0 = arith.constant 0 : i32
    %c0_i32_1 = arith.constant 0 : i32
    return %c0_i32, %c0_i32_0 : i32, i32
  }
  func.func @transform_8(%arg0: i32) -> (i32, i32) {
    %c0_i32 = arith.constant 0 : i32
    %c0_i32_0 = arith.constant 0 : i32
    %c0_i32_1 = arith.constant 0 : i32
    return %c0_i32, %c0_i32_0 : i32, i32
  }
  func.func @transform_9(%arg0: i32) -> (i32, i32) {
    %c0_i32 = arith.constant 0 : i32
    %c0_i32_0 = arith.constant 0 : i32
    %c0_i32_1 = arith.constant 0 : i32
    return %c0_i32, %c0_i32_0 : i32, i32
  }
}

</mosaic_0001>

<llo_original>
// kernel: lstm_model_forward.1
$region0: #{lstm_model_forward.1}
  #allocation0 [shape = 'u32[]', space=smem, size = 0x4, offset = 0x4, fixed_abs, tag = 'smem constant byte address 0x4 - core index']
  #allocation1 [shape = 'u32[144,128]{1,0:T(1,128)}', space=vmem, size = 0x12000, scoped, tag = 'internal scratch']
  #allocation2 [shape = 'f32[8,8,128]{2,1,0:T(8,128)}', space=vmem, size = 0x8000, scoped, tag = 'scratch operand']
  #allocation3 [shape = 'f32[8,8,32]{2,1,0:T(8,128)}', space=vmem, size = 0x8000, scoped, tag = 'scratch operand']
  %s0 = inlined_call_operand.vmem [shape: f32[8,8,16], index: 0, kind: input, shape index: {}]
  %s1 = inlined_call_operand.vmem [shape: f32[16,128], index: 1, kind: input, shape index: {}]
  %s2 = inlined_call_operand.vmem [shape: f32[32,128], index: 2, kind: input, shape index: {}]
  %s3 = inlined_call_operand.vmem [shape: f32[1,128], index: 3, kind: input, shape index: {}]
  %s4 = inlined_call_operand.vmem [shape: f32[32,128], index: 4, kind: input, shape index: {}]
  %s5 = inlined_call_operand.vmem [shape: f32[32,128], index: 5, kind: input, shape index: {}]
  %s6 = inlined_call_operand.vmem [shape: f32[1,128], index: 6, kind: input, shape index: {}]
  %s7 = inlined_call_operand.vmem [shape: f32[32,8], index: 7, kind: input, shape index: {}]
  %s8 = inlined_call_operand.hbm [shape: f32[1,8], index: 8, kind: input, shape index: {}]
  %s9 = inlined_call_operand.vmem [shape: f32[8,8], index: 9, kind: output, shape index: {}]
  %s10 = sld [smem:[#allocation0]]
  $region50: #{lstm_model_forward.1} parent=0
    _
  %s12 = ssub.s32 1, %s10
  %s13 = scalar_select 0, %s12, %s10
  $region1: #{lstm_model_forward.1} parent=0
    #allocation4 [shape = 'u8[512]{0}', space=vmem, size = 0x400, scoped, tag = 'input window, operand 8, single buffered']
    #allocation5 [shape = 's32[1]{0}', space=sflag, size = 0x4, scoped, tag = 'scoped memory for lstm_model_forward.1']
    %14 = vsyncpa [#allocation5], 0
    // Predicated region
    $region2: #{lstm_model_forward.1} parent=1 // pred_check
      _
    $region3: #{lstm_model_forward.1} parent=1 // pred_check_branch
      %16 = sbr.rel (0) target = $region5
    $region4: #{lstm_model_forward.1} parent=1 // pred_region
      _
    $region5: #{lstm_model_forward.1} parent=1 // pred_fallthru
      _
    // Predicated region
    $region6: #{lstm_model_forward.1} parent=1 // pred_check
      _
    $region7: #{lstm_model_forward.1} parent=1 // pred_check_branch
      %18 = sbr.rel (0) target = $region9
    $region8: #{lstm_model_forward.1} parent=1 // pred_region
      _
    $region9: #{lstm_model_forward.1} parent=1 // pred_fallthru
      _
    // Predicated region
    $region10: #{lstm_model_forward.1} parent=1 // pred_check
      _
    $region11: #{lstm_model_forward.1} parent=1 // pred_check_branch
      %20 = sbr.rel (0) target = $region13
    $region12: #{lstm_model_forward.1} parent=1 // pred_region
      _
    $region13: #{lstm_model_forward.1} parent=1 // pred_fallthru
      _
    // Predicated region
    $region14: #{lstm_model_forward.1} parent=1 // pred_check
      _
    $region15: #{lstm_model_forward.1} parent=1 // pred_check_branch
      %22 = sbr.rel (0) target = $region17
    $region16: #{lstm_model_forward.1} parent=1 // pred_region
      _
    $region17: #{lstm_model_forward.1} parent=1 // pred_fallthru
      _
    // Predicated region
    $region18: #{lstm_model_forward.1} parent=1 // pred_check
      _
    $region19: #{lstm_model_forward.1} parent=1 // pred_check_branch
      %24 = sbr.rel (0) target = $region21
    $region20: #{lstm_model_forward.1} parent=1 // pred_region
      _
    $region21: #{lstm_model_forward.1} parent=1 // pred_fallthru
      _
    // Predicated region
    $region22: #{lstm_model_forward.1} parent=1 // pred_check
      _
    $region23: #{lstm_model_forward.1} parent=1 // pred_check_branch
      %26 = sbr.rel (0) target = $region25
    $region24: #{lstm_model_forward.1} parent=1 // pred_region
      _
    $region25: #{lstm_model_forward.1} parent=1 // pred_fallthru
      _
    // Predicated region
    $region26: #{lstm_model_forward.1} parent=1 // pred_check
      _
    $region27: #{lstm_model_forward.1} parent=1 // pred_check_branch
      %28 = sbr.rel (0) target = $region29
    $region28: #{lstm_model_forward.1} parent=1 // pred_region
      _
    $region29: #{lstm_model_forward.1} parent=1 // pred_fallthru
      _
    // Predicated region
    $region30: #{lstm_model_forward.1} parent=1 // pred_check
      _
    $region31: #{lstm_model_forward.1} parent=1 // pred_check_branch
      %30 = sbr.rel (0) target = $region33
    $region32: #{lstm_model_forward.1} parent=1 // pred_region
      _
    $region33: #{lstm_model_forward.1} parent=1 // pred_fallthru
      _
    // Predicated region
    $region34: #{lstm_model_forward.1} parent=1 // pred_check
      _
    $region35: #{lstm_model_forward.1} parent=1 // pred_check_branch
      %32 = sbr.rel (0) target = $region37
    $region36: #{lstm_model_forward.1} parent=1 // pred_region
      %s34 = ssub.s32 16, 16
      %35 = vsyncadd [#allocation5], %s34
      %s37 = sshll.u32 [#allocation4], 4
      %s38 = int_to_ptr.vmem [resolvable:$true] %s37
      %40 = dma.hbm_to_vmem [thread:$0]  %s8, 16, %s38, [#allocation5]
    $region37: #{lstm_model_forward.1} parent=1 // pred_fallthru
      _
    // Predicated region
    $region38: #{lstm_model_forward.1} parent=1 // pred_check
      _
    $region39: #{lstm_model_forward.1} parent=1 // pred_check_branch
      %42 = sbr.rel (0) target = $region41
    $region40: #{lstm_model_forward.1} parent=1 // pred_region
      %43 = dma.done [#allocation5], 16
    $region41: #{lstm_model_forward.1} parent=1 // pred_fallthru
      _
    %v44 = vld [vmem:[%s1] sm:$0xff]
    %v45 = vld [vmem:[%s1 + $0x8] sm:$0xff]
    %v46 = vld [vmem:[%s2] sm:$0xff]
    %v47 = vld [vmem:[%s2 + $0x8] sm:$0xff]
    %v48 = vld [vmem:[%s2 + $0x10] sm:$0xff]
    %v49 = vld [vmem:[%s2 + $0x18] sm:$0xff]
    %v50 = vld [vmem:[%s3] sm:$0x1]
    %v51 = vld [vmem:[%s0] sm:$0xff]
    %v52 = vld [vmem:[%s0 + $0x8] sm:$0xff]
    %v53 = vld [vmem:[%s0 + $0x10] sm:$0xff]
    %v54 = vld [vmem:[%s0 + $0x18] sm:$0xff]
    %v55 = vld [vmem:[%s0 + $0x20] sm:$0xff]
    %v56 = vld [vmem:[%s0 + $0x28] sm:$0xff]
    %v57 = vld [vmem:[%s0 + $0x30] sm:$0xff]
    %v58 = vld [vmem:[%s0 + $0x38] sm:$0xff]
    %v60 = vlaneseq
    %v61 = vshrl.u32 %v60, 7
    %v62 = vsub.s32 0, %v61
    %v63 = vrot.slane %v50, %v62
    %vm65 = vcmask 130048
    %v67 = vsel %vm65, %v51, 0
    %v70 = vsel %vm65, %v52, 0
    %v73 = vsel %vm65, %v53, 0
    %v76 = vsel %vm65, %v54, 0
    %v79 = vsel %vm65, %v55, 0
    %v82 = vsel %vm65, %v56, 0
    %v85 = vsel %vm65, %v57, 0
    %v88 = vsel %vm65, %v58, 0
    %90 = vmatprep.subr.mxu0 0.0
    %91 = vmatpush1.msra.mxu0 0.0
    %92 = vmatprep.subr.mxu0 0.0
    %93 = vmatpush1.msra.mxu0 0.0
    %94 = vmatprep.subr.mxu0 0.0
    %95 = vmatpush1.msra.mxu0 0.0
    %96 = vmatprep.subr.mxu0 0.0
    %97 = vmatpush1.msra.mxu0 0.0
    %98 = vmatprep.subr.mxu0 0.0
    %99 = vmatpush1.msra.mxu0 0.0
    %100 = vmatprep.subr.mxu0 0.0
    %101 = vmatpush1.msra.mxu0 0.0
    %102 = vmatprep.subr.mxu0 0.0
    %103 = vmatpush1.msra.mxu0 0.0
    %104 = vmatprep.subr.mxu0 0.0
    %105 = vmatpush1.msra.mxu0 0.0
    %106 = vmatprep.subr.mxu0 0.0
    %107 = vmatpush1.msra.mxu0 0.0
    %108 = vmatprep.subr.mxu0 0.0
    %109 = vmatpush1.msra.mxu0 0.0
    %110 = vmatprep.subr.mxu0 0.0
    %111 = vmatpush1.msra.mxu0 0.0
    %112 = vmatprep.subr.mxu0 0.0
    %113 = vmatpush1.msra.mxu0 0.0
    %114 = vmatprep.subr.mxu0 0.0
    %115 = vmatpush1.msra.mxu0 0.0
    %116 = vmatprep.subr.mxu0 0.0
    %117 = vmatpush1.msra.mxu0 0.0
    %118 = vmatprep.subr.mxu0 0.0
    %119 = vmatpush1.msra.mxu0 %v45
    %120 = vmatprep.subr.mxu0 0.0
    %121 = vmatpush1.msra.mxu0 %v44
    %122 = vmatprep.subr.mxu0 0.0
    %123 = vmatpush2.msra.mxu0 0.0
    %124 = vmatprep.subr.mxu0 0.0
    %125 = vmatpush2.msra.mxu0 0.0
    %126 = vmatprep.subr.mxu0 0.0
    %127 = vmatpush2.msra.mxu0 0.0
    %128 = vmatprep.subr.mxu0 0.0
    %129 = vmatpush2.msra.mxu0 0.0
    %130 = vmatprep.subr.mxu0 0.0
    %131 = vmatpush2.msra.mxu0 0.0
    %132 = vmatprep.subr.mxu0 0.0
    %133 = vmatpush2.msra.mxu0 0.0
    %134 = vmatprep.subr.mxu0 0.0
    %135 = vmatpush2.msra.mxu0 0.0
    %136 = vmatprep.subr.mxu0 0.0
    %137 = vmatpush2.msra.mxu0 0.0
    %138 = vmatprep.subr.mxu0 0.0
    %139 = vmatpush2.msra.mxu0 0.0
    %140 = vmatprep.subr.mxu0 0.0
    %141 = vmatpush2.msra.mxu0 0.0
    %142 = vmatprep.subr.mxu0 0.0
    %143 = vmatpush2.msra.mxu0 0.0
    %144 = vmatprep.subr.mxu0 0.0
    %145 = vmatpush2.msra.mxu0 0.0
    %146 = vmatprep.subr.mxu0 0.0
    %147 = vmatpush2.msra.mxu0 0.0
    %148 = vmatprep.subr.mxu0 0.0
    %149 = vmatpush2.msra.mxu0 0.0
    %150 = vmatprep.subr.mxu0 0.0
    %151 = vmatpush2.msra.mxu0 0.0
    %152 = vmatprep.subr.mxu0 0.0
    %153 = vmatpush2.msra.mxu0 0.0
    %154 = vmatprep.mubr.f32.mxu0 0.0
    %155 = vmatmul.mubr.f32.gmra.mxu0 %v67
    %v156 = vpop.f32.mrf.mxu0
    %v157 = vadd.f32 %v63, %v156
    %v158 = vpop.f32.mrf.mxu0
    %159 = vmatprep.mubr.f32.mxu0 0.0
    %160 = vmatmul.mubr.f32.gmra.mxu0 %v70
    %v161 = vpop.f32.mrf.mxu0
    %v162 = vadd.f32 %v63, %v161
    %v163 = vpop.f32.mrf.mxu0
    %164 = vmatprep.mubr.f32.mxu0 0.0
    %165 = vmatmul.mubr.f32.gmra.mxu0 %v73
    %v166 = vpop.f32.mrf.mxu0
    %v167 = vadd.f32 %v63, %v166
    %v168 = vpop.f32.mrf.mxu0
    %169 = vmatprep.mubr.f32.mxu0 0.0
    %170 = vmatmul.mubr.f32.gmra.mxu0 %v76
    %v171 = vpop.f32.mrf.mxu0
    %v172 = vadd.f32 %v63, %v171
    %v173 = vpop.f32.mrf.mxu0
    %174 = vmatprep.mubr.f32.mxu0 0.0
    %175 = vmatmul.mubr.f32.gmra.mxu0 %v79
    %v176 = vpop.f32.mrf.mxu0
    %v177 = vadd.f32 %v63, %v176
    %v178 = vpop.f32.mrf.mxu0
    %179 = vmatprep.mubr.f32.mxu0 0.0
    %180 = vmatmul.mubr.f32.gmra.mxu0 %v82
    %v181 = vpop.f32.mrf.mxu0
    %v182 = vadd.f32 %v63, %v181
    %v183 = vpop.f32.mrf.mxu0
    %184 = vmatprep.mubr.f32.mxu0 0.0
    %185 = vmatmul.mubr.f32.gmra.mxu0 %v85
    %v186 = vpop.f32.mrf.mxu0
    %v187 = vadd.f32 %v63, %v186
    %v188 = vpop.f32.mrf.mxu0
    %189 = vmatprep.mubr.f32.mxu0 0.0
    %190 = vmatmul.mubr.f32.gmra.mxu0 %v88
    %v191 = vpop.f32.mrf.mxu0
    %v192 = vadd.f32 %v63, %v191
    %v193 = vpop.f32.mrf.mxu0
    %194 = vdwg.mxu0
    %v203 = vrot.slane %v162, 7
    %vm204 = vcmask 1041409
    %v205 = vsel %vm204, %v203, %v157
    %v206 = vrot.slane %v167, 6
    %vm207 = vcmask 1042434
    %v208 = vsel %vm207, %v206, %v205
    %v209 = vrot.slane %v172, 5
    %vm210 = vcmask 1043459
    %v211 = vsel %vm210, %v209, %v208
    %v212 = vrot.slane %v177, 4
    %vm213 = vcmask 1044484
    %v214 = vsel %vm213, %v212, %v211
    %v215 = vrot.slane %v182, 3
    %vm216 = vcmask 1045509
    %v217 = vsel %vm216, %v215, %v214
    %v218 = vrot.slane %v187, 2
    %vm219 = vcmask 1046534
    %v220 = vsel %vm219, %v218, %v217
    %v221 = vrot.slane %v192, 1
    %vm222 = vcmask 1047559
    %v223 = vsel %vm222, %v221, %v220
    %225 = vst [vmem:[#allocation2] sm:$0xff] %v223
    %v226 = vsel %vm207, %v203, %v157
    %v227 = vsel %vm210, %v206, %v226
    %v228 = vsel %vm213, %v209, %v227
    %v229 = vsel %vm216, %v212, %v228
    %v230 = vsel %vm219, %v215, %v229
    %v231 = vsel %vm222, %v218, %v230
    %s234 = scalar_lea.vmem [#allocation2], 8
    %235 = vst [vmem:[%s234 - $0x1] sm:$0xfe] %v231
    %236 = vst [vmem:[%s234 + $0x7] sm:$0x1] %v221
    %v237 = vsel %vm210, %v203, %v157
    %v238 = vsel %vm213, %v206, %v237
    %v239 = vsel %vm216, %v209, %v238
    %v240 = vsel %vm219, %v212, %v239
    %v241 = vsel %vm222, %v215, %v240
    %v242 = vsel %vm204, %v221, %v218
    %s245 = scalar_lea.vmem [#allocation2], 16
    %246 = vst [vmem:[%s245 - $0x2] sm:$0xfc] %v241
    %247 = vst [vmem:[%s245 + $0x6] sm:$0x3] %v242
    %v248 = vsel %vm213, %v203, %v157
    %v249 = vsel %vm216, %v206, %v248
    %v250 = vsel %vm219, %v209, %v249
    %v251 = vsel %vm222, %v212, %v250
    %v252 = vsel %vm204, %v218, %v215
    %v253 = vsel %vm207, %v221, %v252
    %s256 = scalar_lea.vmem [#allocation2], 24
    %257 = vst [vmem:[%s256 - $0x3] sm:$0xf8] %v251
    %258 = vst [vmem:[%s256 + $0x5] sm:$0x7] %v253
    %v259 = vsel %vm216, %v203, %v157
    %v260 = vsel %vm219, %v206, %v259
    %v261 = vsel %vm222, %v209, %v260
    %v262 = vsel %vm204, %v215, %v212
    %v263 = vsel %vm207, %v218, %v262
    %v264 = vsel %vm210, %v221, %v263
    %s267 = scalar_lea.vmem [#allocation2], 32
    %268 = vst [vmem:[%s267 - $0x4] sm:$0xf0] %v261
    %269 = vst [vmem:[%s267 + $0x4] sm:$0xf] %v264
    %v270 = vsel %vm219, %v203, %v157
    %v271 = vsel %vm222, %v206, %v270
    %v272 = vsel %vm204, %v212, %v209
    %v273 = vsel %vm207, %v215, %v272
    %v274 = vsel %vm210, %v218, %v273
    %v275 = vsel %vm213, %v221, %v274
    %s278 = scalar_lea.vmem [#allocation2], 40
    %279 = vst [vmem:[%s278 - $0x5] sm:$0xe0] %v271
    %280 = vst [vmem:[%s278 + $0x3] sm:$0x1f] %v275
    %v281 = vsel %vm222, %v203, %v157
    %v282 = vsel %vm204, %v209, %v206
    %v283 = vsel %vm207, %v212, %v282
    %v284 = vsel %vm210, %v215, %v283
    %v285 = vsel %vm213, %v218, %v284
    %v286 = vsel %vm216, %v221, %v285
    %s289 = scalar_lea.vmem [#allocation2], 48
    %290 = vst [vmem:[%s289 - $0x6] sm:$0xc0] %v281
    %291 = vst [vmem:[%s289 + $0x2] sm:$0x3f] %v286
    %v292 = vsel %vm204, %v206, %v203
    %v293 = vsel %vm207, %v209, %v292
    %v294 = vsel %vm210, %v212, %v293
    %v295 = vsel %vm213, %v215, %v294
    %v296 = vsel %vm216, %v218, %v295
    %v297 = vsel %vm219, %v221, %v296
    %s300 = scalar_lea.vmem [#allocation2], 56
    %301 = vst [vmem:[%s300 - $0x7] sm:$0x80] %v157
    %302 = vst [vmem:[%s300 + $0x1] sm:$0x7f] %v297
    %v303 = vld [vmem:[#allocation2] sm:$0xff]
    %vm304 = vcmask 261120
    %v306 = vsel %vm304, 0.0, 0
    %308 = vmatprep.subr.mxu0 0.0
    %309 = vmatpush1.msra.mxu0 0.0
    %310 = vmatprep.subr.mxu0 0.0
    %311 = vmatpush1.msra.mxu0 0.0
    %312 = vmatprep.subr.mxu0 0.0
    %313 = vmatpush1.msra.mxu0 0.0
    %314 = vmatprep.subr.mxu0 0.0
    %315 = vmatpush1.msra.mxu0 0.0
    %316 = vmatprep.subr.mxu0 0.0
    %317 = vmatpush1.msra.mxu0 0.0
    %318 = vmatprep.subr.mxu0 0.0
    %319 = vmatpush1.msra.mxu0 0.0
    %320 = vmatprep.subr.mxu0 0.0
    %321 = vmatpush1.msra.mxu0 0.0
    %322 = vmatprep.subr.mxu0 0.0
    %323 = vmatpush1.msra.mxu0 0.0
    %324 = vmatprep.subr.mxu0 0.0
    %325 = vmatpush1.msra.mxu0 0.0
    %326 = vmatprep.subr.mxu0 0.0
    %327 = vmatpush1.msra.mxu0 0.0
    %328 = vmatprep.subr.mxu0 0.0
    %329 = vmatpush1.msra.mxu0 0.0
    %330 = vmatprep.subr.mxu0 0.0
    %331 = vmatpush1.msra.mxu0 0.0
    %332 = vmatprep.subr.mxu0 0.0
    %333 = vmatpush1.msra.mxu0 %v49
    %334 = vmatprep.subr.mxu0 0.0
    %335 = vmatpush1.msra.mxu0 %v48
    %336 = vmatprep.subr.mxu0 0.0
    %337 = vmatpush1.msra.mxu0 %v47
    %338 = vmatprep.subr.mxu0 0.0
    %339 = vmatpush1.msra.mxu0 %v46
    %340 = vmatprep.subr.mxu0 0.0
    %341 = vmatpush2.msra.mxu0 0.0
    %342 = vmatprep.subr.mxu0 0.0
    %343 = vmatpush2.msra.mxu0 0.0
    %344 = vmatprep.subr.mxu0 0.0
    %345 = vmatpush2.msra.mxu0 0.0
    %346 = vmatprep.subr.mxu0 0.0
    %347 = vmatpush2.msra.mxu0 0.0
    %348 = vmatprep.subr.mxu0 0.0
    %349 = vmatpush2.msra.mxu0 0.0
    %350 = vmatprep.subr.mxu0 0.0
    %351 = vmatpush2.msra.mxu0 0.0
    %352 = vmatprep.subr.mxu0 0.0
    %353 = vmatpush2.msra.mxu0 0.0
    %354 = vmatprep.subr.mxu0 0.0
    %355 = vmatpush2.msra.mxu0 0.0
    %356 = vmatprep.subr.mxu0 0.0
    %357 = vmatpush2.msra.mxu0 0.0
    %358 = vmatprep.subr.mxu0 0.0
    %359 = vmatpush2.msra.mxu0 0.0
    %360 = vmatprep.subr.mxu0 0.0
    %361 = vmatpush2.msra.mxu0 0.0
    %362 = vmatprep.subr.mxu0 0.0
    %363 = vmatpush2.msra.mxu0 0.0
    %364 = vmatprep.subr.mxu0 0.0
    %365 = vmatpush2.msra.mxu0 0.0
    %366 = vmatprep.subr.mxu0 0.0
    %367 = vmatpush2.msra.mxu0 0.0
    %368 = vmatprep.subr.mxu0 0.0
    %369 = vmatpush2.msra.mxu0 0.0
    %370 = vmatprep.subr.mxu0 0.0
    %371 = vmatpush2.msra.mxu0 0.0
    %372 = vmatprep.mubr.f32.mxu0 0.0
    %373 = vmatmul.mubr.f32.gmra.mxu0 %v306
    %v374 = vpop.f32.mrf.mxu0
    %v375 = vadd.f32 0.0, %v374
    %v376 = vpop.f32.mrf.mxu0
    %377 = vdwg.mxu0
    %v378 = vadd.f32 %v303, %v375
    %v379 = vmul.f32 %v378, 0.5
    %v380 = vtanh.pop %v379
    %v381 = vtanh.pop %v378
    %v382 = vmul.f32 %v380, 0.5
    %v383 = vadd.f32 %v382, 0.5
    %v384 = vmul.f32 %v383, 0.0
    %386 = vrot.lane.b32.xlu0 %v381, 64
    %v387 = vpop.permute.xlu0 %386
    %v389 = vmul.f32 %v383, %v387
    %391 = vrot.lane.b32.xlu0 %v389, 32
    %v392 = vpop.permute.xlu0 %391
    %v394 = vadd.f32 %v384, %v392
    %v395 = vtanh.pop %v394
    %397 = vrot.lane.b32.xlu0 %v395, 64
    %v398 = vpop.permute.xlu0 %397
    %v400 = vmul.f32 %v383, %v398
    %402 = vrot.lane.b32.xlu0 %v400, 32
    %v403 = vpop.permute.xlu0 %402
    %405 = vst.msk [vmem:[#allocation3] sm:$0xff] %vm304, %v403
    %v406 = vld [vmem:[%s234] sm:$0xff]
    %v407 = vsel %vm304, %v403, 0
    %409 = vmatprep.subr.mxu0 0.0
    %410 = vmatpush1.msra.mxu0 0.0
    %411 = vmatprep.subr.mxu0 0.0
    %412 = vmatpush1.msra.mxu0 0.0
    %413 = vmatprep.subr.mxu0 0.0
    %414 = vmatpush1.msra.mxu0 0.0
    %415 = vmatprep.subr.mxu0 0.0
    %416 = vmatpush1.msra.mxu0 0.0
    %417 = vmatprep.subr.mxu0 0.0
    %418 = vmatpush1.msra.mxu0 0.0
    %419 = vmatprep.subr.mxu0 0.0
    %420 = vmatpush1.msra.mxu0 0.0
    %421 = vmatprep.subr.mxu0 0.0
    %422 = vmatpush1.msra.mxu0 0.0
    %423 = vmatprep.subr.mxu0 0.0
    %424 = vmatpush1.msra.mxu0 0.0
    %425 = vmatprep.subr.mxu0 0.0
    %426 = vmatpush1.msra.mxu0 0.0
    %427 = vmatprep.subr.mxu0 0.0
    %428 = vmatpush1.msra.mxu0 0.0
    %429 = vmatprep.subr.mxu0 0.0
    %430 = vmatpush1.msra.mxu0 0.0
    %431 = vmatprep.subr.mxu0 0.0
    %432 = vmatpush1.msra.mxu0 0.0
    %433 = vmatprep.subr.mxu0 0.0
    %434 = vmatpush1.msra.mxu0 %v49
    %435 = vmatprep.subr.mxu0 0.0
    %436 = vmatpush1.msra.mxu0 %v48
    %437 = vmatprep.subr.mxu0 0.0
    %438 = vmatpush1.msra.mxu0 %v47
    %439 = vmatprep.subr.mxu0 0.0
    %440 = vmatpush1.msra.mxu0 %v46
    %441 = vmatprep.subr.mxu0 0.0
    %442 = vmatpush2.msra.mxu0 0.0
    %443 = vmatprep.subr.mxu0 0.0
    %444 = vmatpush2.msra.mxu0 0.0
    %445 = vmatprep.subr.mxu0 0.0
    %446 = vmatpush2.msra.mxu0 0.0
    %447 = vmatprep.subr.mxu0 0.0
    %448 = vmatpush2.msra.mxu0 0.0
    %449 = vmatprep.subr.mxu0 0.0
    %450 = vmatpush2.msra.mxu0 0.0
    %451 = vmatprep.subr.mxu0 0.0
    %452 = vmatpush2.msra.mxu0 0.0
    %453 = vmatprep.subr.mxu0 0.0
    %454 = vmatpush2.msra.mxu0 0.0
    %455 = vmatprep.subr.mxu0 0.0
    %456 = vmatpush2.msra.mxu0 0.0
    %457 = vmatprep.subr.mxu0 0.0
    %458 = vmatpush2.msra.mxu0 0.0
    %459 = vmatprep.subr.mxu0 0.0
    %460 = vmatpush2.msra.mxu0 0.0
    %461 = vmatprep.subr.mxu0 0.0
    %462 = vmatpush2.msra.mxu0 0.0
    %463 = vmatprep.subr.mxu0 0.0
    %464 = vmatpush2.msra.mxu0 0.0
    %465 = vmatprep.subr.mxu0 0.0
    %466 = vmatpush2.msra.mxu0 0.0
    %467 = vmatprep.subr.mxu0 0.0
    %468 = vmatpush2.msra.mxu0 0.0
    %469 = vmatprep.subr.mxu0 0.0
    %470 = vmatpush2.msra.mxu0 0.0
    %471 = vmatprep.subr.mxu0 0.0
    %472 = vmatpush2.msra.mxu0 0.0
    %473 = vmatprep.mubr.f32.mxu0 0.0
    %474 = vmatmul.mubr.f32.gmra.mxu0 %v407
    %v475 = vpop.f32.mrf.mxu0
    %v476 = vadd.f32 0.0, %v475
    %v477 = vpop.f32.mrf.mxu0
    %478 = vdwg.mxu0
    %v479 = vadd.f32 %v406, %v476
    %v480 = vmul.f32 %v479, 0.5
    %v481 = vtanh.pop %v480
    %v482 = vtanh.pop %v479
    %v483 = vmul.f32 %v481, 0.5
    %v484 = vadd.f32 %v483, 0.5
    %v485 = vmul.f32 %v484, %v394
    %487 = vrot.lane.b32.xlu0 %v482, 64
    %v488 = vpop.permute.xlu0 %487
    %v490 = vmul.f32 %v484, %v488
    %492 = vrot.lane.b32.xlu0 %v490, 32
    %v493 = vpop.permute.xlu0 %492
    %v495 = vadd.f32 %v485, %v493
    %v496 = vtanh.pop %v495
    %498 = vrot.lane.b32.xlu0 %v496, 64
    %v499 = vpop.permute.xlu0 %498
    %v501 = vmul.f32 %v484, %v499
    %503 = vrot.lane.b32.xlu0 %v501, 32
    %v504 = vpop.permute.xlu0 %503
    %s506 = scalar_lea.vmem [#allocation3], 8
    %507 = vst.msk [vmem:[%s506] sm:$0xff] %vm304, %v504
    %v508 = vld [vmem:[%s245] sm:$0xff]
    %v509 = vsel %vm304, %v504, 0
    %511 = vmatprep.subr.mxu0 0.0
    %512 = vmatpush1.msra.mxu0 0.0
    %513 = vmatprep.subr.mxu0 0.0
    %514 = vmatpush1.msra.mxu0 0.0
    %515 = vmatprep.subr.mxu0 0.0
    %516 = vmatpush1.msra.mxu0 0.0
    %517 = vmatprep.subr.mxu0 0.0
    %518 = vmatpush1.msra.mxu0 0.0
    %519 = vmatprep.subr.mxu0 0.0
    %520 = vmatpush1.msra.mxu0 0.0
    %521 = vmatprep.subr.mxu0 0.0
    %522 = vmatpush1.msra.mxu0 0.0
    %523 = vmatprep.subr.mxu0 0.0
    %524 = vmatpush1.msra.mxu0 0.0
    %525 = vmatprep.subr.mxu0 0.0
    %526 = vmatpush1.msra.mxu0 0.0
    %527 = vmatprep.subr.mxu0 0.0
    %528 = vmatpush1.msra.mxu0 0.0
    %529 = vmatprep.subr.mxu0 0.0
    %530 = vmatpush1.msra.mxu0 0.0
    %531 = vmatprep.subr.mxu0 0.0
    %532 = vmatpush1.msra.mxu0 0.0
    %533 = vmatprep.subr.mxu0 0.0
    %534 = vmatpush1.msra.mxu0 0.0
    %535 = vmatprep.subr.mxu0 0.0
    %536 = vmatpush1.msra.mxu0 %v49
    %537 = vmatprep.subr.mxu0 0.0
    %538 = vmatpush1.msra.mxu0 %v48
    %539 = vmatprep.subr.mxu0 0.0
    %540 = vmatpush1.msra.mxu0 %v47
    %541 = vmatprep.subr.mxu0 0.0
    %542 = vmatpush1.msra.mxu0 %v46
    %543 = vmatprep.subr.mxu0 0.0
    %544 = vmatpush2.msra.mxu0 0.0
    %545 = vmatprep.subr.mxu0 0.0
    %546 = vmatpush2.msra.mxu0 0.0
    %547 = vmatprep.subr.mxu0 0.0
    %548 = vmatpush2.msra.mxu0 0.0
    %549 = vmatprep.subr.mxu0 0.0
    %550 = vmatpush2.msra.mxu0 0.0
    %551 = vmatprep.subr.mxu0 0.0
    %552 = vmatpush2.msra.mxu0 0.0
    %553 = vmatprep.subr.mxu0 0.0
    %554 = vmatpush2.msra.mxu0 0.0
    %555 = vmatprep.subr.mxu0 0.0
    %556 = vmatpush2.msra.mxu0 0.0
    %557 = vmatprep.subr.mxu0 0.0
    %558 = vmatpush2.msra.mxu0 0.0
    %559 = vmatprep.subr.mxu0 0.0
    %560 = vmatpush2.msra.mxu0 0.0
    %561 = vmatprep.subr.mxu0 0.0
    %562 = vmatpush2.msra.mxu0 0.0
    %563 = vmatprep.subr.mxu0 0.0
    %564 = vmatpush2.msra.mxu0 0.0
    %565 = vmatprep.subr.mxu0 0.0
    %566 = vmatpush2.msra.mxu0 0.0
    %567 = vmatprep.subr.mxu0 0.0
    %568 = vmatpush2.msra.mxu0 0.0
    %569 = vmatprep.subr.mxu0 0.0
    %570 = vmatpush2.msra.mxu0 0.0
    %571 = vmatprep.subr.mxu0 0.0
    %572 = vmatpush2.msra.mxu0 0.0
    %573 = vmatprep.subr.mxu0 0.0
    %574 = vmatpush2.msra.mxu0 0.0
    %575 = vmatprep.mubr.f32.mxu0 0.0
    %576 = vmatmul.mubr.f32.gmra.mxu0 %v509
    %v577 = vpop.f32.mrf.mxu0
    %v578 = vadd.f32 0.0, %v577
    %v579 = vpop.f32.mrf.mxu0
    %580 = vdwg.mxu0
    %v581 = vadd.f32 %v508, %v578
    %v582 = vmul.f32 %v581, 0.5
    %v583 = vtanh.pop %v582
    %v584 = vtanh.pop %v581
    %v585 = vmul.f32 %v583, 0.5
    %v586 = vadd.f32 %v585, 0.5
    %v587 = vmul.f32 %v586, %v495
    %589 = vrot.lane.b32.xlu0 %v584, 64
    %v590 = vpop.permute.xlu0 %589
    %v592 = vmul.f32 %v586, %v590
    %594 = vrot.lane.b32.xlu0 %v592, 32
    %v595 = vpop.permute.xlu0 %594
    %v597 = vadd.f32 %v587, %v595
    %v598 = vtanh.pop %v597
    %600 = vrot.lane.b32.xlu0 %v598, 64
    %v601 = vpop.permute.xlu0 %600
    %v603 = vmul.f32 %v586, %v601
    %605 = vrot.lane.b32.xlu0 %v603, 32
    %v606 = vpop.permute.xlu0 %605
    %s608 = scalar_lea.vmem [#allocation3], 16
    %609 = vst.msk [vmem:[%s608] sm:$0xff] %vm304, %v606
    %v610 = vld [vmem:[%s256] sm:$0xff]
    %v611 = vsel %vm304, %v606, 0
    %613 = vmatprep.subr.mxu0 0.0
    %614 = vmatpush1.msra.mxu0 0.0
    %615 = vmatprep.subr.mxu0 0.0
    %616 = vmatpush1.msra.mxu0 0.0
    %617 = vmatprep.subr.mxu0 0.0
    %618 = vmatpush1.msra.mxu0 0.0
    %619 = vmatprep.subr.mxu0 0.0
    %620 = vmatpush1.msra.mxu0 0.0
    %621 = vmatprep.subr.mxu0 0.0
    %622 = vmatpush1.msra.mxu0 0.0
    %623 = vmatprep.subr.mxu0 0.0
    %624 = vmatpush1.msra.mxu0 0.0
    %625 = vmatprep.subr.mxu0 0.0
    %626 = vmatpush1.msra.mxu0 0.0
    %627 = vmatprep.subr.mxu0 0.0
    %628 = vmatpush1.msra.mxu0 0.0
    %629 = vmatprep.subr.mxu0 0.0
    %630 = vmatpush1.msra.mxu0 0.0
    %631 = vmatprep.subr.mxu0 0.0
    %632 = vmatpush1.msra.mxu0 0.0
    %633 = vmatprep.subr.mxu0 0.0
    %634 = vmatpush1.msra.mxu0 0.0
    %635 = vmatprep.subr.mxu0 0.0
    %636 = vmatpush1.msra.mxu0 0.0
    %637 = vmatprep.subr.mxu0 0.0
    %638 = vmatpush1.msra.mxu0 %v49
    %639 = vmatprep.subr.mxu0 0.0
    %640 = vmatpush1.msra.mxu0 %v48
    %641 = vmatprep.subr.mxu0 0.0
    %642 = vmatpush1.msra.mxu0 %v47
    %643 = vmatprep.subr.mxu0 0.0
    %644 = vmatpush1.msra.mxu0 %v46
    %645 = vmatprep.subr.mxu0 0.0
    %646 = vmatpush2.msra.mxu0 0.0
    %647 = vmatprep.subr.mxu0 0.0
    %648 = vmatpush2.msra.mxu0 0.0
    %649 = vmatprep.subr.mxu0 0.0
    %650 = vmatpush2.msra.mxu0 0.0
    %651 = vmatprep.subr.mxu0 0.0
    %652 = vmatpush2.msra.mxu0 0.0
    %653 = vmatprep.subr.mxu0 0.0
    %654 = vmatpush2.msra.mxu0 0.0
    %655 = vmatprep.subr.mxu0 0.0
    %656 = vmatpush2.msra.mxu0 0.0
    %657 = vmatprep.subr.mxu0 0.0
    %658 = vmatpush2.msra.mxu0 0.0
    %659 = vmatprep.subr.mxu0 0.0
    %660 = vmatpush2.msra.mxu0 0.0
    %661 = vmatprep.subr.mxu0 0.0
    %662 = vmatpush2.msra.mxu0 0.0
    %663 = vmatprep.subr.mxu0 0.0
    %664 = vmatpush2.msra.mxu0 0.0
    %665 = vmatprep.subr.mxu0 0.0
    %666 = vmatpush2.msra.mxu0 0.0
    %667 = vmatprep.subr.mxu0 0.0
    %668 = vmatpush2.msra.mxu0 0.0
    %669 = vmatprep.subr.mxu0 0.0
    %670 = vmatpush2.msra.mxu0 0.0
    %671 = vmatprep.subr.mxu0 0.0
    %672 = vmatpush2.msra.mxu0 0.0
    %673 = vmatprep.subr.mxu0 0.0
    %674 = vmatpush2.msra.mxu0 0.0
    %675 = vmatprep.subr.mxu0 0.0
    %676 = vmatpush2.msra.mxu0 0.0
    %677 = vmatprep.mubr.f32.mxu0 0.0
    %678 = vmatmul.mubr.f32.gmra.mxu0 %v611
    %v679 = vpop.f32.mrf.mxu0
    %v680 = vadd.f32 0.0, %v679
    %v681 = vpop.f32.mrf.mxu0
    %682 = vdwg.mxu0
    %v683 = vadd.f32 %v610, %v680
    %v684 = vmul.f32 %v683, 0.5
    %v685 = vtanh.pop %v684
    %v686 = vtanh.pop %v683
    %v687 = vmul.f32 %v685, 0.5
    %v688 = vadd.f32 %v687, 0.5
    %v689 = vmul.f32 %v688, %v597
    %691 = vrot.lane.b32.xlu0 %v686, 64
    %v692 = vpop.permute.xlu0 %691
    %v694 = vmul.f32 %v688, %v692
    %696 = vrot.lane.b32.xlu0 %v694, 32
    %v697 = vpop.permute.xlu0 %696
    %v699 = vadd.f32 %v689, %v697
    %v700 = vtanh.pop %v699
    %702 = vrot.lane.b32.xlu0 %v700, 64
    %v703 = vpop.permute.xlu0 %702
    %v705 = vmul.f32 %v688, %v703
    %707 = vrot.lane.b32.xlu0 %v705, 32
    %v708 = vpop.permute.xlu0 %707
    %s710 = scalar_lea.vmem [#allocation3], 24
    %711 = vst.msk [vmem:[%s710] sm:$0xff] %vm304, %v708
    %v712 = vld [vmem:[%s267] sm:$0xff]
    %v713 = vsel %vm304, %v708, 0
    %715 = vmatprep.subr.mxu0 0.0
    %716 = vmatpush1.msra.mxu0 0.0
    %717 = vmatprep.subr.mxu0 0.0
    %718 = vmatpush1.msra.mxu0 0.0
    %719 = vmatprep.subr.mxu0 0.0
    %720 = vmatpush1.msra.mxu0 0.0
    %721 = vmatprep.subr.mxu0 0.0
    %722 = vmatpush1.msra.mxu0 0.0
    %723 = vmatprep.subr.mxu0 0.0
    %724 = vmatpush1.msra.mxu0 0.0
    %725 = vmatprep.subr.mxu0 0.0
    %726 = vmatpush1.msra.mxu0 0.0
    %727 = vmatprep.subr.mxu0 0.0
    %728 = vmatpush1.msra.mxu0 0.0
    %729 = vmatprep.subr.mxu0 0.0
    %730 = vmatpush1.msra.mxu0 0.0
    %731 = vmatprep.subr.mxu0 0.0
    %732 = vmatpush1.msra.mxu0 0.0
    %733 = vmatprep.subr.mxu0 0.0
    %734 = vmatpush1.msra.mxu0 0.0
    %735 = vmatprep.subr.mxu0 0.0
    %736 = vmatpush1.msra.mxu0 0.0
    %737 = vmatprep.subr.mxu0 0.0
    %738 = vmatpush1.msra.mxu0 0.0
    %739 = vmatprep.subr.mxu0 0.0
    %740 = vmatpush1.msra.mxu0 %v49
    %741 = vmatprep.subr.mxu0 0.0
    %742 = vmatpush1.msra.mxu0 %v48
    %743 = vmatprep.subr.mxu0 0.0
    %744 = vmatpush1.msra.mxu0 %v47
    %745 = vmatprep.subr.mxu0 0.0
    %746 = vmatpush1.msra.mxu0 %v46
    %747 = vmatprep.subr.mxu0 0.0
    %748 = vmatpush2.msra.mxu0 0.0
    %749 = vmatprep.subr.mxu0 0.0
    %750 = vmatpush2.msra.mxu0 0.0
    %751 = vmatprep.subr.mxu0 0.0
    %752 = vmatpush2.msra.mxu0 0.0
    %753 = vmatprep.subr.mxu0 0.0
    %754 = vmatpush2.msra.mxu0 0.0
    %755 = vmatprep.subr.mxu0 0.0
    %756 = vmatpush2.msra.mxu0 0.0
    %757 = vmatprep.subr.mxu0 0.0
    %758 = vmatpush2.msra.mxu0 0.0
    %759 = vmatprep.subr.mxu0 0.0
    %760 = vmatpush2.msra.mxu0 0.0
    %761 = vmatprep.subr.mxu0 0.0
    %762 = vmatpush2.msra.mxu0 0.0
    %763 = vmatprep.subr.mxu0 0.0
    %764 = vmatpush2.msra.mxu0 0.0
    %765 = vmatprep.subr.mxu0 0.0
    %766 = vmatpush2.msra.mxu0 0.0
    %767 = vmatprep.subr.mxu0 0.0
    %768 = vmatpush2.msra.mxu0 0.0
    %769 = vmatprep.subr.mxu0 0.0
    %770 = vmatpush2.msra.mxu0 0.0
    %771 = vmatprep.subr.mxu0 0.0
    %772 = vmatpush2.msra.mxu0 0.0
    %773 = vmatprep.subr.mxu0 0.0
    %774 = vmatpush2.msra.mxu0 0.0
    %775 = vmatprep.subr.mxu0 0.0
    %776 = vmatpush2.msra.mxu0 0.0
    %777 = vmatprep.subr.mxu0 0.0
    %778 = vmatpush2.msra.mxu0 0.0
    %779 = vmatprep.mubr.f32.mxu0 0.0
    %780 = vmatmul.mubr.f32.gmra.mxu0 %v713
    %v781 = vpop.f32.mrf.mxu0
    %v782 = vadd.f32 0.0, %v781
    %v783 = vpop.f32.mrf.mxu0
    %784 = vdwg.mxu0
    %v785 = vadd.f32 %v712, %v782
    %v786 = vmul.f32 %v785, 0.5
    %v787 = vtanh.pop %v786
    %v788 = vtanh.pop %v785
    %v789 = vmul.f32 %v787, 0.5
    %v790 = vadd.f32 %v789, 0.5
    %v791 = vmul.f32 %v790, %v699
    %793 = vrot.lane.b32.xlu0 %v788, 64
    %v794 = vpop.permute.xlu0 %793
    %v796 = vmul.f32 %v790, %v794
    %798 = vrot.lane.b32.xlu0 %v796, 32
    %v799 = vpop.permute.xlu0 %798
    %v801 = vadd.f32 %v791, %v799
    %v802 = vtanh.pop %v801
    %804 = vrot.lane.b32.xlu0 %v802, 64
    %v805 = vpop.permute.xlu0 %804
    %v807 = vmul.f32 %v790, %v805
    %809 = vrot.lane.b32.xlu0 %v807, 32
    %v810 = vpop.permute.xlu0 %809
    %s812 = scalar_lea.vmem [#allocation3], 32
    %813 = vst.msk [vmem:[%s812] sm:$0xff] %vm304, %v810
    %v814 = vld [vmem:[%s278] sm:$0xff]
    %v815 = vsel %vm304, %v810, 0
    %817 = vmatprep.subr.mxu0 0.0
    %818 = vmatpush1.msra.mxu0 0.0
    %819 = vmatprep.subr.mxu0 0.0
    %820 = vmatpush1.msra.mxu0 0.0
    %821 = vmatprep.subr.mxu0 0.0
    %822 = vmatpush1.msra.mxu0 0.0
    %823 = vmatprep.subr.mxu0 0.0
    %824 = vmatpush1.msra.mxu0 0.0
    %825 = vmatprep.subr.mxu0 0.0
    %826 = vmatpush1.msra.mxu0 0.0
    %827 = vmatprep.subr.mxu0 0.0
    %828 = vmatpush1.msra.mxu0 0.0
    %829 = vmatprep.subr.mxu0 0.0
    %830 = vmatpush1.msra.mxu0 0.0
    %831 = vmatprep.subr.mxu0 0.0
    %832 = vmatpush1.msra.mxu0 0.0
    %833 = vmatprep.subr.mxu0 0.0
    %834 = vmatpush1.msra.mxu0 0.0
    %835 = vmatprep.subr.mxu0 0.0
    %836 = vmatpush1.msra.mxu0 0.0
    %837 = vmatprep.subr.mxu0 0.0
    %838 = vmatpush1.msra.mxu0 0.0
    %839 = vmatprep.subr.mxu0 0.0
    %840 = vmatpush1.msra.mxu0 0.0
    %841 = vmatprep.subr.mxu0 0.0
    %842 = vmatpush1.msra.mxu0 %v49
    %843 = vmatprep.subr.mxu0 0.0
    %844 = vmatpush1.msra.mxu0 %v48
    %845 = vmatprep.subr.mxu0 0.0
    %846 = vmatpush1.msra.mxu0 %v47
    %847 = vmatprep.subr.mxu0 0.0
    %848 = vmatpush1.msra.mxu0 %v46
    %849 = vmatprep.subr.mxu0 0.0
    %850 = vmatpush2.msra.mxu0 0.0
    %851 = vmatprep.subr.mxu0 0.0
    %852 = vmatpush2.msra.mxu0 0.0
    %853 = vmatprep.subr.mxu0 0.0
    %854 = vmatpush2.msra.mxu0 0.0
    %855 = vmatprep.subr.mxu0 0.0
    %856 = vmatpush2.msra.mxu0 0.0
    %857 = vmatprep.subr.mxu0 0.0
    %858 = vmatpush2.msra.mxu0 0.0
    %859 = vmatprep.subr.mxu0 0.0
    %860 = vmatpush2.msra.mxu0 0.0
    %861 = vmatprep.subr.mxu0 0.0
    %862 = vmatpush2.msra.mxu0 0.0
    %863 = vmatprep.subr.mxu0 0.0
    %864 = vmatpush2.msra.mxu0 0.0
    %865 = vmatprep.subr.mxu0 0.0
    %866 = vmatpush2.msra.mxu0 0.0
    %867 = vmatprep.subr.mxu0 0.0
    %868 = vmatpush2.msra.mxu0 0.0
    %869 = vmatprep.subr.mxu0 0.0
    %870 = vmatpush2.msra.mxu0 0.0
    %871 = vmatprep.subr.mxu0 0.0
    %872 = vmatpush2.msra.mxu0 0.0
    %873 = vmatprep.subr.mxu0 0.0
    %874 = vmatpush2.msra.mxu0 0.0
    %875 = vmatprep.subr.mxu0 0.0
    %876 = vmatpush2.msra.mxu0 0.0
    %877 = vmatprep.subr.mxu0 0.0
    %878 = vmatpush2.msra.mxu0 0.0
    %879 = vmatprep.subr.mxu0 0.0
    %880 = vmatpush2.msra.mxu0 0.0
    %881 = vmatprep.mubr.f32.mxu0 0.0
    %882 = vmatmul.mubr.f32.gmra.mxu0 %v815
    %v883 = vpop.f32.mrf.mxu0
    %v884 = vadd.f32 0.0, %v883
    %v885 = vpop.f32.mrf.mxu0
    %886 = vdwg.mxu0
    %v887 = vadd.f32 %v814, %v884
    %v888 = vmul.f32 %v887, 0.5
    %v889 = vtanh.pop %v888
    %v890 = vtanh.pop %v887
    %v891 = vmul.f32 %v889, 0.5
    %v892 = vadd.f32 %v891, 0.5
    %v893 = vmul.f32 %v892, %v801
    %895 = vrot.lane.b32.xlu0 %v890, 64
    %v896 = vpop.permute.xlu0 %895
    %v898 = vmul.f32 %v892, %v896
    %900 = vrot.lane.b32.xlu0 %v898, 32
    %v901 = vpop.permute.xlu0 %900
    %v903 = vadd.f32 %v893, %v901
    %v904 = vtanh.pop %v903
    %906 = vrot.lane.b32.xlu0 %v904, 64
    %v907 = vpop.permute.xlu0 %906
    %v909 = vmul.f32 %v892, %v907
    %911 = vrot.lane.b32.xlu0 %v909, 32
    %v912 = vpop.permute.xlu0 %911
    %s914 = scalar_lea.vmem [#allocation3], 40
    %915 = vst.msk [vmem:[%s914] sm:$0xff] %vm304, %v912
    %v916 = vld [vmem:[%s289] sm:$0xff]
    %v917 = vsel %vm304, %v912, 0
    %919 = vmatprep.subr.mxu0 0.0
    %920 = vmatpush1.msra.mxu0 0.0
    %921 = vmatprep.subr.mxu0 0.0
    %922 = vmatpush1.msra.mxu0 0.0
    %923 = vmatprep.subr.mxu0 0.0
    %924 = vmatpush1.msra.mxu0 0.0
    %925 = vmatprep.subr.mxu0 0.0
    %926 = vmatpush1.msra.mxu0 0.0
    %927 = vmatprep.subr.mxu0 0.0
    %928 = vmatpush1.msra.mxu0 0.0
    %929 = vmatprep.subr.mxu0 0.0
    %930 = vmatpush1.msra.mxu0 0.0
    %931 = vmatprep.subr.mxu0 0.0
    %932 = vmatpush1.msra.mxu0 0.0
    %933 = vmatprep.subr.mxu0 0.0
    %934 = vmatpush1.msra.mxu0 0.0
    %935 = vmatprep.subr.mxu0 0.0
    %936 = vmatpush1.msra.mxu0 0.0
    %937 = vmatprep.subr.mxu0 0.0
    %938 = vmatpush1.msra.mxu0 0.0
    %939 = vmatprep.subr.mxu0 0.0
    %940 = vmatpush1.msra.mxu0 0.0
    %941 = vmatprep.subr.mxu0 0.0
    %942 = vmatpush1.msra.mxu0 0.0
    %943 = vmatprep.subr.mxu0 0.0
    %944 = vmatpush1.msra.mxu0 %v49
    %945 = vmatprep.subr.mxu0 0.0
    %946 = vmatpush1.msra.mxu0 %v48
    %947 = vmatprep.subr.mxu0 0.0
    %948 = vmatpush1.msra.mxu0 %v47
    %949 = vmatprep.subr.mxu0 0.0
    %950 = vmatpush1.msra.mxu0 %v46
    %951 = vmatprep.subr.mxu0 0.0
    %952 = vmatpush2.msra.mxu0 0.0
    %953 = vmatprep.subr.mxu0 0.0
    %954 = vmatpush2.msra.mxu0 0.0
    %955 = vmatprep.subr.mxu0 0.0
    %956 = vmatpush2.msra.mxu0 0.0
    %957 = vmatprep.subr.mxu0 0.0
    %958 = vmatpush2.msra.mxu0 0.0
    %959 = vmatprep.subr.mxu0 0.0
    %960 = vmatpush2.msra.mxu0 0.0
    %961 = vmatprep.subr.mxu0 0.0
    %962 = vmatpush2.msra.mxu0 0.0
    %963 = vmatprep.subr.mxu0 0.0
    %964 = vmatpush2.msra.mxu0 0.0
    %965 = vmatprep.subr.mxu0 0.0
    %966 = vmatpush2.msra.mxu0 0.0
    %967 = vmatprep.subr.mxu0 0.0
    %968 = vmatpush2.msra.mxu0 0.0
    %969 = vmatprep.subr.mxu0 0.0
    %970 = vmatpush2.msra.mxu0 0.0
    %971 = vmatprep.subr.mxu0 0.0
    %972 = vmatpush2.msra.mxu0 0.0
    %973 = vmatprep.subr.mxu0 0.0
    %974 = vmatpush2.msra.mxu0 0.0
    %975 = vmatprep.subr.mxu0 0.0
    %976 = vmatpush2.msra.mxu0 0.0
    %977 = vmatprep.subr.mxu0 0.0
    %978 = vmatpush2.msra.mxu0 0.0
    %979 = vmatprep.subr.mxu0 0.0
    %980 = vmatpush2.msra.mxu0 0.0
    %981 = vmatprep.subr.mxu0 0.0
    %982 = vmatpush2.msra.mxu0 0.0
    %983 = vmatprep.mubr.f32.mxu0 0.0
    %984 = vmatmul.mubr.f32.gmra.mxu0 %v917
    %v985 = vpop.f32.mrf.mxu0
    %v986 = vadd.f32 0.0, %v985
    %v987 = vpop.f32.mrf.mxu0
    %988 = vdwg.mxu0
    %v989 = vadd.f32 %v916, %v986
    %v990 = vmul.f32 %v989, 0.5
    %v991 = vtanh.pop %v990
    %v992 = vtanh.pop %v989
    %v993 = vmul.f32 %v991, 0.5
    %v994 = vadd.f32 %v993, 0.5
    %v995 = vmul.f32 %v994, %v903
    %997 = vrot.lane.b32.xlu0 %v992, 64
    %v998 = vpop.permute.xlu0 %997
    %v1000 = vmul.f32 %v994, %v998
    %1002 = vrot.lane.b32.xlu0 %v1000, 32
    %v1003 = vpop.permute.xlu0 %1002
    %v1005 = vadd.f32 %v995, %v1003
    %v1006 = vtanh.pop %v1005
    %1008 = vrot.lane.b32.xlu0 %v1006, 64
    %v1009 = vpop.permute.xlu0 %1008
    %v1011 = vmul.f32 %v994, %v1009
    %1013 = vrot.lane.b32.xlu0 %v1011, 32
    %v1014 = vpop.permute.xlu0 %1013
    %s1016 = scalar_lea.vmem [#allocation3], 48
    %1017 = vst.msk [vmem:[%s1016] sm:$0xff] %vm304, %v1014
    %v1018 = vld [vmem:[%s300] sm:$0xff]
    %v1019 = vsel %vm304, %v1014, 0
    %1021 = vmatprep.subr.mxu0 0.0
    %1022 = vmatpush1.msra.mxu0 0.0
    %1023 = vmatprep.subr.mxu0 0.0
    %1024 = vmatpush1.msra.mxu0 0.0
    %1025 = vmatprep.subr.mxu0 0.0
    %1026 = vmatpush1.msra.mxu0 0.0
    %1027 = vmatprep.subr.mxu0 0.0
    %1028 = vmatpush1.msra.mxu0 0.0
    %1029 = vmatprep.subr.mxu0 0.0
    %1030 = vmatpush1.msra.mxu0 0.0
    %1031 = vmatprep.subr.mxu0 0.0
    %1032 = vmatpush1.msra.mxu0 0.0
    %1033 = vmatprep.subr.mxu0 0.0
    %1034 = vmatpush1.msra.mxu0 0.0
    %1035 = vmatprep.subr.mxu0 0.0
    %1036 = vmatpush1.msra.mxu0 0.0
    %1037 = vmatprep.subr.mxu0 0.0
    %1038 = vmatpush1.msra.mxu0 0.0
    %1039 = vmatprep.subr.mxu0 0.0
    %1040 = vmatpush1.msra.mxu0 0.0
    %1041 = vmatprep.subr.mxu0 0.0
    %1042 = vmatpush1.msra.mxu0 0.0
    %1043 = vmatprep.subr.mxu0 0.0
    %1044 = vmatpush1.msra.mxu0 0.0
    %1045 = vmatprep.subr.mxu0 0.0
    %1046 = vmatpush1.msra.mxu0 %v49
    %1047 = vmatprep.subr.mxu0 0.0
    %1048 = vmatpush1.msra.mxu0 %v48
    %1049 = vmatprep.subr.mxu0 0.0
    %1050 = vmatpush1.msra.mxu0 %v47
    %1051 = vmatprep.subr.mxu0 0.0
    %1052 = vmatpush1.msra.mxu0 %v46
    %1053 = vmatprep.subr.mxu0 0.0
    %1054 = vmatpush2.msra.mxu0 0.0
    %1055 = vmatprep.subr.mxu0 0.0
    %1056 = vmatpush2.msra.mxu0 0.0
    %1057 = vmatprep.subr.mxu0 0.0
    %1058 = vmatpush2.msra.mxu0 0.0
    %1059 = vmatprep.subr.mxu0 0.0
    %1060 = vmatpush2.msra.mxu0 0.0
    %1061 = vmatprep.subr.mxu0 0.0
    %1062 = vmatpush2.msra.mxu0 0.0
    %1063 = vmatprep.subr.mxu0 0.0
    %1064 = vmatpush2.msra.mxu0 0.0
    %1065 = vmatprep.subr.mxu0 0.0
    %1066 = vmatpush2.msra.mxu0 0.0
    %1067 = vmatprep.subr.mxu0 0.0
    %1068 = vmatpush2.msra.mxu0 0.0
    %1069 = vmatprep.subr.mxu0 0.0
    %1070 = vmatpush2.msra.mxu0 0.0
    %1071 = vmatprep.subr.mxu0 0.0
    %1072 = vmatpush2.msra.mxu0 0.0
    %1073 = vmatprep.subr.mxu0 0.0
    %1074 = vmatpush2.msra.mxu0 0.0
    %1075 = vmatprep.subr.mxu0 0.0
    %1076 = vmatpush2.msra.mxu0 0.0
    %1077 = vmatprep.subr.mxu0 0.0
    %1078 = vmatpush2.msra.mxu0 0.0
    %1079 = vmatprep.subr.mxu0 0.0
    %1080 = vmatpush2.msra.mxu0 0.0
    %1081 = vmatprep.subr.mxu0 0.0
    %1082 = vmatpush2.msra.mxu0 0.0
    %1083 = vmatprep.subr.mxu0 0.0
    %1084 = vmatpush2.msra.mxu0 0.0
    %1085 = vmatprep.mubr.f32.mxu0 0.0
    %1086 = vmatmul.mubr.f32.gmra.mxu0 %v1019
    %v1087 = vpop.f32.mrf.mxu0
    %v1088 = vadd.f32 0.0, %v1087
    %v1089 = vpop.f32.mrf.mxu0
    %1090 = vdwg.mxu0
    %v1091 = vadd.f32 %v1018, %v1088
    %v1092 = vmul.f32 %v1091, 0.5
    %v1093 = vtanh.pop %v1092
    %v1094 = vtanh.pop %v1091
    %v1095 = vmul.f32 %v1093, 0.5
    %v1096 = vadd.f32 %v1095, 0.5
    %v1097 = vmul.f32 %v1096, %v1005
    %1099 = vrot.lane.b32.xlu0 %v1094, 64
    %v1100 = vpop.permute.xlu0 %1099
    %v1102 = vmul.f32 %v1096, %v1100
    %1104 = vrot.lane.b32.xlu0 %v1102, 32
    %v1105 = vpop.permute.xlu0 %1104
    %v1107 = vadd.f32 %v1097, %v1105
    %v1108 = vtanh.pop %v1107
    %1110 = vrot.lane.b32.xlu0 %v1108, 64
    %v1111 = vpop.permute.xlu0 %1110
    %v1113 = vmul.f32 %v1096, %v1111
    %1115 = vrot.lane.b32.xlu0 %v1113, 32
    %v1116 = vpop.permute.xlu0 %1115
    %s1118 = scalar_lea.vmem [#allocation3], 56
    %1119 = vst.msk [vmem:[%s1118] sm:$0xff] %vm304, %v1116
    %v1120 = vld [vmem:[%s4] sm:$0xff]
    %v1121 = vld [vmem:[%s4 + $0x8] sm:$0xff]
    %v1122 = vld [vmem:[%s4 + $0x10] sm:$0xff]
    %v1123 = vld [vmem:[%s4 + $0x18] sm:$0xff]
    %v1124 = vld [vmem:[%s5] sm:$0xff]
    %v1125 = vld [vmem:[%s5 + $0x8] sm:$0xff]
    %v1126 = vld [vmem:[%s5 + $0x10] sm:$0xff]
    %v1127 = vld [vmem:[%s5 + $0x18] sm:$0xff]
    %v1128 = vld [vmem:[%s6] sm:$0x1]
    %v1129 = vld [vmem:[#allocation3] sm:$0xff]
    %v1130 = vld [vmem:[#allocation3 + $0x8] sm:$0xff]
    %v1131 = vld [vmem:[#allocation3 + $0x10] sm:$0xff]
    %v1132 = vld [vmem:[#allocation3 + $0x18] sm:$0xff]
    %v1133 = vld [vmem:[#allocation3 + $0x20] sm:$0xff]
    %v1134 = vld [vmem:[#allocation3 + $0x28] sm:$0xff]
    %v1135 = vld [vmem:[#allocation3 + $0x30] sm:$0xff]
    %v1136 = vld [vmem:[#allocation3 + $0x38] sm:$0xff]
    %v1138 = vlaneseq
    %v1139 = vshrl.u32 %v1138, 7
    %v1140 = vsub.s32 0, %v1139
    %v1141 = vrot.slane %v1128, %v1140
    %v1144 = vsel %vm304, %v1129, 0
    %v1147 = vsel %vm304, %v1130, 0
    %v1150 = vsel %vm304, %v1131, 0
    %v1153 = vsel %vm304, %v1132, 0
    %v1156 = vsel %vm304, %v1133, 0
    %v1159 = vsel %vm304, %v1134, 0
    %v1162 = vsel %vm304, %v1135, 0
    %v1165 = vsel %vm304, %v1136, 0
    %1167 = vmatprep.subr.mxu0 0.0
    %1168 = vmatpush1.msra.mxu0 0.0
    %1169 = vmatprep.subr.mxu0 0.0
    %1170 = vmatpush1.msra.mxu0 0.0
    %1171 = vmatprep.subr.mxu0 0.0
    %1172 = vmatpush1.msra.mxu0 0.0
    %1173 = vmatprep.subr.mxu0 0.0
    %1174 = vmatpush1.msra.mxu0 0.0
    %1175 = vmatprep.subr.mxu0 0.0
    %1176 = vmatpush1.msra.mxu0 0.0
    %1177 = vmatprep.subr.mxu0 0.0
    %1178 = vmatpush1.msra.mxu0 0.0
    %1179 = vmatprep.subr.mxu0 0.0
    %1180 = vmatpush1.msra.mxu0 0.0
    %1181 = vmatprep.subr.mxu0 0.0
    %1182 = vmatpush1.msra.mxu0 0.0
    %1183 = vmatprep.subr.mxu0 0.0
    %1184 = vmatpush1.msra.mxu0 0.0
    %1185 = vmatprep.subr.mxu0 0.0
    %1186 = vmatpush1.msra.mxu0 0.0
    %1187 = vmatprep.subr.mxu0 0.0
    %1188 = vmatpush1.msra.mxu0 0.0
    %1189 = vmatprep.subr.mxu0 0.0
    %1190 = vmatpush1.msra.mxu0 0.0
    %1191 = vmatprep.subr.mxu0 0.0
    %1192 = vmatpush1.msra.mxu0 %v1123
    %1193 = vmatprep.subr.mxu0 0.0
    %1194 = vmatpush1.msra.mxu0 %v1122
    %1195 = vmatprep.subr.mxu0 0.0
    %1196 = vmatpush1.msra.mxu0 %v1121
    %1197 = vmatprep.subr.mxu0 0.0
    %1198 = vmatpush1.msra.mxu0 %v1120
    %1199 = vmatprep.subr.mxu0 0.0
    %1200 = vmatpush2.msra.mxu0 0.0
    %1201 = vmatprep.subr.mxu0 0.0
    %1202 = vmatpush2.msra.mxu0 0.0
    %1203 = vmatprep.subr.mxu0 0.0
    %1204 = vmatpush2.msra.mxu0 0.0
    %1205 = vmatprep.subr.mxu0 0.0
    %1206 = vmatpush2.msra.mxu0 0.0
    %1207 = vmatprep.subr.mxu0 0.0
    %1208 = vmatpush2.msra.mxu0 0.0
    %1209 = vmatprep.subr.mxu0 0.0
    %1210 = vmatpush2.msra.mxu0 0.0
    %1211 = vmatprep.subr.mxu0 0.0
    %1212 = vmatpush2.msra.mxu0 0.0
    %1213 = vmatprep.subr.mxu0 0.0
    %1214 = vmatpush2.msra.mxu0 0.0
    %1215 = vmatprep.subr.mxu0 0.0
    %1216 = vmatpush2.msra.mxu0 0.0
    %1217 = vmatprep.subr.mxu0 0.0
    %1218 = vmatpush2.msra.mxu0 0.0
    %1219 = vmatprep.subr.mxu0 0.0
    %1220 = vmatpush2.msra.mxu0 0.0
    %1221 = vmatprep.subr.mxu0 0.0
    %1222 = vmatpush2.msra.mxu0 0.0
    %1223 = vmatprep.subr.mxu0 0.0
    %1224 = vmatpush2.msra.mxu0 0.0
    %1225 = vmatprep.subr.mxu0 0.0
    %1226 = vmatpush2.msra.mxu0 0.0
    %1227 = vmatprep.subr.mxu0 0.0
    %1228 = vmatpush2.msra.mxu0 0.0
    %1229 = vmatprep.subr.mxu0 0.0
    %1230 = vmatpush2.msra.mxu0 0.0
    %1231 = vmatprep.mubr.f32.mxu0 0.0
    %1232 = vmatmul.mubr.f32.gmra.mxu0 %v1144
    %v1233 = vpop.f32.mrf.mxu0
    %v1234 = vadd.f32 %v1141, %v1233
    %v1235 = vpop.f32.mrf.mxu0
    %1236 = vmatprep.mubr.f32.mxu0 0.0
    %1237 = vmatmul.mubr.f32.gmra.mxu0 %v1147
    %v1238 = vpop.f32.mrf.mxu0
    %v1239 = vadd.f32 %v1141, %v1238
    %v1240 = vpop.f32.mrf.mxu0
    %1241 = vmatprep.mubr.f32.mxu0 0.0
    %1242 = vmatmul.mubr.f32.gmra.mxu0 %v1150
    %v1243 = vpop.f32.mrf.mxu0
    %v1244 = vadd.f32 %v1141, %v1243
    %v1245 = vpop.f32.mrf.mxu0
    %1246 = vmatprep.mubr.f32.mxu0 0.0
    %1247 = vmatmul.mubr.f32.gmra.mxu0 %v1153
    %v1248 = vpop.f32.mrf.mxu0
    %v1249 = vadd.f32 %v1141, %v1248
    %v1250 = vpop.f32.mrf.mxu0
    %1251 = vmatprep.mubr.f32.mxu0 0.0
    %1252 = vmatmul.mubr.f32.gmra.mxu0 %v1156
    %v1253 = vpop.f32.mrf.mxu0
    %v1254 = vadd.f32 %v1141, %v1253
    %v1255 = vpop.f32.mrf.mxu0
    %1256 = vmatprep.mubr.f32.mxu0 0.0
    %1257 = vmatmul.mubr.f32.gmra.mxu0 %v1159
    %v1258 = vpop.f32.mrf.mxu0
    %v1259 = vadd.f32 %v1141, %v1258
    %v1260 = vpop.f32.mrf.mxu0
    %1261 = vmatprep.mubr.f32.mxu0 0.0
    %1262 = vmatmul.mubr.f32.gmra.mxu0 %v1162
    %v1263 = vpop.f32.mrf.mxu0
    %v1264 = vadd.f32 %v1141, %v1263
    %v1265 = vpop.f32.mrf.mxu0
    %1266 = vmatprep.mubr.f32.mxu0 0.0
    %1267 = vmatmul.mubr.f32.gmra.mxu0 %v1165
    %v1268 = vpop.f32.mrf.mxu0
    %v1269 = vadd.f32 %v1141, %v1268
    %v1270 = vpop.f32.mrf.mxu0
    %1271 = vdwg.mxu0
    %1272 = vst [vmem:[#allocation2] sm:$0xff] %v1234
    %1273 = vst [vmem:[#allocation2 + $0x8] sm:$0xff] %v1239
    %1274 = vst [vmem:[#allocation2 + $0x10] sm:$0xff] %v1244
    %1275 = vst [vmem:[#allocation2 + $0x18] sm:$0xff] %v1249
    %1276 = vst [vmem:[#allocation2 + $0x20] sm:$0xff] %v1254
    %1277 = vst [vmem:[#allocation2 + $0x28] sm:$0xff] %v1259
    %1278 = vst [vmem:[#allocation2 + $0x30] sm:$0xff] %v1264
    %1279 = vst [vmem:[#allocation2 + $0x38] sm:$0xff] %v1269
    %v1280 = vld [vmem:[#allocation2] sm:$0xff]
    %1281 = vmatprep.subr.mxu0 0.0
    %1282 = vmatpush1.msra.mxu0 0.0
    %1283 = vmatprep.subr.mxu0 0.0
    %1284 = vmatpush1.msra.mxu0 0.0
    %1285 = vmatprep.subr.mxu0 0.0
    %1286 = vmatpush1.msra.mxu0 0.0
    %1287 = vmatprep.subr.mxu0 0.0
    %1288 = vmatpush1.msra.mxu0 0.0
    %1289 = vmatprep.subr.mxu0 0.0
    %1290 = vmatpush1.msra.mxu0 0.0
    %1291 = vmatprep.subr.mxu0 0.0
    %1292 = vmatpush1.msra.mxu0 0.0
    %1293 = vmatprep.subr.mxu0 0.0
    %1294 = vmatpush1.msra.mxu0 0.0
    %1295 = vmatprep.subr.mxu0 0.0
    %1296 = vmatpush1.msra.mxu0 0.0
    %1297 = vmatprep.subr.mxu0 0.0
    %1298 = vmatpush1.msra.mxu0 0.0
    %1299 = vmatprep.subr.mxu0 0.0
    %1300 = vmatpush1.msra.mxu0 0.0
    %1301 = vmatprep.subr.mxu0 0.0
    %1302 = vmatpush1.msra.mxu0 0.0
    %1303 = vmatprep.subr.mxu0 0.0
    %1304 = vmatpush1.msra.mxu0 0.0
    %1305 = vmatprep.subr.mxu0 0.0
    %1306 = vmatpush1.msra.mxu0 %v1127
    %1307 = vmatprep.subr.mxu0 0.0
    %1308 = vmatpush1.msra.mxu0 %v1126
    %1309 = vmatprep.subr.mxu0 0.0
    %1310 = vmatpush1.msra.mxu0 %v1125
    %1311 = vmatprep.subr.mxu0 0.0
    %1312 = vmatpush1.msra.mxu0 %v1124
    %1313 = vmatprep.subr.mxu0 0.0
    %1314 = vmatpush2.msra.mxu0 0.0
    %1315 = vmatprep.subr.mxu0 0.0
    %1316 = vmatpush2.msra.mxu0 0.0
    %1317 = vmatprep.subr.mxu0 0.0
    %1318 = vmatpush2.msra.mxu0 0.0
    %1319 = vmatprep.subr.mxu0 0.0
    %1320 = vmatpush2.msra.mxu0 0.0
    %1321 = vmatprep.subr.mxu0 0.0
    %1322 = vmatpush2.msra.mxu0 0.0
    %1323 = vmatprep.subr.mxu0 0.0
    %1324 = vmatpush2.msra.mxu0 0.0
    %1325 = vmatprep.subr.mxu0 0.0
    %1326 = vmatpush2.msra.mxu0 0.0
    %1327 = vmatprep.subr.mxu0 0.0
    %1328 = vmatpush2.msra.mxu0 0.0
    %1329 = vmatprep.subr.mxu0 0.0
    %1330 = vmatpush2.msra.mxu0 0.0
    %1331 = vmatprep.subr.mxu0 0.0
    %1332 = vmatpush2.msra.mxu0 0.0
    %1333 = vmatprep.subr.mxu0 0.0
    %1334 = vmatpush2.msra.mxu0 0.0
    %1335 = vmatprep.subr.mxu0 0.0
    %1336 = vmatpush2.msra.mxu0 0.0
    %1337 = vmatprep.subr.mxu0 0.0
    %1338 = vmatpush2.msra.mxu0 0.0
    %1339 = vmatprep.subr.mxu0 0.0
    %1340 = vmatpush2.msra.mxu0 0.0
    %1341 = vmatprep.subr.mxu0 0.0
    %1342 = vmatpush2.msra.mxu0 0.0
    %1343 = vmatprep.subr.mxu0 0.0
    %1344 = vmatpush2.msra.mxu0 0.0
    %1345 = vmatprep.mubr.f32.mxu0 0.0
    %1346 = vmatmul.mubr.f32.gmra.mxu0 %v306
    %v1347 = vpop.f32.mrf.mxu0
    %v1348 = vadd.f32 0.0, %v1347
    %v1349 = vpop.f32.mrf.mxu0
    %1350 = vdwg.mxu0
    %v1351 = vadd.f32 %v1280, %v1348
    %v1352 = vmul.f32 %v1351, 0.5
    %v1353 = vtanh.pop %v1352
    %v1354 = vtanh.pop %v1351
    %v1355 = vmul.f32 %v1353, 0.5
    %v1356 = vadd.f32 %v1355, 0.5
    %v1357 = vmul.f32 %v1356, 0.0
    %1359 = vrot.lane.b32.xlu0 %v1354, 64
    %v1360 = vpop.permute.xlu0 %1359
    %v1362 = vmul.f32 %v1356, %v1360
    %1364 = vrot.lane.b32.xlu0 %v1362, 32
    %v1365 = vpop.permute.xlu0 %1364
    %v1367 = vadd.f32 %v1357, %v1365
    %v1368 = vtanh.pop %v1367
    %1370 = vrot.lane.b32.xlu0 %v1368, 64
    %v1371 = vpop.permute.xlu0 %1370
    %v1373 = vmul.f32 %v1356, %v1371
    %1375 = vrot.lane.b32.xlu0 %v1373, 32
    %v1376 = vpop.permute.xlu0 %1375
    %1378 = vst.msk [vmem:[#allocation3] sm:$0xff] %vm304, %v1376
    %v1379 = vld [vmem:[%s234] sm:$0xff]
    %v1380 = vsel %vm304, %v1376, 0
    %1382 = vmatprep.subr.mxu0 0.0
    %1383 = vmatpush1.msra.mxu0 0.0
    %1384 = vmatprep.subr.mxu0 0.0
    %1385 = vmatpush1.msra.mxu0 0.0
    %1386 = vmatprep.subr.mxu0 0.0
    %1387 = vmatpush1.msra.mxu0 0.0
    %1388 = vmatprep.subr.mxu0 0.0
    %1389 = vmatpush1.msra.mxu0 0.0
    %1390 = vmatprep.subr.mxu0 0.0
    %1391 = vmatpush1.msra.mxu0 0.0
    %1392 = vmatprep.subr.mxu0 0.0
    %1393 = vmatpush1.msra.mxu0 0.0
    %1394 = vmatprep.subr.mxu0 0.0
    %1395 = vmatpush1.msra.mxu0 0.0
    %1396 = vmatprep.subr.mxu0 0.0
    %1397 = vmatpush1.msra.mxu0 0.0
    %1398 = vmatprep.subr.mxu0 0.0
    %1399 = vmatpush1.msra.mxu0 0.0
    %1400 = vmatprep.subr.mxu0 0.0
    %1401 = vmatpush1.msra.mxu0 0.0
    %1402 = vmatprep.subr.mxu0 0.0
    %1403 = vmatpush1.msra.mxu0 0.0
    %1404 = vmatprep.subr.mxu0 0.0
    %1405 = vmatpush1.msra.mxu0 0.0
    %1406 = vmatprep.subr.mxu0 0.0
    %1407 = vmatpush1.msra.mxu0 %v1127
    %1408 = vmatprep.subr.mxu0 0.0
    %1409 = vmatpush1.msra.mxu0 %v1126
    %1410 = vmatprep.subr.mxu0 0.0
    %1411 = vmatpush1.msra.mxu0 %v1125
    %1412 = vmatprep.subr.mxu0 0.0
    %1413 = vmatpush1.msra.mxu0 %v1124
    %1414 = vmatprep.subr.mxu0 0.0
    %1415 = vmatpush2.msra.mxu0 0.0
    %1416 = vmatprep.subr.mxu0 0.0
    %1417 = vmatpush2.msra.mxu0 0.0
    %1418 = vmatprep.subr.mxu0 0.0
    %1419 = vmatpush2.msra.mxu0 0.0
    %1420 = vmatprep.subr.mxu0 0.0
    %1421 = vmatpush2.msra.mxu0 0.0
    %1422 = vmatprep.subr.mxu0 0.0
    %1423 = vmatpush2.msra.mxu0 0.0
    %1424 = vmatprep.subr.mxu0 0.0
    %1425 = vmatpush2.msra.mxu0 0.0
    %1426 = vmatprep.subr.mxu0 0.0
    %1427 = vmatpush2.msra.mxu0 0.0
    %1428 = vmatprep.subr.mxu0 0.0
    %1429 = vmatpush2.msra.mxu0 0.0
    %1430 = vmatprep.subr.mxu0 0.0
    %1431 = vmatpush2.msra.mxu0 0.0
    %1432 = vmatprep.subr.mxu0 0.0
    %1433 = vmatpush2.msra.mxu0 0.0
    %1434 = vmatprep.subr.mxu0 0.0
    %1435 = vmatpush2.msra.mxu0 0.0
    %1436 = vmatprep.subr.mxu0 0.0
    %1437 = vmatpush2.msra.mxu0 0.0
    %1438 = vmatprep.subr.mxu0 0.0
    %1439 = vmatpush2.msra.mxu0 0.0
    %1440 = vmatprep.subr.mxu0 0.0
    %1441 = vmatpush2.msra.mxu0 0.0
    %1442 = vmatprep.subr.mxu0 0.0
    %1443 = vmatpush2.msra.mxu0 0.0
    %1444 = vmatprep.subr.mxu0 0.0
    %1445 = vmatpush2.msra.mxu0 0.0
    %1446 = vmatprep.mubr.f32.mxu0 0.0
    %1447 = vmatmul.mubr.f32.gmra.mxu0 %v1380
    %v1448 = vpop.f32.mrf.mxu0
    %v1449 = vadd.f32 0.0, %v1448
    %v1450 = vpop.f32.mrf.mxu0
    %1451 = vdwg.mxu0
    %v1452 = vadd.f32 %v1379, %v1449
    %v1453 = vmul.f32 %v1452, 0.5
    %v1454 = vtanh.pop %v1453
    %v1455 = vtanh.pop %v1452
    %v1456 = vmul.f32 %v1454, 0.5
    %v1457 = vadd.f32 %v1456, 0.5
    %v1458 = vmul.f32 %v1457, %v1367
    %1460 = vrot.lane.b32.xlu0 %v1455, 64
    %v1461 = vpop.permute.xlu0 %1460
    %v1463 = vmul.f32 %v1457, %v1461
    %1465 = vrot.lane.b32.xlu0 %v1463, 32
    %v1466 = vpop.permute.xlu0 %1465
    %v1468 = vadd.f32 %v1458, %v1466
    %v1469 = vtanh.pop %v1468
    %1471 = vrot.lane.b32.xlu0 %v1469, 64
    %v1472 = vpop.permute.xlu0 %1471
    %v1474 = vmul.f32 %v1457, %v1472
    %1476 = vrot.lane.b32.xlu0 %v1474, 32
    %v1477 = vpop.permute.xlu0 %1476
    %1479 = vst.msk [vmem:[%s506] sm:$0xff] %vm304, %v1477
    %v1480 = vld [vmem:[%s245] sm:$0xff]
    %v1481 = vsel %vm304, %v1477, 0
    %1483 = vmatprep.subr.mxu0 0.0
    %1484 = vmatpush1.msra.mxu0 0.0
    %1485 = vmatprep.subr.mxu0 0.0
    %1486 = vmatpush1.msra.mxu0 0.0
    %1487 = vmatprep.subr.mxu0 0.0
    %1488 = vmatpush1.msra.mxu0 0.0
    %1489 = vmatprep.subr.mxu0 0.0
    %1490 = vmatpush1.msra.mxu0 0.0
    %1491 = vmatprep.subr.mxu0 0.0
    %1492 = vmatpush1.msra.mxu0 0.0
    %1493 = vmatprep.subr.mxu0 0.0
    %1494 = vmatpush1.msra.mxu0 0.0
    %1495 = vmatprep.subr.mxu0 0.0
    %1496 = vmatpush1.msra.mxu0 0.0
    %1497 = vmatprep.subr.mxu0 0.0
    %1498 = vmatpush1.msra.mxu0 0.0
    %1499 = vmatprep.subr.mxu0 0.0
    %1500 = vmatpush1.msra.mxu0 0.0
    %1501 = vmatprep.subr.mxu0 0.0
    %1502 = vmatpush1.msra.mxu0 0.0
    %1503 = vmatprep.subr.mxu0 0.0
    %1504 = vmatpush1.msra.mxu0 0.0
    %1505 = vmatprep.subr.mxu0 0.0
    %1506 = vmatpush1.msra.mxu0 0.0
    %1507 = vmatprep.subr.mxu0 0.0
    %1508 = vmatpush1.msra.mxu0 %v1127
    %1509 = vmatprep.subr.mxu0 0.0
    %1510 = vmatpush1.msra.mxu0 %v1126
    %1511 = vmatprep.subr.mxu0 0.0
    %1512 = vmatpush1.msra.mxu0 %v1125
    %1513 = vmatprep.subr.mxu0 0.0
    %1514 = vmatpush1.msra.mxu0 %v1124
    %1515 = vmatprep.subr.mxu0 0.0
    %1516 = vmatpush2.msra.mxu0 0.0
    %1517 = vmatprep.subr.mxu0 0.0
    %1518 = vmatpush2.msra.mxu0 0.0
    %1519 = vmatprep.subr.mxu0 0.0
    %1520 = vmatpush2.msra.mxu0 0.0
    %1521 = vmatprep.subr.mxu0 0.0
    %1522 = vmatpush2.msra.mxu0 0.0
    %1523 = vmatprep.subr.mxu0 0.0
    %1524 = vmatpush2.msra.mxu0 0.0
    %1525 = vmatprep.subr.mxu0 0.0
    %1526 = vmatpush2.msra.mxu0 0.0
    %1527 = vmatprep.subr.mxu0 0.0
    %1528 = vmatpush2.msra.mxu0 0.0
    %1529 = vmatprep.subr.mxu0 0.0
    %1530 = vmatpush2.msra.mxu0 0.0
    %1531 = vmatprep.subr.mxu0 0.0
    %1532 = vmatpush2.msra.mxu0 0.0
    %1533 = vmatprep.subr.mxu0 0.0
    %1534 = vmatpush2.msra.mxu0 0.0
    %1535 = vmatprep.subr.mxu0 0.0
    %1536 = vmatpush2.msra.mxu0 0.0
    %1537 = vmatprep.subr.mxu0 0.0
    %1538 = vmatpush2.msra.mxu0 0.0
    %1539 = vmatprep.subr.mxu0 0.0
    %1540 = vmatpush2.msra.mxu0 0.0
    %1541 = vmatprep.subr.mxu0 0.0
    %1542 = vmatpush2.msra.mxu0 0.0
    %1543 = vmatprep.subr.mxu0 0.0
    %1544 = vmatpush2.msra.mxu0 0.0
    %1545 = vmatprep.subr.mxu0 0.0
    %1546 = vmatpush2.msra.mxu0 0.0
    %1547 = vmatprep.mubr.f32.mxu0 0.0
    %1548 = vmatmul.mubr.f32.gmra.mxu0 %v1481
    %v1549 = vpop.f32.mrf.mxu0
    %v1550 = vadd.f32 0.0, %v1549
    %v1551 = vpop.f32.mrf.mxu0
    %1552 = vdwg.mxu0
    %v1553 = vadd.f32 %v1480, %v1550
    %v1554 = vmul.f32 %v1553, 0.5
    %v1555 = vtanh.pop %v1554
    %v1556 = vtanh.pop %v1553
    %v1557 = vmul.f32 %v1555, 0.5
    %v1558 = vadd.f32 %v1557, 0.5
    %v1559 = vmul.f32 %v1558, %v1468
    %1561 = vrot.lane.b32.xlu0 %v1556, 64
    %v1562 = vpop.permute.xlu0 %1561
    %v1564 = vmul.f32 %v1558, %v1562
    %1566 = vrot.lane.b32.xlu0 %v1564, 32
    %v1567 = vpop.permute.xlu0 %1566
    %v1569 = vadd.f32 %v1559, %v1567
    %v1570 = vtanh.pop %v1569
    %1572 = vrot.lane.b32.xlu0 %v1570, 64
    %v1573 = vpop.permute.xlu0 %1572
    %v1575 = vmul.f32 %v1558, %v1573
    %1577 = vrot.lane.b32.xlu0 %v1575, 32
    %v1578 = vpop.permute.xlu0 %1577
    %1580 = vst.msk [vmem:[%s608] sm:$0xff] %vm304, %v1578
    %v1581 = vld [vmem:[%s256] sm:$0xff]
    %v1582 = vsel %vm304, %v1578, 0
    %1584 = vmatprep.subr.mxu0 0.0
    %1585 = vmatpush1.msra.mxu0 0.0
    %1586 = vmatprep.subr.mxu0 0.0
    %1587 = vmatpush1.msra.mxu0 0.0
    %1588 = vmatprep.subr.mxu0 0.0
    %1589 = vmatpush1.msra.mxu0 0.0
    %1590 = vmatprep.subr.mxu0 0.0
    %1591 = vmatpush1.msra.mxu0 0.0
    %1592 = vmatprep.subr.mxu0 0.0
    %1593 = vmatpush1.msra.mxu0 0.0
    %1594 = vmatprep.subr.mxu0 0.0
    %1595 = vmatpush1.msra.mxu0 0.0
    %1596 = vmatprep.subr.mxu0 0.0
    %1597 = vmatpush1.msra.mxu0 0.0
    %1598 = vmatprep.subr.mxu0 0.0
    %1599 = vmatpush1.msra.mxu0 0.0
    %1600 = vmatprep.subr.mxu0 0.0
    %1601 = vmatpush1.msra.mxu0 0.0
    %1602 = vmatprep.subr.mxu0 0.0
    %1603 = vmatpush1.msra.mxu0 0.0
    %1604 = vmatprep.subr.mxu0 0.0
    %1605 = vmatpush1.msra.mxu0 0.0
    %1606 = vmatprep.subr.mxu0 0.0
    %1607 = vmatpush1.msra.mxu0 0.0
    %1608 = vmatprep.subr.mxu0 0.0
    %1609 = vmatpush1.msra.mxu0 %v1127
    %1610 = vmatprep.subr.mxu0 0.0
    %1611 = vmatpush1.msra.mxu0 %v1126
    %1612 = vmatprep.subr.mxu0 0.0
    %1613 = vmatpush1.msra.mxu0 %v1125
    %1614 = vmatprep.subr.mxu0 0.0
    %1615 = vmatpush1.msra.mxu0 %v1124
    %1616 = vmatprep.subr.mxu0 0.0
    %1617 = vmatpush2.msra.mxu0 0.0
    %1618 = vmatprep.subr.mxu0 0.0
    %1619 = vmatpush2.msra.mxu0 0.0
    %1620 = vmatprep.subr.mxu0 0.0
    %1621 = vmatpush2.msra.mxu0 0.0
    %1622 = vmatprep.subr.mxu0 0.0
    %1623 = vmatpush2.msra.mxu0 0.0
    %1624 = vmatprep.subr.mxu0 0.0
    %1625 = vmatpush2.msra.mxu0 0.0
    %1626 = vmatprep.subr.mxu0 0.0
    %1627 = vmatpush2.msra.mxu0 0.0
    %1628 = vmatprep.subr.mxu0 0.0
    %1629 = vmatpush2.msra.mxu0 0.0
    %1630 = vmatprep.subr.mxu0 0.0
    %1631 = vmatpush2.msra.mxu0 0.0
    %1632 = vmatprep.subr.mxu0 0.0
    %1633 = vmatpush2.msra.mxu0 0.0
    %1634 = vmatprep.subr.mxu0 0.0
    %1635 = vmatpush2.msra.mxu0 0.0
    %1636 = vmatprep.subr.mxu0 0.0
    %1637 = vmatpush2.msra.mxu0 0.0
    %1638 = vmatprep.subr.mxu0 0.0
    %1639 = vmatpush2.msra.mxu0 0.0
    %1640 = vmatprep.subr.mxu0 0.0
    %1641 = vmatpush2.msra.mxu0 0.0
    %1642 = vmatprep.subr.mxu0 0.0
    %1643 = vmatpush2.msra.mxu0 0.0
    %1644 = vmatprep.subr.mxu0 0.0
    %1645 = vmatpush2.msra.mxu0 0.0
    %1646 = vmatprep.subr.mxu0 0.0
    %1647 = vmatpush2.msra.mxu0 0.0
    %1648 = vmatprep.mubr.f32.mxu0 0.0
    %1649 = vmatmul.mubr.f32.gmra.mxu0 %v1582
    %v1650 = vpop.f32.mrf.mxu0
    %v1651 = vadd.f32 0.0, %v1650
    %v1652 = vpop.f32.mrf.mxu0
    %1653 = vdwg.mxu0
    %v1654 = vadd.f32 %v1581, %v1651
    %v1655 = vmul.f32 %v1654, 0.5
    %v1656 = vtanh.pop %v1655
    %v1657 = vtanh.pop %v1654
    %v1658 = vmul.f32 %v1656, 0.5
    %v1659 = vadd.f32 %v1658, 0.5
    %v1660 = vmul.f32 %v1659, %v1569
    %1662 = vrot.lane.b32.xlu0 %v1657, 64
    %v1663 = vpop.permute.xlu0 %1662
    %v1665 = vmul.f32 %v1659, %v1663
    %1667 = vrot.lane.b32.xlu0 %v1665, 32
    %v1668 = vpop.permute.xlu0 %1667
    %v1670 = vadd.f32 %v1660, %v1668
    %v1671 = vtanh.pop %v1670
    %1673 = vrot.lane.b32.xlu0 %v1671, 64
    %v1674 = vpop.permute.xlu0 %1673
    %v1676 = vmul.f32 %v1659, %v1674
    %1678 = vrot.lane.b32.xlu0 %v1676, 32
    %v1679 = vpop.permute.xlu0 %1678
    %1681 = vst.msk [vmem:[%s710] sm:$0xff] %vm304, %v1679
    %v1682 = vld [vmem:[%s267] sm:$0xff]
    %v1683 = vsel %vm304, %v1679, 0
    %1685 = vmatprep.subr.mxu0 0.0
    %1686 = vmatpush1.msra.mxu0 0.0
    %1687 = vmatprep.subr.mxu0 0.0
    %1688 = vmatpush1.msra.mxu0 0.0
    %1689 = vmatprep.subr.mxu0 0.0
    %1690 = vmatpush1.msra.mxu0 0.0
    %1691 = vmatprep.subr.mxu0 0.0
    %1692 = vmatpush1.msra.mxu0 0.0
    %1693 = vmatprep.subr.mxu0 0.0
    %1694 = vmatpush1.msra.mxu0 0.0
    %1695 = vmatprep.subr.mxu0 0.0
    %1696 = vmatpush1.msra.mxu0 0.0
    %1697 = vmatprep.subr.mxu0 0.0
    %1698 = vmatpush1.msra.mxu0 0.0
    %1699 = vmatprep.subr.mxu0 0.0
    %1700 = vmatpush1.msra.mxu0 0.0
    %1701 = vmatprep.subr.mxu0 0.0
    %1702 = vmatpush1.msra.mxu0 0.0
    %1703 = vmatprep.subr.mxu0 0.0
    %1704 = vmatpush1.msra.mxu0 0.0
    %1705 = vmatprep.subr.mxu0 0.0
    %1706 = vmatpush1.msra.mxu0 0.0
    %1707 = vmatprep.subr.mxu0 0.0
    %1708 = vmatpush1.msra.mxu0 0.0
    %1709 = vmatprep.subr.mxu0 0.0
    %1710 = vmatpush1.msra.mxu0 %v1127
    %1711 = vmatprep.subr.mxu0 0.0
    %1712 = vmatpush1.msra.mxu0 %v1126
    %1713 = vmatprep.subr.mxu0 0.0
    %1714 = vmatpush1.msra.mxu0 %v1125
    %1715 = vmatprep.subr.mxu0 0.0
    %1716 = vmatpush1.msra.mxu0 %v1124
    %1717 = vmatprep.subr.mxu0 0.0
    %1718 = vmatpush2.msra.mxu0 0.0
    %1719 = vmatprep.subr.mxu0 0.0
    %1720 = vmatpush2.msra.mxu0 0.0
    %1721 = vmatprep.subr.mxu0 0.0
    %1722 = vmatpush2.msra.mxu0 0.0
    %1723 = vmatprep.subr.mxu0 0.0
    %1724 = vmatpush2.msra.mxu0 0.0
    %1725 = vmatprep.subr.mxu0 0.0
    %1726 = vmatpush2.msra.mxu0 0.0
    %1727 = vmatprep.subr.mxu0 0.0
    %1728 = vmatpush2.msra.mxu0 0.0
    %1729 = vmatprep.subr.mxu0 0.0
    %1730 = vmatpush2.msra.mxu0 0.0
    %1731 = vmatprep.subr.mxu0 0.0
    %1732 = vmatpush2.msra.mxu0 0.0
    %1733 = vmatprep.subr.mxu0 0.0
    %1734 = vmatpush2.msra.mxu0 0.0
    %1735 = vmatprep.subr.mxu0 0.0
    %1736 = vmatpush2.msra.mxu0 0.0
    %1737 = vmatprep.subr.mxu0 0.0
    %1738 = vmatpush2.msra.mxu0 0.0
    %1739 = vmatprep.subr.mxu0 0.0
    %1740 = vmatpush2.msra.mxu0 0.0
    %1741 = vmatprep.subr.mxu0 0.0
    %1742 = vmatpush2.msra.mxu0 0.0
    %1743 = vmatprep.subr.mxu0 0.0
    %1744 = vmatpush2.msra.mxu0 0.0
    %1745 = vmatprep.subr.mxu0 0.0
    %1746 = vmatpush2.msra.mxu0 0.0
    %1747 = vmatprep.subr.mxu0 0.0
    %1748 = vmatpush2.msra.mxu0 0.0
    %1749 = vmatprep.mubr.f32.mxu0 0.0
    %1750 = vmatmul.mubr.f32.gmra.mxu0 %v1683
    %v1751 = vpop.f32.mrf.mxu0
    %v1752 = vadd.f32 0.0, %v1751
    %v1753 = vpop.f32.mrf.mxu0
    %1754 = vdwg.mxu0
    %v1755 = vadd.f32 %v1682, %v1752
    %v1756 = vmul.f32 %v1755, 0.5
    %v1757 = vtanh.pop %v1756
    %v1758 = vtanh.pop %v1755
    %v1759 = vmul.f32 %v1757, 0.5
    %v1760 = vadd.f32 %v1759, 0.5
    %v1761 = vmul.f32 %v1760, %v1670
    %1763 = vrot.lane.b32.xlu0 %v1758, 64
    %v1764 = vpop.permute.xlu0 %1763
    %v1766 = vmul.f32 %v1760, %v1764
    %1768 = vrot.lane.b32.xlu0 %v1766, 32
    %v1769 = vpop.permute.xlu0 %1768
    %v1771 = vadd.f32 %v1761, %v1769
    %v1772 = vtanh.pop %v1771
    %1774 = vrot.lane.b32.xlu0 %v1772, 64
    %v1775 = vpop.permute.xlu0 %1774
    %v1777 = vmul.f32 %v1760, %v1775
    %1779 = vrot.lane.b32.xlu0 %v1777, 32
    %v1780 = vpop.permute.xlu0 %1779
    %1782 = vst.msk [vmem:[%s812] sm:$0xff] %vm304, %v1780
    %v1783 = vld [vmem:[%s278] sm:$0xff]
    %v1784 = vsel %vm304, %v1780, 0
    %1786 = vmatprep.subr.mxu0 0.0
    %1787 = vmatpush1.msra.mxu0 0.0
    %1788 = vmatprep.subr.mxu0 0.0
    %1789 = vmatpush1.msra.mxu0 0.0
    %1790 = vmatprep.subr.mxu0 0.0
    %1791 = vmatpush1.msra.mxu0 0.0
    %1792 = vmatprep.subr.mxu0 0.0
    %1793 = vmatpush1.msra.mxu0 0.0
    %1794 = vmatprep.subr.mxu0 0.0
    %1795 = vmatpush1.msra.mxu0 0.0
    %1796 = vmatprep.subr.mxu0 0.0
    %1797 = vmatpush1.msra.mxu0 0.0
    %1798 = vmatprep.subr.mxu0 0.0
    %1799 = vmatpush1.msra.mxu0 0.0
    %1800 = vmatprep.subr.mxu0 0.0
    %1801 = vmatpush1.msra.mxu0 0.0
    %1802 = vmatprep.subr.mxu0 0.0
    %1803 = vmatpush1.msra.mxu0 0.0
    %1804 = vmatprep.subr.mxu0 0.0
    %1805 = vmatpush1.msra.mxu0 0.0
    %1806 = vmatprep.subr.mxu0 0.0
    %1807 = vmatpush1.msra.mxu0 0.0
    %1808 = vmatprep.subr.mxu0 0.0
    %1809 = vmatpush1.msra.mxu0 0.0
    %1810 = vmatprep.subr.mxu0 0.0
    %1811 = vmatpush1.msra.mxu0 %v1127
    %1812 = vmatprep.subr.mxu0 0.0
    %1813 = vmatpush1.msra.mxu0 %v1126
    %1814 = vmatprep.subr.mxu0 0.0
    %1815 = vmatpush1.msra.mxu0 %v1125
    %1816 = vmatprep.subr.mxu0 0.0
    %1817 = vmatpush1.msra.mxu0 %v1124
    %1818 = vmatprep.subr.mxu0 0.0
    %1819 = vmatpush2.msra.mxu0 0.0
    %1820 = vmatprep.subr.mxu0 0.0
    %1821 = vmatpush2.msra.mxu0 0.0
    %1822 = vmatprep.subr.mxu0 0.0
    %1823 = vmatpush2.msra.mxu0 0.0
    %1824 = vmatprep.subr.mxu0 0.0
    %1825 = vmatpush2.msra.mxu0 0.0
    %1826 = vmatprep.subr.mxu0 0.0
    %1827 = vmatpush2.msra.mxu0 0.0
    %1828 = vmatprep.subr.mxu0 0.0
    %1829 = vmatpush2.msra.mxu0 0.0
    %1830 = vmatprep.subr.mxu0 0.0
    %1831 = vmatpush2.msra.mxu0 0.0
    %1832 = vmatprep.subr.mxu0 0.0
    %1833 = vmatpush2.msra.mxu0 0.0
    %1834 = vmatprep.subr.mxu0 0.0
    %1835 = vmatpush2.msra.mxu0 0.0
    %1836 = vmatprep.subr.mxu0 0.0
    %1837 = vmatpush2.msra.mxu0 0.0
    %1838 = vmatprep.subr.mxu0 0.0
    %1839 = vmatpush2.msra.mxu0 0.0
    %1840 = vmatprep.subr.mxu0 0.0
    %1841 = vmatpush2.msra.mxu0 0.0
    %1842 = vmatprep.subr.mxu0 0.0
    %1843 = vmatpush2.msra.mxu0 0.0
    %1844 = vmatprep.subr.mxu0 0.0
    %1845 = vmatpush2.msra.mxu0 0.0
    %1846 = vmatprep.subr.mxu0 0.0
    %1847 = vmatpush2.msra.mxu0 0.0
    %1848 = vmatprep.subr.mxu0 0.0
    %1849 = vmatpush2.msra.mxu0 0.0
    %1850 = vmatprep.mubr.f32.mxu0 0.0
    %1851 = vmatmul.mubr.f32.gmra.mxu0 %v1784
    %v1852 = vpop.f32.mrf.mxu0
    %v1853 = vadd.f32 0.0, %v1852
    %v1854 = vpop.f32.mrf.mxu0
    %1855 = vdwg.mxu0
    %v1856 = vadd.f32 %v1783, %v1853
    %v1857 = vmul.f32 %v1856, 0.5
    %v1858 = vtanh.pop %v1857
    %v1859 = vtanh.pop %v1856
    %v1860 = vmul.f32 %v1858, 0.5
    %v1861 = vadd.f32 %v1860, 0.5
    %v1862 = vmul.f32 %v1861, %v1771
    %1864 = vrot.lane.b32.xlu0 %v1859, 64
    %v1865 = vpop.permute.xlu0 %1864
    %v1867 = vmul.f32 %v1861, %v1865
    %1869 = vrot.lane.b32.xlu0 %v1867, 32
    %v1870 = vpop.permute.xlu0 %1869
    %v1872 = vadd.f32 %v1862, %v1870
    %v1873 = vtanh.pop %v1872
    %1875 = vrot.lane.b32.xlu0 %v1873, 64
    %v1876 = vpop.permute.xlu0 %1875
    %v1878 = vmul.f32 %v1861, %v1876
    %1880 = vrot.lane.b32.xlu0 %v1878, 32
    %v1881 = vpop.permute.xlu0 %1880
    %1883 = vst.msk [vmem:[%s914] sm:$0xff] %vm304, %v1881
    %v1884 = vld [vmem:[%s289] sm:$0xff]
    %v1885 = vsel %vm304, %v1881, 0
    %1887 = vmatprep.subr.mxu0 0.0
    %1888 = vmatpush1.msra.mxu0 0.0
    %1889 = vmatprep.subr.mxu0 0.0
    %1890 = vmatpush1.msra.mxu0 0.0
    %1891 = vmatprep.subr.mxu0 0.0
    %1892 = vmatpush1.msra.mxu0 0.0
    %1893 = vmatprep.subr.mxu0 0.0
    %1894 = vmatpush1.msra.mxu0 0.0
    %1895 = vmatprep.subr.mxu0 0.0
    %1896 = vmatpush1.msra.mxu0 0.0
    %1897 = vmatprep.subr.mxu0 0.0
    %1898 = vmatpush1.msra.mxu0 0.0
    %1899 = vmatprep.subr.mxu0 0.0
    %1900 = vmatpush1.msra.mxu0 0.0
    %1901 = vmatprep.subr.mxu0 0.0
    %1902 = vmatpush1.msra.mxu0 0.0
    %1903 = vmatprep.subr.mxu0 0.0
    %1904 = vmatpush1.msra.mxu0 0.0
    %1905 = vmatprep.subr.mxu0 0.0
    %1906 = vmatpush1.msra.mxu0 0.0
    %1907 = vmatprep.subr.mxu0 0.0
    %1908 = vmatpush1.msra.mxu0 0.0
    %1909 = vmatprep.subr.mxu0 0.0
    %1910 = vmatpush1.msra.mxu0 0.0
    %1911 = vmatprep.subr.mxu0 0.0
    %1912 = vmatpush1.msra.mxu0 %v1127
    %1913 = vmatprep.subr.mxu0 0.0
    %1914 = vmatpush1.msra.mxu0 %v1126
    %1915 = vmatprep.subr.mxu0 0.0
    %1916 = vmatpush1.msra.mxu0 %v1125
    %1917 = vmatprep.subr.mxu0 0.0
    %1918 = vmatpush1.msra.mxu0 %v1124
    %1919 = vmatprep.subr.mxu0 0.0
    %1920 = vmatpush2.msra.mxu0 0.0
    %1921 = vmatprep.subr.mxu0 0.0
    %1922 = vmatpush2.msra.mxu0 0.0
    %1923 = vmatprep.subr.mxu0 0.0
    %1924 = vmatpush2.msra.mxu0 0.0
    %1925 = vmatprep.subr.mxu0 0.0
    %1926 = vmatpush2.msra.mxu0 0.0
    %1927 = vmatprep.subr.mxu0 0.0
    %1928 = vmatpush2.msra.mxu0 0.0
    %1929 = vmatprep.subr.mxu0 0.0
    %1930 = vmatpush2.msra.mxu0 0.0
    %1931 = vmatprep.subr.mxu0 0.0
    %1932 = vmatpush2.msra.mxu0 0.0
    %1933 = vmatprep.subr.mxu0 0.0
    %1934 = vmatpush2.msra.mxu0 0.0
    %1935 = vmatprep.subr.mxu0 0.0
    %1936 = vmatpush2.msra.mxu0 0.0
    %1937 = vmatprep.subr.mxu0 0.0
    %1938 = vmatpush2.msra.mxu0 0.0
    %1939 = vmatprep.subr.mxu0 0.0
    %1940 = vmatpush2.msra.mxu0 0.0
    %1941 = vmatprep.subr.mxu0 0.0
    %1942 = vmatpush2.msra.mxu0 0.0
    %1943 = vmatprep.subr.mxu0 0.0
    %1944 = vmatpush2.msra.mxu0 0.0
    %1945 = vmatprep.subr.mxu0 0.0
    %1946 = vmatpush2.msra.mxu0 0.0
    %1947 = vmatprep.subr.mxu0 0.0
    %1948 = vmatpush2.msra.mxu0 0.0
    %1949 = vmatprep.subr.mxu0 0.0
    %1950 = vmatpush2.msra.mxu0 0.0
    %1951 = vmatprep.mubr.f32.mxu0 0.0
    %1952 = vmatmul.mubr.f32.gmra.mxu0 %v1885
    %v1953 = vpop.f32.mrf.mxu0
    %v1954 = vadd.f32 0.0, %v1953
    %v1955 = vpop.f32.mrf.mxu0
    %1956 = vdwg.mxu0
    %v1957 = vadd.f32 %v1884, %v1954
    %v1958 = vmul.f32 %v1957, 0.5
    %v1959 = vtanh.pop %v1958
    %v1960 = vtanh.pop %v1957
    %v1961 = vmul.f32 %v1959, 0.5
    %v1962 = vadd.f32 %v1961, 0.5
    %v1963 = vmul.f32 %v1962, %v1872
    %1965 = vrot.lane.b32.xlu0 %v1960, 64
    %v1966 = vpop.permute.xlu0 %1965
    %v1968 = vmul.f32 %v1962, %v1966
    %1970 = vrot.lane.b32.xlu0 %v1968, 32
    %v1971 = vpop.permute.xlu0 %1970
    %v1973 = vadd.f32 %v1963, %v1971
    %v1974 = vtanh.pop %v1973
    %1976 = vrot.lane.b32.xlu0 %v1974, 64
    %v1977 = vpop.permute.xlu0 %1976
    %v1979 = vmul.f32 %v1962, %v1977
    %1981 = vrot.lane.b32.xlu0 %v1979, 32
    %v1982 = vpop.permute.xlu0 %1981
    %1984 = vst.msk [vmem:[%s1016] sm:$0xff] %vm304, %v1982
    %v1985 = vld [vmem:[%s300] sm:$0xff]
    %v1986 = vsel %vm304, %v1982, 0
    %1988 = vmatprep.subr.mxu0 0.0
    %1989 = vmatpush1.msra.mxu0 0.0
    %1990 = vmatprep.subr.mxu0 0.0
    %1991 = vmatpush1.msra.mxu0 0.0
    %1992 = vmatprep.subr.mxu0 0.0
    %1993 = vmatpush1.msra.mxu0 0.0
    %1994 = vmatprep.subr.mxu0 0.0
    %1995 = vmatpush1.msra.mxu0 0.0
    %1996 = vmatprep.subr.mxu0 0.0
    %1997 = vmatpush1.msra.mxu0 0.0
    %1998 = vmatprep.subr.mxu0 0.0
    %1999 = vmatpush1.msra.mxu0 0.0
    %2000 = vmatprep.subr.mxu0 0.0
    %2001 = vmatpush1.msra.mxu0 0.0
    %2002 = vmatprep.subr.mxu0 0.0
    %2003 = vmatpush1.msra.mxu0 0.0
    %2004 = vmatprep.subr.mxu0 0.0
    %2005 = vmatpush1.msra.mxu0 0.0
    %2006 = vmatprep.subr.mxu0 0.0
    %2007 = vmatpush1.msra.mxu0 0.0
    %2008 = vmatprep.subr.mxu0 0.0
    %2009 = vmatpush1.msra.mxu0 0.0
    %2010 = vmatprep.subr.mxu0 0.0
    %2011 = vmatpush1.msra.mxu0 0.0
    %2012 = vmatprep.subr.mxu0 0.0
    %2013 = vmatpush1.msra.mxu0 %v1127
    %2014 = vmatprep.subr.mxu0 0.0
    %2015 = vmatpush1.msra.mxu0 %v1126
    %2016 = vmatprep.subr.mxu0 0.0
    %2017 = vmatpush1.msra.mxu0 %v1125
    %2018 = vmatprep.subr.mxu0 0.0
    %2019 = vmatpush1.msra.mxu0 %v1124
    %2020 = vmatprep.subr.mxu0 0.0
    %2021 = vmatpush2.msra.mxu0 0.0
    %2022 = vmatprep.subr.mxu0 0.0
    %2023 = vmatpush2.msra.mxu0 0.0
    %2024 = vmatprep.subr.mxu0 0.0
    %2025 = vmatpush2.msra.mxu0 0.0
    %2026 = vmatprep.subr.mxu0 0.0
    %2027 = vmatpush2.msra.mxu0 0.0
    %2028 = vmatprep.subr.mxu0 0.0
    %2029 = vmatpush2.msra.mxu0 0.0
    %2030 = vmatprep.subr.mxu0 0.0
    %2031 = vmatpush2.msra.mxu0 0.0
    %2032 = vmatprep.subr.mxu0 0.0
    %2033 = vmatpush2.msra.mxu0 0.0
    %2034 = vmatprep.subr.mxu0 0.0
    %2035 = vmatpush2.msra.mxu0 0.0
    %2036 = vmatprep.subr.mxu0 0.0
    %2037 = vmatpush2.msra.mxu0 0.0
    %2038 = vmatprep.subr.mxu0 0.0
    %2039 = vmatpush2.msra.mxu0 0.0
    %2040 = vmatprep.subr.mxu0 0.0
    %2041 = vmatpush2.msra.mxu0 0.0
    %2042 = vmatprep.subr.mxu0 0.0
    %2043 = vmatpush2.msra.mxu0 0.0
    %2044 = vmatprep.subr.mxu0 0.0
    %2045 = vmatpush2.msra.mxu0 0.0
    %2046 = vmatprep.subr.mxu0 0.0
    %2047 = vmatpush2.msra.mxu0 0.0
    %2048 = vmatprep.subr.mxu0 0.0
    %2049 = vmatpush2.msra.mxu0 0.0
    %2050 = vmatprep.subr.mxu0 0.0
    %2051 = vmatpush2.msra.mxu0 0.0
    %2052 = vmatprep.mubr.f32.mxu0 0.0
    %2053 = vmatmul.mubr.f32.gmra.mxu0 %v1986
    %v2054 = vpop.f32.mrf.mxu0
    %v2055 = vadd.f32 0.0, %v2054
    %v2056 = vpop.f32.mrf.mxu0
    %2057 = vdwg.mxu0
    %v2058 = vadd.f32 %v1985, %v2055
    %v2059 = vmul.f32 %v2058, 0.5
    %v2060 = vtanh.pop %v2059
    %v2061 = vtanh.pop %v2058
    %v2062 = vmul.f32 %v2060, 0.5
    %v2063 = vadd.f32 %v2062, 0.5
    %v2064 = vmul.f32 %v2063, %v1973
    %2066 = vrot.lane.b32.xlu0 %v2061, 64
    %v2067 = vpop.permute.xlu0 %2066
    %v2069 = vmul.f32 %v2063, %v2067
    %2071 = vrot.lane.b32.xlu0 %v2069, 32
    %v2072 = vpop.permute.xlu0 %2071
    %v2074 = vadd.f32 %v2064, %v2072
    %v2075 = vtanh.pop %v2074
    %2077 = vrot.lane.b32.xlu0 %v2075, 64
    %v2078 = vpop.permute.xlu0 %2077
    %v2080 = vmul.f32 %v2063, %v2078
    %2082 = vrot.lane.b32.xlu0 %v2080, 32
    %v2083 = vpop.permute.xlu0 %2082
    %2085 = vst.msk [vmem:[%s1118] sm:$0xff] %vm304, %v2083
    %v2086 = vld [vmem:[%s7] sm:$0xff]
    %v2087 = vld [vmem:[%s7 + $0x8] sm:$0xff]
    %v2088 = vld [vmem:[%s7 + $0x10] sm:$0xff]
    %v2089 = vld [vmem:[%s7 + $0x18] sm:$0xff]
    %v2090 = vld [vmem:[#allocation4] sm:$0x1]
    %v2092 = vlaneseq
    %v2093 = vshrl.u32 %v2092, 7
    %v2094 = vsub.s32 0, %v2093
    %v2095 = vrot.slane %v2090, %v2094
    %v2097 = vsel %vm304, %v2083, 0
    %2099 = vmatprep.subr.mxu0 0.0
    %2100 = vmatpush1.msra.mxu0 0.0
    %2101 = vmatprep.subr.mxu0 0.0
    %2102 = vmatpush1.msra.mxu0 0.0
    %2103 = vmatprep.subr.mxu0 0.0
    %2104 = vmatpush1.msra.mxu0 0.0
    %2105 = vmatprep.subr.mxu0 0.0
    %2106 = vmatpush1.msra.mxu0 0.0
    %2107 = vmatprep.subr.mxu0 0.0
    %2108 = vmatpush1.msra.mxu0 0.0
    %2109 = vmatprep.subr.mxu0 0.0
    %2110 = vmatpush1.msra.mxu0 0.0
    %2111 = vmatprep.subr.mxu0 0.0
    %2112 = vmatpush1.msra.mxu0 0.0
    %2113 = vmatprep.subr.mxu0 0.0
    %2114 = vmatpush1.msra.mxu0 0.0
    %2115 = vmatprep.subr.mxu0 0.0
    %2116 = vmatpush1.msra.mxu0 0.0
    %2117 = vmatprep.subr.mxu0 0.0
    %2118 = vmatpush1.msra.mxu0 0.0
    %2119 = vmatprep.subr.mxu0 0.0
    %2120 = vmatpush1.msra.mxu0 0.0
    %2121 = vmatprep.subr.mxu0 0.0
    %2122 = vmatpush1.msra.mxu0 0.0
    %2123 = vmatprep.subr.mxu0 0.0
    %2124 = vmatpush1.msra.mxu0 %v2089
    %2125 = vmatprep.subr.mxu0 0.0
    %2126 = vmatpush1.msra.mxu0 %v2088
    %2127 = vmatprep.subr.mxu0 0.0
    %2128 = vmatpush1.msra.mxu0 %v2087
    %2129 = vmatprep.subr.mxu0 0.0
    %2130 = vmatpush1.msra.mxu0 %v2086
    %2131 = vmatprep.subr.mxu0 0.0
    %2132 = vmatpush2.msra.mxu0 0.0
    %2133 = vmatprep.subr.mxu0 0.0
    %2134 = vmatpush2.msra.mxu0 0.0
    %2135 = vmatprep.subr.mxu0 0.0
    %2136 = vmatpush2.msra.mxu0 0.0
    %2137 = vmatprep.subr.mxu0 0.0
    %2138 = vmatpush2.msra.mxu0 0.0
    %2139 = vmatprep.subr.mxu0 0.0
    %2140 = vmatpush2.msra.mxu0 0.0
    %2141 = vmatprep.subr.mxu0 0.0
    %2142 = vmatpush2.msra.mxu0 0.0
    %2143 = vmatprep.subr.mxu0 0.0
    %2144 = vmatpush2.msra.mxu0 0.0
    %2145 = vmatprep.subr.mxu0 0.0
    %2146 = vmatpush2.msra.mxu0 0.0
    %2147 = vmatprep.subr.mxu0 0.0
    %2148 = vmatpush2.msra.mxu0 0.0
    %2149 = vmatprep.subr.mxu0 0.0
    %2150 = vmatpush2.msra.mxu0 0.0
    %2151 = vmatprep.subr.mxu0 0.0
    %2152 = vmatpush2.msra.mxu0 0.0
    %2153 = vmatprep.subr.mxu0 0.0
    %2154 = vmatpush2.msra.mxu0 0.0
    %2155 = vmatprep.subr.mxu0 0.0
    %2156 = vmatpush2.msra.mxu0 0.0
    %2157 = vmatprep.subr.mxu0 0.0
    %2158 = vmatpush2.msra.mxu0 0.0
    %2159 = vmatprep.subr.mxu0 0.0
    %2160 = vmatpush2.msra.mxu0 0.0
    %2161 = vmatprep.subr.mxu0 0.0
    %2162 = vmatpush2.msra.mxu0 0.0
    %2163 = vmatprep.mubr.f32.mxu0 0.0
    %2164 = vmatmul.mubr.f32.gmra.mxu0 %v2097
    %v2165 = vpop.f32.mrf.mxu0
    %v2166 = vadd.f32 %v2095, %v2165
    %v2167 = vpop.f32.mrf.mxu0
    %2168 = vdwg.mxu0
    %vm2169 = vcmask 64512
    %2170 = vst.msk [vmem:[%s9] sm:$0xff] %vm2169, %v2166
    // Predicated region
    $region42: #{lstm_model_forward.1} parent=1 // pred_check
      _
    $region43: #{lstm_model_forward.1} parent=1 // pred_check_branch
      %2172 = sbr.rel (0) target = $region45
    $region44: #{lstm_model_forward.1} parent=1 // pred_region
      _
    $region45: #{lstm_model_forward.1} parent=1 // pred_fallthru
      _
    // Predicated region
    $region46: #{lstm_model_forward.1} parent=1 // pred_check
      _
    $region47: #{lstm_model_forward.1} parent=1 // pred_check_branch
      %2174 = sbr.rel (0) target = $region49
    $region48: #{lstm_model_forward.1} parent=1 // pred_region
      _
    $region49: #{lstm_model_forward.1} parent=1 // pred_fallthru
      _
    %2175 = vsyncpa [#allocation5], 1

</llo_original>
